<compile_context>
chip_gen: v6e
topology: v6e:2x2x1
jax: 0.10.0
libtpu: 0.0.40
codegen_flags: <defaults>
</compile_context>

<pallas_src>
import jax
import jax.numpy as jnp
from jax.experimental import pallas as pl
from jax.experimental.pallas import tpu as pltpu


def condconv3d_kernel(r_ref, x_ref, t_ref, bias_ref, o_ref):
    # r_ref   : (N*E,)          f32, SMEM   routing coefficients (flattened, batch-major)
    # x_ref   : (N*D, 3*KM)     bf16, VMEM  im2col-over-depth packed padded input
    # t_ref   : (3*KM, E*NN)    bf16, VMEM  block-Toeplitz expert kernels (kd-major K, expert-major lanes)
    # bias_ref: (N*D, NN)       f32, VMEM   routing-mixed bias, pre-tiled over (d, h, w)
    # o_ref   : (N*D, NN)       f32, VMEM   lane-dense output slab
    ND, NN = o_ref.shape
    E = t_ref.shape[1] // NN
    N = r_ref.shape[0] // E
    D = ND // N

    # Single large MXU contraction; K (= kd-concatenated Toeplitz rows) is reduced entirely
    # inside the MXU, experts land on aligned lane slices of the result.
    res = jnp.dot(x_ref[...], t_ref[...],
                  preferred_element_type=jnp.float32)          # (N*D, E*NN) f32

    # Per-sample routing mix over the E lane slices + mixed-bias epilogue.
    # N*E small scalar-scaled madds over 2-vreg tiles; all slices sublane/lane aligned.
    for b in range(N):
        acc = bias_ref[b * D:(b + 1) * D, :]                   # (D, NN)
        for e in range(E):
            acc = acc + r_ref[b * E + e] * res[b * D:(b + 1) * D, e * NN:(e + 1) * NN]
        o_ref[b * D:(b + 1) * D, :] = acc                      # unmasked lane-dense store


def _toeplitz_expand(weight, H, W):
    """(E, OC, IC, 3, 3, 3) expert kernels -> (E, 3, (H+2)*(W+2)*IC, H*W*OC) block-Toeplitz."""
    E, OC, IC, KD, KH, KW = weight.shape
    H2, W2 = H + 2, W + 2
    w_perm = jnp.transpose(weight, (0, 3, 2, 1, 4, 5))         # (E, kd, ic, oc, kh, kw)
    h2 = jnp.arange(H2)[:, None, None, None]
    w2 = jnp.arange(W2)[None, :, None, None]
    h = jnp.arange(H)[None, None, :, None]
    w = jnp.arange(W)[None, None, None, :]
    kh, kw = h2 - h, w2 - w                                    # (H2, W2, H, W)
    valid = ((kh >= 0) & (kh < KH) & (kw >= 0) & (kw < KW)).astype(weight.dtype)
    t = w_perm[:, :, :, :, jnp.clip(kh, 0, KH - 1), jnp.clip(kw, 0, KW - 1)]
    t = t * valid                                              # (E, kd, ic, oc, H2, W2, H, W)
    t = jnp.transpose(t, (0, 1, 4, 5, 2, 6, 7, 3))             # (E, kd, H2, W2, ic, H, W, oc)
    return t.reshape(E, KD, H2 * W2 * IC, H * W * OC)


def prepare_bare_conv(params, H, W):
    """One-time parameter preprocessing (hoisted out of the forward path).

    Returns the lane-dense bf16 Toeplitz rhs of shape (3*KM, E*NN) plus the small
    routing / bias tensors.  Call once whenever the module parameters change.
    """
    E, OC = params["bias"].shape
    IC = params["weight"].shape[2]
    KD = params["weight"].shape[3]
    KM = (H + 2) * (W + 2) * IC
    NN = H * W * OC
    t = _toeplitz_expand(params["weight"].astype(jnp.float32), H, W)   # (E, KD, KM, NN)
    # K axis: kd-major (matches the im2col-over-depth lhs packing); lanes: expert-major.
    t = jnp.transpose(t, (1, 2, 0, 3)).reshape(KD * KM, E * NN)
    return {
        "t_w": jax.device_put(t.astype(jnp.bfloat16)),
        "bias": params["bias"].astype(jnp.float32),            # (E, OC)
        "route_w": params["route_w"].astype(jnp.float32),      # (E, embeddings)
        "route_b": params["route_b"].astype(jnp.float32),      # (E,)
    }


@jax.jit
def bare_conv_forward(x, embedding, prepared):
    """x: (N, IC, D, H, W) f32 (NCDHW); embedding: (N, embeddings). Returns (N, OC, D, H, W)."""
    N, IC, D, H, W = x.shape
    E, OC = prepared["bias"].shape
    KM = (H + 2) * (W + 2) * IC
    NN = H * W * OC

    # routing: Linear(embeddings -> E) + sigmoid.  Dropout(p=0.1) is identity at eval.
    routing = jax.nn.sigmoid(
        embedding @ prepared["route_w"].T + prepared["route_b"][None, :]
    ).astype(jnp.float32)                                      # (N, E)
    routing_flat = routing.reshape(-1)                         # (N*E,) -> SMEM scalars

    # Routing-mixed bias, pre-tiled to the output slab layout (N*D, NN).
    bias_mix = routing @ prepared["bias"]                      # (N, OC)
    bias_slab = jnp.tile(bias_mix[:, None, None, :], (1, D, H * W, 1)).reshape(N * D, NN)

    # NCDHW -> NDHWC, pad=1, pack (h2, w2, ic) into one lane axis, then im2col over depth:
    # row (b*D + d) = [xpad[b, d], xpad[b, d+1], xpad[b, d+2]] concatenated (kd-major K).
    x_cl = jnp.transpose(x, (0, 2, 3, 4, 1)).astype(jnp.float32)
    xp = jnp.pad(x_cl, ((0, 0), (1, 1), (1, 1), (1, 1), (0, 0))).reshape(N, D + 2, KM)
    lhs = jnp.concatenate([xp[:, kd:kd + D, :] for kd in range(3)], axis=-1)   # (N, D, 3*KM)
    lhs = lhs.reshape(N * D, 3 * KM).astype(jnp.bfloat16)

    out_flat = pl.pallas_call(
        condconv3d_kernel,
        out_shape=jax.ShapeDtypeStruct((N * D, NN), jnp.float32),
        in_specs=[
            pl.BlockSpec(memory_space=pltpu.MemorySpace.SMEM),   # routing (N*E,)
            pl.BlockSpec(memory_space=pltpu.MemorySpace.VMEM),   # im2col input slab
            pl.BlockSpec(memory_space=pltpu.MemorySpace.VMEM),   # Toeplitz weights
            pl.BlockSpec(memory_space=pltpu.MemorySpace.VMEM),   # mixed bias slab
        ],
        out_specs=pl.BlockSpec(memory_space=pltpu.MemorySpace.VMEM),
    )(routing_flat, lhs, prepared["t_w"], bias_slab)

    # (N*D, H*W*OC) -> (N, D, H, W, OC) -> PyTorch NCDHW
    out = out_flat.reshape(N, D, H, W, OC)
    return jnp.transpose(out, (0, 4, 1, 2, 3))


def reference_forward(x, embedding, params):
    """Pure-JAX f32 reference matching the PyTorch CondConv3D forward."""
    routing = jax.nn.sigmoid(embedding @ params["route_w"].T + params["route_b"][None, :])
    w_b = jnp.einsum("ne,eoidhw->noidhw", routing, params["weight"])   # (N, OC, IC, 3,3,3)
    b_b = jnp.einsum("ne,eo->no", routing, params["bias"])             # (N, OC)

    def one(xb, wb, bb):
        y = jax.lax.conv_general_dilated(
            xb[None], wb, window_strides=(1, 1, 1), padding=[(1, 1)] * 3,
            dimension_numbers=("NCDHW", "OIDHW", "NCDHW"),
            precision=jax.lax.Precision.HIGHEST)[0]
        return y + bb[:, None, None, None]

    return jax.vmap(one)(x, w_b, b_b)


def init_params(key, in_ch, out_ch, num_experts, embeddings):
    k1, k2, k3, k4 = jax.random.split(key, 4)
    fan_in = in_ch * 27
    fan_out = out_ch * 27
    xav = (2.0 / (fan_in + fan_out)) ** 0.5
    return {
        "weight": xav * jax.random.normal(
            k1, (num_experts, out_ch, in_ch, 3, 3, 3), jnp.float32),
        "bias": 0.1 * jax.random.normal(k2, (num_experts, out_ch), jnp.float32),
        "route_w": jax.random.normal(k3, (num_experts, embeddings), jnp.float32),
        "route_b": 0.1 * jax.random.normal(k4, (num_experts,), jnp.float32),
    }


if __name__ == "__main__":
    N, IC, OC = 2, 4, 4
    D = H = W = 8
    NUM_EXPERTS, EMBEDDINGS = 3, 1

    key = jax.random.PRNGKey(0)
    kx, ke, kp = jax.random.split(key, 3)
    x = jax.random.normal(kx, (N, IC, D, H, W), jnp.float32)        # NCDHW
    embedding = jax.random.normal(ke, (N, EMBEDDINGS), jnp.float32)
    params = init_params(kp, IC, OC, NUM_EXPERTS, EMBEDDINGS)

    # One-time parameter preprocessing (Toeplitz expansion hoisted out of the forward path).
    prepared = prepare_bare_conv(params, H, W)

    out = bare_conv_forward(x, embedding, prepared)
    out = jax.block_until_ready(out)

    ref = reference_forward(x, embedding, params)
    assert out.shape == (N, OC, D, H, W), out.shape
    # Tolerance reflects bf16 MXU operands (f32 accumulation) vs. the f32 HIGHEST reference.
    assert jnp.allclose(out, ref, atol=5e-2, rtol=2e-2), float(jnp.max(jnp.abs(out - ref)))

    print("KERNEL_OK")
</pallas_src>

<mosaic_0001>
module attributes {stable_mosaic.version = 11 : i64} {
  func.func @condconv3d_kernel(%arg0: memref<6xf32, #tpu.memory_space<smem>>, %arg1: memref<16x1200xbf16, #tpu.memory_space<vmem>>, %arg2: memref<1200x768xbf16, #tpu.memory_space<vmem>>, %arg3: memref<16x256xf32, #tpu.memory_space<vmem>>, %arg4: memref<16x256xf32, #tpu.memory_space<vmem>>) attributes {dimension_semantics = [], scalar_prefetch = 0 : i64, scratch_operands = 0 : i64, tpu.core_type = #tpu.core_type<tc>} {
    %c0 = arith.constant 0 : index
    %c0_0 = arith.constant 0 : index
    %0 = vector.load %arg1[%c0, %c0_0] : memref<16x1200xbf16, #tpu.memory_space<vmem>>, vector<16x1200xbf16>
    %c0_1 = arith.constant 0 : index
    %c0_2 = arith.constant 0 : index
    %1 = vector.load %arg2[%c0_1, %c0_2] : memref<1200x768xbf16, #tpu.memory_space<vmem>>, vector<1200x768xbf16>
    %cst = arith.constant dense<0.000000e+00> : vector<16x768xf32>
    %2 = tpu.matmul %0, %1, %cst {dimension_numbers = #tpu.dot_dimension_numbers<[1], [0], [0], [1], [0, 0, 1, 1], [], []>} : vector<16x1200xbf16>, vector<1200x768xbf16>, vector<16x768xf32> -> vector<16x768xf32>
    %c0_3 = arith.constant 0 : index
    %c0_4 = arith.constant 0 : index
    %3 = vector.load %arg3[%c0_3, %c0_4] : memref<16x256xf32, #tpu.memory_space<vmem>>, vector<8x256xf32>
    %c0_5 = arith.constant 0 : index
    %4 = memref.load %arg0[%c0_5] : memref<6xf32, #tpu.memory_space<smem>>
    %5 = vector.extract_strided_slice %2 {offsets = [0, 0], sizes = [8, 256], strides = [1, 1]} : vector<16x768xf32> to vector<8x256xf32>
    %6 = vector.broadcast %4 : f32 to vector<8x256xf32>
    %7 = arith.mulf %6, %5 : vector<8x256xf32>
    %8 = arith.addf %3, %7 : vector<8x256xf32>
    %c1 = arith.constant 1 : index
    %9 = memref.load %arg0[%c1] : memref<6xf32, #tpu.memory_space<smem>>
    %10 = vector.extract_strided_slice %2 {offsets = [0, 256], sizes = [8, 256], strides = [1, 1]} : vector<16x768xf32> to vector<8x256xf32>
    %11 = vector.broadcast %9 : f32 to vector<8x256xf32>
    %12 = arith.mulf %11, %10 : vector<8x256xf32>
    %13 = arith.addf %8, %12 : vector<8x256xf32>
    %c2 = arith.constant 2 : index
    %14 = memref.load %arg0[%c2] : memref<6xf32, #tpu.memory_space<smem>>
    %15 = vector.extract_strided_slice %2 {offsets = [0, 512], sizes = [8, 256], strides = [1, 1]} : vector<16x768xf32> to vector<8x256xf32>
    %16 = vector.broadcast %14 : f32 to vector<8x256xf32>
    %17 = arith.mulf %16, %15 : vector<8x256xf32>
    %18 = arith.addf %13, %17 : vector<8x256xf32>
    %c0_6 = arith.constant 0 : index
    %c0_7 = arith.constant 0 : index
    %19 = vector.load %arg4[%c0_6, %c0_7] : memref<16x256xf32, #tpu.memory_space<vmem>>, vector<8x256xf32>
    tpu.vector_store %arg4[%c0_6, %c0_7], %18 {strides = array<i32>} : memref<16x256xf32, #tpu.memory_space<vmem>>, vector<8x256xf32>,
    %c8 = arith.constant 8 : index
    %c0_8 = arith.constant 0 : index
    %20 = vector.load %arg3[%c8, %c0_8] : memref<16x256xf32, #tpu.memory_space<vmem>>, vector<8x256xf32>
    %c3 = arith.constant 3 : index
    %21 = memref.load %arg0[%c3] : memref<6xf32, #tpu.memory_space<smem>>
    %22 = vector.extract_strided_slice %2 {offsets = [8, 0], sizes = [8, 256], strides = [1, 1]} : vector<16x768xf32> to vector<8x256xf32>
    %23 = vector.broadcast %21 : f32 to vector<8x256xf32>
    %24 = arith.mulf %23, %22 : vector<8x256xf32>
    %25 = arith.addf %20, %24 : vector<8x256xf32>
    %c4 = arith.constant 4 : index
    %26 = memref.load %arg0[%c4] : memref<6xf32, #tpu.memory_space<smem>>
    %27 = vector.extract_strided_slice %2 {offsets = [8, 256], sizes = [8, 256], strides = [1, 1]} : vector<16x768xf32> to vector<8x256xf32>
    %28 = vector.broadcast %26 : f32 to vector<8x256xf32>
    %29 = arith.mulf %28, %27 : vector<8x256xf32>
    %30 = arith.addf %25, %29 : vector<8x256xf32>
    %c5 = arith.constant 5 : index
    %31 = memref.load %arg0[%c5] : memref<6xf32, #tpu.memory_space<smem>>
    %32 = vector.extract_strided_slice %2 {offsets = [8, 512], sizes = [8, 256], strides = [1, 1]} : vector<16x768xf32> to vector<8x256xf32>
    %33 = vector.broadcast %31 : f32 to vector<8x256xf32>
    %34 = arith.mulf %33, %32 : vector<8x256xf32>
    %35 = arith.addf %30, %34 : vector<8x256xf32>
    %c8_9 = arith.constant 8 : index
    %c0_10 = arith.constant 0 : index
    %36 = vector.load %arg4[%c8_9, %c0_10] : memref<16x256xf32, #tpu.memory_space<vmem>>, vector<8x256xf32>
    tpu.vector_store %arg4[%c8_9, %c0_10], %35 {strides = array<i32>} : memref<16x256xf32, #tpu.memory_space<vmem>>, vector<8x256xf32>,
    return
  }
}

</mosaic_0001>

<llo_original>
// kernel: tile.7
$region0: #{tile.7}
  %s0 = inlined_call_operand.vmem [shape: f32[2,8,64,1,1,4], index: 0, kind: input, shape index: {}]
  %s1 = inlined_call_operand.vmem [shape: f32[16,256], index: 1, kind: output, shape index: {}]
  $region1: #{tile.7} parent=0
    #allocation0 [shape = 'u8[1048576]{0}', space=vmem, size = 0x100000, scoped, tag = 'scoped mem for input reshape']
    %s3 = sshll.u32 1, 2
    %s4 = ssub.s32 %s3, 1
    %s5 = smul.addr 2, 255
    %s6 = scalar_lea.vmem %s0, %s5
    %v7 = vld [vmem:[%s6] sm:%s4]
    %s8 = scalar_lea.vmem [#allocation0], 2040
    %9 = vst [vmem:[%s8] sm:%s4] %v7
    %s10 = smul.addr 2, 254
    %s11 = scalar_lea.vmem %s0, %s10
    %v12 = vld [vmem:[%s11] sm:%s4]
    %s13 = scalar_lea.vmem [#allocation0], 2032
    %14 = vst [vmem:[%s13] sm:%s4] %v12
    %s15 = smul.addr 2, 253
    %s16 = scalar_lea.vmem %s0, %s15
    %v17 = vld [vmem:[%s16] sm:%s4]
    %s18 = scalar_lea.vmem [#allocation0], 2024
    %19 = vst [vmem:[%s18] sm:%s4] %v17
    %s20 = smul.addr 2, 252
    %s21 = scalar_lea.vmem %s0, %s20
    %v22 = vld [vmem:[%s21] sm:%s4]
    %s23 = scalar_lea.vmem [#allocation0], 2016
    %24 = vst [vmem:[%s23] sm:%s4] %v22
    %s25 = smul.addr 2, 251
    %s26 = scalar_lea.vmem %s0, %s25
    %v27 = vld [vmem:[%s26] sm:%s4]
    %s28 = scalar_lea.vmem [#allocation0], 2008
    %29 = vst [vmem:[%s28] sm:%s4] %v27
    %s30 = smul.addr 2, 250
    %s31 = scalar_lea.vmem %s0, %s30
    %v32 = vld [vmem:[%s31] sm:%s4]
    %s33 = scalar_lea.vmem [#allocation0], 2000
    %34 = vst [vmem:[%s33] sm:%s4] %v32
    %s35 = smul.addr 2, 249
    %s36 = scalar_lea.vmem %s0, %s35
    %v37 = vld [vmem:[%s36] sm:%s4]
    %s38 = scalar_lea.vmem [#allocation0], 1992
    %39 = vst [vmem:[%s38] sm:%s4] %v37
    %s40 = smul.addr 2, 248
    %s41 = scalar_lea.vmem %s0, %s40
    %v42 = vld [vmem:[%s41] sm:%s4]
    %s43 = scalar_lea.vmem [#allocation0], 1984
    %44 = vst [vmem:[%s43] sm:%s4] %v42
    %s45 = smul.addr 2, 247
    %s46 = scalar_lea.vmem %s0, %s45
    %v47 = vld [vmem:[%s46] sm:%s4]
    %s48 = scalar_lea.vmem [#allocation0], 1976
    %49 = vst [vmem:[%s48] sm:%s4] %v47
    %s50 = smul.addr 2, 246
    %s51 = scalar_lea.vmem %s0, %s50
    %v52 = vld [vmem:[%s51] sm:%s4]
    %s53 = scalar_lea.vmem [#allocation0], 1968
    %54 = vst [vmem:[%s53] sm:%s4] %v52
    %s55 = smul.addr 2, 245
    %s56 = scalar_lea.vmem %s0, %s55
    %v57 = vld [vmem:[%s56] sm:%s4]
    %s58 = scalar_lea.vmem [#allocation0], 1960
    %59 = vst [vmem:[%s58] sm:%s4] %v57
    %s60 = smul.addr 2, 244
    %s61 = scalar_lea.vmem %s0, %s60
    %v62 = vld [vmem:[%s61] sm:%s4]
    %s63 = scalar_lea.vmem [#allocation0], 1952
    %64 = vst [vmem:[%s63] sm:%s4] %v62
    %s65 = smul.addr 2, 243
    %s66 = scalar_lea.vmem %s0, %s65
    %v67 = vld [vmem:[%s66] sm:%s4]
    %s68 = scalar_lea.vmem [#allocation0], 1944
    %69 = vst [vmem:[%s68] sm:%s4] %v67
    %s70 = smul.addr 2, 242
    %s71 = scalar_lea.vmem %s0, %s70
    %v72 = vld [vmem:[%s71] sm:%s4]
    %s73 = scalar_lea.vmem [#allocation0], 1936
    %74 = vst [vmem:[%s73] sm:%s4] %v72
    %s75 = smul.addr 2, 241
    %s76 = scalar_lea.vmem %s0, %s75
    %v77 = vld [vmem:[%s76] sm:%s4]
    %s78 = scalar_lea.vmem [#allocation0], 1928
    %79 = vst [vmem:[%s78] sm:%s4] %v77
    %s80 = smul.addr 2, 240
    %s81 = scalar_lea.vmem %s0, %s80
    %v82 = vld [vmem:[%s81] sm:%s4]
    %s83 = scalar_lea.vmem [#allocation0], 1920
    %84 = vst [vmem:[%s83] sm:%s4] %v82
    %s85 = smul.addr 2, 239
    %s86 = scalar_lea.vmem %s0, %s85
    %v87 = vld [vmem:[%s86] sm:%s4]
    %s88 = scalar_lea.vmem [#allocation0], 1912
    %89 = vst [vmem:[%s88] sm:%s4] %v87
    %s90 = smul.addr 2, 238
    %s91 = scalar_lea.vmem %s0, %s90
    %v92 = vld [vmem:[%s91] sm:%s4]
    %s93 = scalar_lea.vmem [#allocation0], 1904
    %94 = vst [vmem:[%s93] sm:%s4] %v92
    %s95 = smul.addr 2, 237
    %s96 = scalar_lea.vmem %s0, %s95
    %v97 = vld [vmem:[%s96] sm:%s4]
    %s98 = scalar_lea.vmem [#allocation0], 1896
    %99 = vst [vmem:[%s98] sm:%s4] %v97
    %s100 = smul.addr 2, 236
    %s101 = scalar_lea.vmem %s0, %s100
    %v102 = vld [vmem:[%s101] sm:%s4]
    %s103 = scalar_lea.vmem [#allocation0], 1888
    %104 = vst [vmem:[%s103] sm:%s4] %v102
    %s105 = smul.addr 2, 235
    %s106 = scalar_lea.vmem %s0, %s105
    %v107 = vld [vmem:[%s106] sm:%s4]
    %s108 = scalar_lea.vmem [#allocation0], 1880
    %109 = vst [vmem:[%s108] sm:%s4] %v107
    %s110 = smul.addr 2, 234
    %s111 = scalar_lea.vmem %s0, %s110
    %v112 = vld [vmem:[%s111] sm:%s4]
    %s113 = scalar_lea.vmem [#allocation0], 1872
    %114 = vst [vmem:[%s113] sm:%s4] %v112
    %s115 = smul.addr 2, 233
    %s116 = scalar_lea.vmem %s0, %s115
    %v117 = vld [vmem:[%s116] sm:%s4]
    %s118 = scalar_lea.vmem [#allocation0], 1864
    %119 = vst [vmem:[%s118] sm:%s4] %v117
    %s120 = smul.addr 2, 232
    %s121 = scalar_lea.vmem %s0, %s120
    %v122 = vld [vmem:[%s121] sm:%s4]
    %s123 = scalar_lea.vmem [#allocation0], 1856
    %124 = vst [vmem:[%s123] sm:%s4] %v122
    %s125 = smul.addr 2, 231
    %s126 = scalar_lea.vmem %s0, %s125
    %v127 = vld [vmem:[%s126] sm:%s4]
    %s128 = scalar_lea.vmem [#allocation0], 1848
    %129 = vst [vmem:[%s128] sm:%s4] %v127
    %s130 = smul.addr 2, 230
    %s131 = scalar_lea.vmem %s0, %s130
    %v132 = vld [vmem:[%s131] sm:%s4]
    %s133 = scalar_lea.vmem [#allocation0], 1840
    %134 = vst [vmem:[%s133] sm:%s4] %v132
    %s135 = smul.addr 2, 229
    %s136 = scalar_lea.vmem %s0, %s135
    %v137 = vld [vmem:[%s136] sm:%s4]
    %s138 = scalar_lea.vmem [#allocation0], 1832
    %139 = vst [vmem:[%s138] sm:%s4] %v137
    %s140 = smul.addr 2, 228
    %s141 = scalar_lea.vmem %s0, %s140
    %v142 = vld [vmem:[%s141] sm:%s4]
    %s143 = scalar_lea.vmem [#allocation0], 1824
    %144 = vst [vmem:[%s143] sm:%s4] %v142
    %s145 = smul.addr 2, 227
    %s146 = scalar_lea.vmem %s0, %s145
    %v147 = vld [vmem:[%s146] sm:%s4]
    %s148 = scalar_lea.vmem [#allocation0], 1816
    %149 = vst [vmem:[%s148] sm:%s4] %v147
    %s150 = smul.addr 2, 226
    %s151 = scalar_lea.vmem %s0, %s150
    %v152 = vld [vmem:[%s151] sm:%s4]
    %s153 = scalar_lea.vmem [#allocation0], 1808
    %154 = vst [vmem:[%s153] sm:%s4] %v152
    %s155 = smul.addr 2, 225
    %s156 = scalar_lea.vmem %s0, %s155
    %v157 = vld [vmem:[%s156] sm:%s4]
    %s158 = scalar_lea.vmem [#allocation0], 1800
    %159 = vst [vmem:[%s158] sm:%s4] %v157
    %s160 = smul.addr 2, 224
    %s161 = scalar_lea.vmem %s0, %s160
    %v162 = vld [vmem:[%s161] sm:%s4]
    %s163 = scalar_lea.vmem [#allocation0], 1792
    %164 = vst [vmem:[%s163] sm:%s4] %v162
    %s165 = smul.addr 2, 223
    %s166 = scalar_lea.vmem %s0, %s165
    %v167 = vld [vmem:[%s166] sm:%s4]
    %s168 = scalar_lea.vmem [#allocation0], 1784
    %169 = vst [vmem:[%s168] sm:%s4] %v167
    %s170 = smul.addr 2, 222
    %s171 = scalar_lea.vmem %s0, %s170
    %v172 = vld [vmem:[%s171] sm:%s4]
    %s173 = scalar_lea.vmem [#allocation0], 1776
    %174 = vst [vmem:[%s173] sm:%s4] %v172
    %s175 = smul.addr 2, 221
    %s176 = scalar_lea.vmem %s0, %s175
    %v177 = vld [vmem:[%s176] sm:%s4]
    %s178 = scalar_lea.vmem [#allocation0], 1768
    %179 = vst [vmem:[%s178] sm:%s4] %v177
    %s180 = smul.addr 2, 220
    %s181 = scalar_lea.vmem %s0, %s180
    %v182 = vld [vmem:[%s181] sm:%s4]
    %s183 = scalar_lea.vmem [#allocation0], 1760
    %184 = vst [vmem:[%s183] sm:%s4] %v182
    %s185 = smul.addr 2, 219
    %s186 = scalar_lea.vmem %s0, %s185
    %v187 = vld [vmem:[%s186] sm:%s4]
    %s188 = scalar_lea.vmem [#allocation0], 1752
    %189 = vst [vmem:[%s188] sm:%s4] %v187
    %s190 = smul.addr 2, 218
    %s191 = scalar_lea.vmem %s0, %s190
    %v192 = vld [vmem:[%s191] sm:%s4]
    %s193 = scalar_lea.vmem [#allocation0], 1744
    %194 = vst [vmem:[%s193] sm:%s4] %v192
    %s195 = smul.addr 2, 217
    %s196 = scalar_lea.vmem %s0, %s195
    %v197 = vld [vmem:[%s196] sm:%s4]
    %s198 = scalar_lea.vmem [#allocation0], 1736
    %199 = vst [vmem:[%s198] sm:%s4] %v197
    %s200 = smul.addr 2, 216
    %s201 = scalar_lea.vmem %s0, %s200
    %v202 = vld [vmem:[%s201] sm:%s4]
    %s203 = scalar_lea.vmem [#allocation0], 1728
    %204 = vst [vmem:[%s203] sm:%s4] %v202
    %s205 = smul.addr 2, 215
    %s206 = scalar_lea.vmem %s0, %s205
    %v207 = vld [vmem:[%s206] sm:%s4]
    %s208 = scalar_lea.vmem [#allocation0], 1720
    %209 = vst [vmem:[%s208] sm:%s4] %v207
    %s210 = smul.addr 2, 214
    %s211 = scalar_lea.vmem %s0, %s210
    %v212 = vld [vmem:[%s211] sm:%s4]
    %s213 = scalar_lea.vmem [#allocation0], 1712
    %214 = vst [vmem:[%s213] sm:%s4] %v212
    %s215 = smul.addr 2, 213
    %s216 = scalar_lea.vmem %s0, %s215
    %v217 = vld [vmem:[%s216] sm:%s4]
    %s218 = scalar_lea.vmem [#allocation0], 1704
    %219 = vst [vmem:[%s218] sm:%s4] %v217
    %s220 = smul.addr 2, 212
    %s221 = scalar_lea.vmem %s0, %s220
    %v222 = vld [vmem:[%s221] sm:%s4]
    %s223 = scalar_lea.vmem [#allocation0], 1696
    %224 = vst [vmem:[%s223] sm:%s4] %v222
    %s225 = smul.addr 2, 211
    %s226 = scalar_lea.vmem %s0, %s225
    %v227 = vld [vmem:[%s226] sm:%s4]
    %s228 = scalar_lea.vmem [#allocation0], 1688
    %229 = vst [vmem:[%s228] sm:%s4] %v227
    %s230 = smul.addr 2, 210
    %s231 = scalar_lea.vmem %s0, %s230
    %v232 = vld [vmem:[%s231] sm:%s4]
    %s233 = scalar_lea.vmem [#allocation0], 1680
    %234 = vst [vmem:[%s233] sm:%s4] %v232
    %s235 = smul.addr 2, 209
    %s236 = scalar_lea.vmem %s0, %s235
    %v237 = vld [vmem:[%s236] sm:%s4]
    %s238 = scalar_lea.vmem [#allocation0], 1672
    %239 = vst [vmem:[%s238] sm:%s4] %v237
    %s240 = smul.addr 2, 208
    %s241 = scalar_lea.vmem %s0, %s240
    %v242 = vld [vmem:[%s241] sm:%s4]
    %s243 = scalar_lea.vmem [#allocation0], 1664
    %244 = vst [vmem:[%s243] sm:%s4] %v242
    %s245 = smul.addr 2, 207
    %s246 = scalar_lea.vmem %s0, %s245
    %v247 = vld [vmem:[%s246] sm:%s4]
    %s248 = scalar_lea.vmem [#allocation0], 1656
    %249 = vst [vmem:[%s248] sm:%s4] %v247
    %s250 = smul.addr 2, 206
    %s251 = scalar_lea.vmem %s0, %s250
    %v252 = vld [vmem:[%s251] sm:%s4]
    %s253 = scalar_lea.vmem [#allocation0], 1648
    %254 = vst [vmem:[%s253] sm:%s4] %v252
    %s255 = smul.addr 2, 205
    %s256 = scalar_lea.vmem %s0, %s255
    %v257 = vld [vmem:[%s256] sm:%s4]
    %s258 = scalar_lea.vmem [#allocation0], 1640
    %259 = vst [vmem:[%s258] sm:%s4] %v257
    %s260 = smul.addr 2, 204
    %s261 = scalar_lea.vmem %s0, %s260
    %v262 = vld [vmem:[%s261] sm:%s4]
    %s263 = scalar_lea.vmem [#allocation0], 1632
    %264 = vst [vmem:[%s263] sm:%s4] %v262
    %s265 = smul.addr 2, 203
    %s266 = scalar_lea.vmem %s0, %s265
    %v267 = vld [vmem:[%s266] sm:%s4]
    %s268 = scalar_lea.vmem [#allocation0], 1624
    %269 = vst [vmem:[%s268] sm:%s4] %v267
    %s270 = smul.addr 2, 202
    %s271 = scalar_lea.vmem %s0, %s270
    %v272 = vld [vmem:[%s271] sm:%s4]
    %s273 = scalar_lea.vmem [#allocation0], 1616
    %274 = vst [vmem:[%s273] sm:%s4] %v272
    %s275 = smul.addr 2, 201
    %s276 = scalar_lea.vmem %s0, %s275
    %v277 = vld [vmem:[%s276] sm:%s4]
    %s278 = scalar_lea.vmem [#allocation0], 1608
    %279 = vst [vmem:[%s278] sm:%s4] %v277
    %s280 = smul.addr 2, 200
    %s281 = scalar_lea.vmem %s0, %s280
    %v282 = vld [vmem:[%s281] sm:%s4]
    %s283 = scalar_lea.vmem [#allocation0], 1600
    %284 = vst [vmem:[%s283] sm:%s4] %v282
    %s285 = smul.addr 2, 199
    %s286 = scalar_lea.vmem %s0, %s285
    %v287 = vld [vmem:[%s286] sm:%s4]
    %s288 = scalar_lea.vmem [#allocation0], 1592
    %289 = vst [vmem:[%s288] sm:%s4] %v287
    %s290 = smul.addr 2, 198
    %s291 = scalar_lea.vmem %s0, %s290
    %v292 = vld [vmem:[%s291] sm:%s4]
    %s293 = scalar_lea.vmem [#allocation0], 1584
    %294 = vst [vmem:[%s293] sm:%s4] %v292
    %s295 = smul.addr 2, 197
    %s296 = scalar_lea.vmem %s0, %s295
    %v297 = vld [vmem:[%s296] sm:%s4]
    %s298 = scalar_lea.vmem [#allocation0], 1576
    %299 = vst [vmem:[%s298] sm:%s4] %v297
    %s300 = smul.addr 2, 196
    %s301 = scalar_lea.vmem %s0, %s300
    %v302 = vld [vmem:[%s301] sm:%s4]
    %s303 = scalar_lea.vmem [#allocation0], 1568
    %304 = vst [vmem:[%s303] sm:%s4] %v302
    %s305 = smul.addr 2, 195
    %s306 = scalar_lea.vmem %s0, %s305
    %v307 = vld [vmem:[%s306] sm:%s4]
    %s308 = scalar_lea.vmem [#allocation0], 1560
    %309 = vst [vmem:[%s308] sm:%s4] %v307
    %s310 = smul.addr 2, 194
    %s311 = scalar_lea.vmem %s0, %s310
    %v312 = vld [vmem:[%s311] sm:%s4]
    %s313 = scalar_lea.vmem [#allocation0], 1552
    %314 = vst [vmem:[%s313] sm:%s4] %v312
    %s315 = smul.addr 2, 193
    %s316 = scalar_lea.vmem %s0, %s315
    %v317 = vld [vmem:[%s316] sm:%s4]
    %s318 = scalar_lea.vmem [#allocation0], 1544
    %319 = vst [vmem:[%s318] sm:%s4] %v317
    %s320 = smul.addr 2, 192
    %s321 = scalar_lea.vmem %s0, %s320
    %v322 = vld [vmem:[%s321] sm:%s4]
    %s323 = scalar_lea.vmem [#allocation0], 1536
    %324 = vst [vmem:[%s323] sm:%s4] %v322
    %s325 = smul.addr 2, 191
    %s326 = scalar_lea.vmem %s0, %s325
    %v327 = vld [vmem:[%s326] sm:%s4]
    %s328 = scalar_lea.vmem [#allocation0], 1528
    %329 = vst [vmem:[%s328] sm:%s4] %v327
    %s330 = smul.addr 2, 190
    %s331 = scalar_lea.vmem %s0, %s330
    %v332 = vld [vmem:[%s331] sm:%s4]
    %s333 = scalar_lea.vmem [#allocation0], 1520
    %334 = vst [vmem:[%s333] sm:%s4] %v332
    %s335 = smul.addr 2, 189
    %s336 = scalar_lea.vmem %s0, %s335
    %v337 = vld [vmem:[%s336] sm:%s4]
    %s338 = scalar_lea.vmem [#allocation0], 1512
    %339 = vst [vmem:[%s338] sm:%s4] %v337
    %s340 = smul.addr 2, 188
    %s341 = scalar_lea.vmem %s0, %s340
    %v342 = vld [vmem:[%s341] sm:%s4]
    %s343 = scalar_lea.vmem [#allocation0], 1504
    %344 = vst [vmem:[%s343] sm:%s4] %v342
    %s345 = smul.addr 2, 187
    %s346 = scalar_lea.vmem %s0, %s345
    %v347 = vld [vmem:[%s346] sm:%s4]
    %s348 = scalar_lea.vmem [#allocation0], 1496
    %349 = vst [vmem:[%s348] sm:%s4] %v347
    %s350 = smul.addr 2, 186
    %s351 = scalar_lea.vmem %s0, %s350
    %v352 = vld [vmem:[%s351] sm:%s4]
    %s353 = scalar_lea.vmem [#allocation0], 1488
    %354 = vst [vmem:[%s353] sm:%s4] %v352
    %s355 = smul.addr 2, 185
    %s356 = scalar_lea.vmem %s0, %s355
    %v357 = vld [vmem:[%s356] sm:%s4]
    %s358 = scalar_lea.vmem [#allocation0], 1480
    %359 = vst [vmem:[%s358] sm:%s4] %v357
    %s360 = smul.addr 2, 184
    %s361 = scalar_lea.vmem %s0, %s360
    %v362 = vld [vmem:[%s361] sm:%s4]
    %s363 = scalar_lea.vmem [#allocation0], 1472
    %364 = vst [vmem:[%s363] sm:%s4] %v362
    %s365 = smul.addr 2, 183
    %s366 = scalar_lea.vmem %s0, %s365
    %v367 = vld [vmem:[%s366] sm:%s4]
    %s368 = scalar_lea.vmem [#allocation0], 1464
    %369 = vst [vmem:[%s368] sm:%s4] %v367
    %s370 = smul.addr 2, 182
    %s371 = scalar_lea.vmem %s0, %s370
    %v372 = vld [vmem:[%s371] sm:%s4]
    %s373 = scalar_lea.vmem [#allocation0], 1456
    %374 = vst [vmem:[%s373] sm:%s4] %v372
    %s375 = smul.addr 2, 181
    %s376 = scalar_lea.vmem %s0, %s375
    %v377 = vld [vmem:[%s376] sm:%s4]
    %s378 = scalar_lea.vmem [#allocation0], 1448
    %379 = vst [vmem:[%s378] sm:%s4] %v377
    %s380 = smul.addr 2, 180
    %s381 = scalar_lea.vmem %s0, %s380
    %v382 = vld [vmem:[%s381] sm:%s4]
    %s383 = scalar_lea.vmem [#allocation0], 1440
    %384 = vst [vmem:[%s383] sm:%s4] %v382
    %s385 = smul.addr 2, 179
    %s386 = scalar_lea.vmem %s0, %s385
    %v387 = vld [vmem:[%s386] sm:%s4]
    %s388 = scalar_lea.vmem [#allocation0], 1432
    %389 = vst [vmem:[%s388] sm:%s4] %v387
    %s390 = smul.addr 2, 178
    %s391 = scalar_lea.vmem %s0, %s390
    %v392 = vld [vmem:[%s391] sm:%s4]
    %s393 = scalar_lea.vmem [#allocation0], 1424
    %394 = vst [vmem:[%s393] sm:%s4] %v392
    %s395 = smul.addr 2, 177
    %s396 = scalar_lea.vmem %s0, %s395
    %v397 = vld [vmem:[%s396] sm:%s4]
    %s398 = scalar_lea.vmem [#allocation0], 1416
    %399 = vst [vmem:[%s398] sm:%s4] %v397
    %s400 = smul.addr 2, 176
    %s401 = scalar_lea.vmem %s0, %s400
    %v402 = vld [vmem:[%s401] sm:%s4]
    %s403 = scalar_lea.vmem [#allocation0], 1408
    %404 = vst [vmem:[%s403] sm:%s4] %v402
    %s405 = smul.addr 2, 175
    %s406 = scalar_lea.vmem %s0, %s405
    %v407 = vld [vmem:[%s406] sm:%s4]
    %s408 = scalar_lea.vmem [#allocation0], 1400
    %409 = vst [vmem:[%s408] sm:%s4] %v407
    %s410 = smul.addr 2, 174
    %s411 = scalar_lea.vmem %s0, %s410
    %v412 = vld [vmem:[%s411] sm:%s4]
    %s413 = scalar_lea.vmem [#allocation0], 1392
    %414 = vst [vmem:[%s413] sm:%s4] %v412
    %s415 = smul.addr 2, 173
    %s416 = scalar_lea.vmem %s0, %s415
    %v417 = vld [vmem:[%s416] sm:%s4]
    %s418 = scalar_lea.vmem [#allocation0], 1384
    %419 = vst [vmem:[%s418] sm:%s4] %v417
    %s420 = smul.addr 2, 172
    %s421 = scalar_lea.vmem %s0, %s420
    %v422 = vld [vmem:[%s421] sm:%s4]
    %s423 = scalar_lea.vmem [#allocation0], 1376
    %424 = vst [vmem:[%s423] sm:%s4] %v422
    %s425 = smul.addr 2, 171
    %s426 = scalar_lea.vmem %s0, %s425
    %v427 = vld [vmem:[%s426] sm:%s4]
    %s428 = scalar_lea.vmem [#allocation0], 1368
    %429 = vst [vmem:[%s428] sm:%s4] %v427
    %s430 = smul.addr 2, 170
    %s431 = scalar_lea.vmem %s0, %s430
    %v432 = vld [vmem:[%s431] sm:%s4]
    %s433 = scalar_lea.vmem [#allocation0], 1360
    %434 = vst [vmem:[%s433] sm:%s4] %v432
    %s435 = smul.addr 2, 169
    %s436 = scalar_lea.vmem %s0, %s435
    %v437 = vld [vmem:[%s436] sm:%s4]
    %s438 = scalar_lea.vmem [#allocation0], 1352
    %439 = vst [vmem:[%s438] sm:%s4] %v437
    %s440 = smul.addr 2, 168
    %s441 = scalar_lea.vmem %s0, %s440
    %v442 = vld [vmem:[%s441] sm:%s4]
    %s443 = scalar_lea.vmem [#allocation0], 1344
    %444 = vst [vmem:[%s443] sm:%s4] %v442
    %s445 = smul.addr 2, 167
    %s446 = scalar_lea.vmem %s0, %s445
    %v447 = vld [vmem:[%s446] sm:%s4]
    %s448 = scalar_lea.vmem [#allocation0], 1336
    %449 = vst [vmem:[%s448] sm:%s4] %v447
    %s450 = smul.addr 2, 166
    %s451 = scalar_lea.vmem %s0, %s450
    %v452 = vld [vmem:[%s451] sm:%s4]
    %s453 = scalar_lea.vmem [#allocation0], 1328
    %454 = vst [vmem:[%s453] sm:%s4] %v452
    %s455 = smul.addr 2, 165
    %s456 = scalar_lea.vmem %s0, %s455
    %v457 = vld [vmem:[%s456] sm:%s4]
    %s458 = scalar_lea.vmem [#allocation0], 1320
    %459 = vst [vmem:[%s458] sm:%s4] %v457
    %s460 = smul.addr 2, 164
    %s461 = scalar_lea.vmem %s0, %s460
    %v462 = vld [vmem:[%s461] sm:%s4]
    %s463 = scalar_lea.vmem [#allocation0], 1312
    %464 = vst [vmem:[%s463] sm:%s4] %v462
    %s465 = smul.addr 2, 163
    %s466 = scalar_lea.vmem %s0, %s465
    %v467 = vld [vmem:[%s466] sm:%s4]
    %s468 = scalar_lea.vmem [#allocation0], 1304
    %469 = vst [vmem:[%s468] sm:%s4] %v467
    %s470 = smul.addr 2, 162
    %s471 = scalar_lea.vmem %s0, %s470
    %v472 = vld [vmem:[%s471] sm:%s4]
    %s473 = scalar_lea.vmem [#allocation0], 1296
    %474 = vst [vmem:[%s473] sm:%s4] %v472
    %s475 = smul.addr 2, 161
    %s476 = scalar_lea.vmem %s0, %s475
    %v477 = vld [vmem:[%s476] sm:%s4]
    %s478 = scalar_lea.vmem [#allocation0], 1288
    %479 = vst [vmem:[%s478] sm:%s4] %v477
    %s480 = smul.addr 2, 160
    %s481 = scalar_lea.vmem %s0, %s480
    %v482 = vld [vmem:[%s481] sm:%s4]
    %s483 = scalar_lea.vmem [#allocation0], 1280
    %484 = vst [vmem:[%s483] sm:%s4] %v482
    %s485 = smul.addr 2, 159
    %s486 = scalar_lea.vmem %s0, %s485
    %v487 = vld [vmem:[%s486] sm:%s4]
    %s488 = scalar_lea.vmem [#allocation0], 1272
    %489 = vst [vmem:[%s488] sm:%s4] %v487
    %s490 = smul.addr 2, 158
    %s491 = scalar_lea.vmem %s0, %s490
    %v492 = vld [vmem:[%s491] sm:%s4]
    %s493 = scalar_lea.vmem [#allocation0], 1264
    %494 = vst [vmem:[%s493] sm:%s4] %v492
    %s495 = smul.addr 2, 157
    %s496 = scalar_lea.vmem %s0, %s495
    %v497 = vld [vmem:[%s496] sm:%s4]
    %s498 = scalar_lea.vmem [#allocation0], 1256
    %499 = vst [vmem:[%s498] sm:%s4] %v497
    %s500 = smul.addr 2, 156
    %s501 = scalar_lea.vmem %s0, %s500
    %v502 = vld [vmem:[%s501] sm:%s4]
    %s503 = scalar_lea.vmem [#allocation0], 1248
    %504 = vst [vmem:[%s503] sm:%s4] %v502
    %s505 = smul.addr 2, 155
    %s506 = scalar_lea.vmem %s0, %s505
    %v507 = vld [vmem:[%s506] sm:%s4]
    %s508 = scalar_lea.vmem [#allocation0], 1240
    %509 = vst [vmem:[%s508] sm:%s4] %v507
    %s510 = smul.addr 2, 154
    %s511 = scalar_lea.vmem %s0, %s510
    %v512 = vld [vmem:[%s511] sm:%s4]
    %s513 = scalar_lea.vmem [#allocation0], 1232
    %514 = vst [vmem:[%s513] sm:%s4] %v512
    %s515 = smul.addr 2, 153
    %s516 = scalar_lea.vmem %s0, %s515
    %v517 = vld [vmem:[%s516] sm:%s4]
    %s518 = scalar_lea.vmem [#allocation0], 1224
    %519 = vst [vmem:[%s518] sm:%s4] %v517
    %s520 = smul.addr 2, 152
    %s521 = scalar_lea.vmem %s0, %s520
    %v522 = vld [vmem:[%s521] sm:%s4]
    %s523 = scalar_lea.vmem [#allocation0], 1216
    %524 = vst [vmem:[%s523] sm:%s4] %v522
    %s525 = smul.addr 2, 151
    %s526 = scalar_lea.vmem %s0, %s525
    %v527 = vld [vmem:[%s526] sm:%s4]
    %s528 = scalar_lea.vmem [#allocation0], 1208
    %529 = vst [vmem:[%s528] sm:%s4] %v527
    %s530 = smul.addr 2, 150
    %s531 = scalar_lea.vmem %s0, %s530
    %v532 = vld [vmem:[%s531] sm:%s4]
    %s533 = scalar_lea.vmem [#allocation0], 1200
    %534 = vst [vmem:[%s533] sm:%s4] %v532
    %s535 = smul.addr 2, 149
    %s536 = scalar_lea.vmem %s0, %s535
    %v537 = vld [vmem:[%s536] sm:%s4]
    %s538 = scalar_lea.vmem [#allocation0], 1192
    %539 = vst [vmem:[%s538] sm:%s4] %v537
    %s540 = smul.addr 2, 148
    %s541 = scalar_lea.vmem %s0, %s540
    %v542 = vld [vmem:[%s541] sm:%s4]
    %s543 = scalar_lea.vmem [#allocation0], 1184
    %544 = vst [vmem:[%s543] sm:%s4] %v542
    %s545 = smul.addr 2, 147
    %s546 = scalar_lea.vmem %s0, %s545
    %v547 = vld [vmem:[%s546] sm:%s4]
    %s548 = scalar_lea.vmem [#allocation0], 1176
    %549 = vst [vmem:[%s548] sm:%s4] %v547
    %s550 = smul.addr 2, 146
    %s551 = scalar_lea.vmem %s0, %s550
    %v552 = vld [vmem:[%s551] sm:%s4]
    %s553 = scalar_lea.vmem [#allocation0], 1168
    %554 = vst [vmem:[%s553] sm:%s4] %v552
    %s555 = smul.addr 2, 145
    %s556 = scalar_lea.vmem %s0, %s555
    %v557 = vld [vmem:[%s556] sm:%s4]
    %s558 = scalar_lea.vmem [#allocation0], 1160
    %559 = vst [vmem:[%s558] sm:%s4] %v557
    %s560 = smul.addr 2, 144
    %s561 = scalar_lea.vmem %s0, %s560
    %v562 = vld [vmem:[%s561] sm:%s4]
    %s563 = scalar_lea.vmem [#allocation0], 1152
    %564 = vst [vmem:[%s563] sm:%s4] %v562
    %s565 = smul.addr 2, 143
    %s566 = scalar_lea.vmem %s0, %s565
    %v567 = vld [vmem:[%s566] sm:%s4]
    %s568 = scalar_lea.vmem [#allocation0], 1144
    %569 = vst [vmem:[%s568] sm:%s4] %v567
    %s570 = smul.addr 2, 142
    %s571 = scalar_lea.vmem %s0, %s570
    %v572 = vld [vmem:[%s571] sm:%s4]
    %s573 = scalar_lea.vmem [#allocation0], 1136
    %574 = vst [vmem:[%s573] sm:%s4] %v572
    %s575 = smul.addr 2, 141
    %s576 = scalar_lea.vmem %s0, %s575
    %v577 = vld [vmem:[%s576] sm:%s4]
    %s578 = scalar_lea.vmem [#allocation0], 1128
    %579 = vst [vmem:[%s578] sm:%s4] %v577
    %s580 = smul.addr 2, 140
    %s581 = scalar_lea.vmem %s0, %s580
    %v582 = vld [vmem:[%s581] sm:%s4]
    %s583 = scalar_lea.vmem [#allocation0], 1120
    %584 = vst [vmem:[%s583] sm:%s4] %v582
    %s585 = smul.addr 2, 139
    %s586 = scalar_lea.vmem %s0, %s585
    %v587 = vld [vmem:[%s586] sm:%s4]
    %s588 = scalar_lea.vmem [#allocation0], 1112
    %589 = vst [vmem:[%s588] sm:%s4] %v587
    %s590 = smul.addr 2, 138
    %s591 = scalar_lea.vmem %s0, %s590
    %v592 = vld [vmem:[%s591] sm:%s4]
    %s593 = scalar_lea.vmem [#allocation0], 1104
    %594 = vst [vmem:[%s593] sm:%s4] %v592
    %s595 = smul.addr 2, 137
    %s596 = scalar_lea.vmem %s0, %s595
    %v597 = vld [vmem:[%s596] sm:%s4]
    %s598 = scalar_lea.vmem [#allocation0], 1096
    %599 = vst [vmem:[%s598] sm:%s4] %v597
    %s600 = smul.addr 2, 136
    %s601 = scalar_lea.vmem %s0, %s600
    %v602 = vld [vmem:[%s601] sm:%s4]
    %s603 = scalar_lea.vmem [#allocation0], 1088
    %604 = vst [vmem:[%s603] sm:%s4] %v602
    %s605 = smul.addr 2, 135
    %s606 = scalar_lea.vmem %s0, %s605
    %v607 = vld [vmem:[%s606] sm:%s4]
    %s608 = scalar_lea.vmem [#allocation0], 1080
    %609 = vst [vmem:[%s608] sm:%s4] %v607
    %s610 = smul.addr 2, 134
    %s611 = scalar_lea.vmem %s0, %s610
    %v612 = vld [vmem:[%s611] sm:%s4]
    %s613 = scalar_lea.vmem [#allocation0], 1072
    %614 = vst [vmem:[%s613] sm:%s4] %v612
    %s615 = smul.addr 2, 133
    %s616 = scalar_lea.vmem %s0, %s615
    %v617 = vld [vmem:[%s616] sm:%s4]
    %s618 = scalar_lea.vmem [#allocation0], 1064
    %619 = vst [vmem:[%s618] sm:%s4] %v617
    %s620 = smul.addr 2, 132
    %s621 = scalar_lea.vmem %s0, %s620
    %v622 = vld [vmem:[%s621] sm:%s4]
    %s623 = scalar_lea.vmem [#allocation0], 1056
    %624 = vst [vmem:[%s623] sm:%s4] %v622
    %s625 = smul.addr 2, 131
    %s626 = scalar_lea.vmem %s0, %s625
    %v627 = vld [vmem:[%s626] sm:%s4]
    %s628 = scalar_lea.vmem [#allocation0], 1048
    %629 = vst [vmem:[%s628] sm:%s4] %v627
    %s630 = smul.addr 2, 130
    %s631 = scalar_lea.vmem %s0, %s630
    %v632 = vld [vmem:[%s631] sm:%s4]
    %s633 = scalar_lea.vmem [#allocation0], 1040
    %634 = vst [vmem:[%s633] sm:%s4] %v632
    %s635 = smul.addr 2, 129
    %s636 = scalar_lea.vmem %s0, %s635
    %v637 = vld [vmem:[%s636] sm:%s4]
    %s638 = scalar_lea.vmem [#allocation0], 1032
    %639 = vst [vmem:[%s638] sm:%s4] %v637
    %s640 = smul.addr 2, 128
    %s641 = scalar_lea.vmem %s0, %s640
    %v642 = vld [vmem:[%s641] sm:%s4]
    %s643 = scalar_lea.vmem [#allocation0], 1024
    %644 = vst [vmem:[%s643] sm:%s4] %v642
    %s645 = smul.addr 2, 127
    %s646 = scalar_lea.vmem %s0, %s645
    %v647 = vld [vmem:[%s646] sm:%s4]
    %s648 = scalar_lea.vmem [#allocation0], 1016
    %649 = vst [vmem:[%s648] sm:%s4] %v647
    %s650 = smul.addr 2, 126
    %s651 = scalar_lea.vmem %s0, %s650
    %v652 = vld [vmem:[%s651] sm:%s4]
    %s653 = scalar_lea.vmem [#allocation0], 1008
    %654 = vst [vmem:[%s653] sm:%s4] %v652
    %s655 = smul.addr 2, 125
    %s656 = scalar_lea.vmem %s0, %s655
    %v657 = vld [vmem:[%s656] sm:%s4]
    %s658 = scalar_lea.vmem [#allocation0], 1000
    %659 = vst [vmem:[%s658] sm:%s4] %v657
    %s660 = smul.addr 2, 124
    %s661 = scalar_lea.vmem %s0, %s660
    %v662 = vld [vmem:[%s661] sm:%s4]
    %s663 = scalar_lea.vmem [#allocation0], 992
    %664 = vst [vmem:[%s663] sm:%s4] %v662
    %s665 = smul.addr 2, 123
    %s666 = scalar_lea.vmem %s0, %s665
    %v667 = vld [vmem:[%s666] sm:%s4]
    %s668 = scalar_lea.vmem [#allocation0], 984
    %669 = vst [vmem:[%s668] sm:%s4] %v667
    %s670 = smul.addr 2, 122
    %s671 = scalar_lea.vmem %s0, %s670
    %v672 = vld [vmem:[%s671] sm:%s4]
    %s673 = scalar_lea.vmem [#allocation0], 976
    %674 = vst [vmem:[%s673] sm:%s4] %v672
    %s675 = smul.addr 2, 121
    %s676 = scalar_lea.vmem %s0, %s675
    %v677 = vld [vmem:[%s676] sm:%s4]
    %s678 = scalar_lea.vmem [#allocation0], 968
    %679 = vst [vmem:[%s678] sm:%s4] %v677
    %s680 = smul.addr 2, 120
    %s681 = scalar_lea.vmem %s0, %s680
    %v682 = vld [vmem:[%s681] sm:%s4]
    %s683 = scalar_lea.vmem [#allocation0], 960
    %684 = vst [vmem:[%s683] sm:%s4] %v682
    %s685 = smul.addr 2, 119
    %s686 = scalar_lea.vmem %s0, %s685
    %v687 = vld [vmem:[%s686] sm:%s4]
    %s688 = scalar_lea.vmem [#allocation0], 952
    %689 = vst [vmem:[%s688] sm:%s4] %v687
    %s690 = smul.addr 2, 118
    %s691 = scalar_lea.vmem %s0, %s690
    %v692 = vld [vmem:[%s691] sm:%s4]
    %s693 = scalar_lea.vmem [#allocation0], 944
    %694 = vst [vmem:[%s693] sm:%s4] %v692
    %s695 = smul.addr 2, 117
    %s696 = scalar_lea.vmem %s0, %s695
    %v697 = vld [vmem:[%s696] sm:%s4]
    %s698 = scalar_lea.vmem [#allocation0], 936
    %699 = vst [vmem:[%s698] sm:%s4] %v697
    %s700 = smul.addr 2, 116
    %s701 = scalar_lea.vmem %s0, %s700
    %v702 = vld [vmem:[%s701] sm:%s4]
    %s703 = scalar_lea.vmem [#allocation0], 928
    %704 = vst [vmem:[%s703] sm:%s4] %v702
    %s705 = smul.addr 2, 115
    %s706 = scalar_lea.vmem %s0, %s705
    %v707 = vld [vmem:[%s706] sm:%s4]
    %s708 = scalar_lea.vmem [#allocation0], 920
    %709 = vst [vmem:[%s708] sm:%s4] %v707
    %s710 = smul.addr 2, 114
    %s711 = scalar_lea.vmem %s0, %s710
    %v712 = vld [vmem:[%s711] sm:%s4]
    %s713 = scalar_lea.vmem [#allocation0], 912
    %714 = vst [vmem:[%s713] sm:%s4] %v712
    %s715 = smul.addr 2, 113
    %s716 = scalar_lea.vmem %s0, %s715
    %v717 = vld [vmem:[%s716] sm:%s4]
    %s718 = scalar_lea.vmem [#allocation0], 904
    %719 = vst [vmem:[%s718] sm:%s4] %v717
    %s720 = smul.addr 2, 112
    %s721 = scalar_lea.vmem %s0, %s720
    %v722 = vld [vmem:[%s721] sm:%s4]
    %s723 = scalar_lea.vmem [#allocation0], 896
    %724 = vst [vmem:[%s723] sm:%s4] %v722
    %s725 = smul.addr 2, 111
    %s726 = scalar_lea.vmem %s0, %s725
    %v727 = vld [vmem:[%s726] sm:%s4]
    %s728 = scalar_lea.vmem [#allocation0], 888
    %729 = vst [vmem:[%s728] sm:%s4] %v727
    %s730 = smul.addr 2, 110
    %s731 = scalar_lea.vmem %s0, %s730
    %v732 = vld [vmem:[%s731] sm:%s4]
    %s733 = scalar_lea.vmem [#allocation0], 880
    %734 = vst [vmem:[%s733] sm:%s4] %v732
    %s735 = smul.addr 2, 109
    %s736 = scalar_lea.vmem %s0, %s735
    %v737 = vld [vmem:[%s736] sm:%s4]
    %s738 = scalar_lea.vmem [#allocation0], 872
    %739 = vst [vmem:[%s738] sm:%s4] %v737
    %s740 = smul.addr 2, 108
    %s741 = scalar_lea.vmem %s0, %s740
    %v742 = vld [vmem:[%s741] sm:%s4]
    %s743 = scalar_lea.vmem [#allocation0], 864
    %744 = vst [vmem:[%s743] sm:%s4] %v742
    %s745 = smul.addr 2, 107
    %s746 = scalar_lea.vmem %s0, %s745
    %v747 = vld [vmem:[%s746] sm:%s4]
    %s748 = scalar_lea.vmem [#allocation0], 856
    %749 = vst [vmem:[%s748] sm:%s4] %v747
    %s750 = smul.addr 2, 106
    %s751 = scalar_lea.vmem %s0, %s750
    %v752 = vld [vmem:[%s751] sm:%s4]
    %s753 = scalar_lea.vmem [#allocation0], 848
    %754 = vst [vmem:[%s753] sm:%s4] %v752
    %s755 = smul.addr 2, 105
    %s756 = scalar_lea.vmem %s0, %s755
    %v757 = vld [vmem:[%s756] sm:%s4]
    %s758 = scalar_lea.vmem [#allocation0], 840
    %759 = vst [vmem:[%s758] sm:%s4] %v757
    %s760 = smul.addr 2, 104
    %s761 = scalar_lea.vmem %s0, %s760
    %v762 = vld [vmem:[%s761] sm:%s4]
    %s763 = scalar_lea.vmem [#allocation0], 832
    %764 = vst [vmem:[%s763] sm:%s4] %v762
    %s765 = smul.addr 2, 103
    %s766 = scalar_lea.vmem %s0, %s765
    %v767 = vld [vmem:[%s766] sm:%s4]
    %s768 = scalar_lea.vmem [#allocation0], 824
    %769 = vst [vmem:[%s768] sm:%s4] %v767
    %s770 = smul.addr 2, 102
    %s771 = scalar_lea.vmem %s0, %s770
    %v772 = vld [vmem:[%s771] sm:%s4]
    %s773 = scalar_lea.vmem [#allocation0], 816
    %774 = vst [vmem:[%s773] sm:%s4] %v772
    %s775 = smul.addr 2, 101
    %s776 = scalar_lea.vmem %s0, %s775
    %v777 = vld [vmem:[%s776] sm:%s4]
    %s778 = scalar_lea.vmem [#allocation0], 808
    %779 = vst [vmem:[%s778] sm:%s4] %v777
    %s780 = smul.addr 2, 100
    %s781 = scalar_lea.vmem %s0, %s780
    %v782 = vld [vmem:[%s781] sm:%s4]
    %s783 = scalar_lea.vmem [#allocation0], 800
    %784 = vst [vmem:[%s783] sm:%s4] %v782
    %s785 = smul.addr 2, 99
    %s786 = scalar_lea.vmem %s0, %s785
    %v787 = vld [vmem:[%s786] sm:%s4]
    %s788 = scalar_lea.vmem [#allocation0], 792
    %789 = vst [vmem:[%s788] sm:%s4] %v787
    %s790 = smul.addr 2, 98
    %s791 = scalar_lea.vmem %s0, %s790
    %v792 = vld [vmem:[%s791] sm:%s4]
    %s793 = scalar_lea.vmem [#allocation0], 784
    %794 = vst [vmem:[%s793] sm:%s4] %v792
    %s795 = smul.addr 2, 97
    %s796 = scalar_lea.vmem %s0, %s795
    %v797 = vld [vmem:[%s796] sm:%s4]
    %s798 = scalar_lea.vmem [#allocation0], 776
    %799 = vst [vmem:[%s798] sm:%s4] %v797
    %s800 = smul.addr 2, 96
    %s801 = scalar_lea.vmem %s0, %s800
    %v802 = vld [vmem:[%s801] sm:%s4]
    %s803 = scalar_lea.vmem [#allocation0], 768
    %804 = vst [vmem:[%s803] sm:%s4] %v802
    %s805 = smul.addr 2, 95
    %s806 = scalar_lea.vmem %s0, %s805
    %v807 = vld [vmem:[%s806] sm:%s4]
    %s808 = scalar_lea.vmem [#allocation0], 760
    %809 = vst [vmem:[%s808] sm:%s4] %v807
    %s810 = smul.addr 2, 94
    %s811 = scalar_lea.vmem %s0, %s810
    %v812 = vld [vmem:[%s811] sm:%s4]
    %s813 = scalar_lea.vmem [#allocation0], 752
    %814 = vst [vmem:[%s813] sm:%s4] %v812
    %s815 = smul.addr 2, 93
    %s816 = scalar_lea.vmem %s0, %s815
    %v817 = vld [vmem:[%s816] sm:%s4]
    %s818 = scalar_lea.vmem [#allocation0], 744
    %819 = vst [vmem:[%s818] sm:%s4] %v817
    %s820 = smul.addr 2, 92
    %s821 = scalar_lea.vmem %s0, %s820
    %v822 = vld [vmem:[%s821] sm:%s4]
    %s823 = scalar_lea.vmem [#allocation0], 736
    %824 = vst [vmem:[%s823] sm:%s4] %v822
    %s825 = smul.addr 2, 91
    %s826 = scalar_lea.vmem %s0, %s825
    %v827 = vld [vmem:[%s826] sm:%s4]
    %s828 = scalar_lea.vmem [#allocation0], 728
    %829 = vst [vmem:[%s828] sm:%s4] %v827
    %s830 = smul.addr 2, 90
    %s831 = scalar_lea.vmem %s0, %s830
    %v832 = vld [vmem:[%s831] sm:%s4]
    %s833 = scalar_lea.vmem [#allocation0], 720
    %834 = vst [vmem:[%s833] sm:%s4] %v832
    %s835 = smul.addr 2, 89
    %s836 = scalar_lea.vmem %s0, %s835
    %v837 = vld [vmem:[%s836] sm:%s4]
    %s838 = scalar_lea.vmem [#allocation0], 712
    %839 = vst [vmem:[%s838] sm:%s4] %v837
    %s840 = smul.addr 2, 88
    %s841 = scalar_lea.vmem %s0, %s840
    %v842 = vld [vmem:[%s841] sm:%s4]
    %s843 = scalar_lea.vmem [#allocation0], 704
    %844 = vst [vmem:[%s843] sm:%s4] %v842
    %s845 = smul.addr 2, 87
    %s846 = scalar_lea.vmem %s0, %s845
    %v847 = vld [vmem:[%s846] sm:%s4]
    %s848 = scalar_lea.vmem [#allocation0], 696
    %849 = vst [vmem:[%s848] sm:%s4] %v847
    %s850 = smul.addr 2, 86
    %s851 = scalar_lea.vmem %s0, %s850
    %v852 = vld [vmem:[%s851] sm:%s4]
    %s853 = scalar_lea.vmem [#allocation0], 688
    %854 = vst [vmem:[%s853] sm:%s4] %v852
    %s855 = smul.addr 2, 85
    %s856 = scalar_lea.vmem %s0, %s855
    %v857 = vld [vmem:[%s856] sm:%s4]
    %s858 = scalar_lea.vmem [#allocation0], 680
    %859 = vst [vmem:[%s858] sm:%s4] %v857
    %s860 = smul.addr 2, 84
    %s861 = scalar_lea.vmem %s0, %s860
    %v862 = vld [vmem:[%s861] sm:%s4]
    %s863 = scalar_lea.vmem [#allocation0], 672
    %864 = vst [vmem:[%s863] sm:%s4] %v862
    %s865 = smul.addr 2, 83
    %s866 = scalar_lea.vmem %s0, %s865
    %v867 = vld [vmem:[%s866] sm:%s4]
    %s868 = scalar_lea.vmem [#allocation0], 664
    %869 = vst [vmem:[%s868] sm:%s4] %v867
    %s870 = smul.addr 2, 82
    %s871 = scalar_lea.vmem %s0, %s870
    %v872 = vld [vmem:[%s871] sm:%s4]
    %s873 = scalar_lea.vmem [#allocation0], 656
    %874 = vst [vmem:[%s873] sm:%s4] %v872
    %s875 = smul.addr 2, 81
    %s876 = scalar_lea.vmem %s0, %s875
    %v877 = vld [vmem:[%s876] sm:%s4]
    %s878 = scalar_lea.vmem [#allocation0], 648
    %879 = vst [vmem:[%s878] sm:%s4] %v877
    %s880 = smul.addr 2, 80
    %s881 = scalar_lea.vmem %s0, %s880
    %v882 = vld [vmem:[%s881] sm:%s4]
    %s883 = scalar_lea.vmem [#allocation0], 640
    %884 = vst [vmem:[%s883] sm:%s4] %v882
    %s885 = smul.addr 2, 79
    %s886 = scalar_lea.vmem %s0, %s885
    %v887 = vld [vmem:[%s886] sm:%s4]
    %s888 = scalar_lea.vmem [#allocation0], 632
    %889 = vst [vmem:[%s888] sm:%s4] %v887
    %s890 = smul.addr 2, 78
    %s891 = scalar_lea.vmem %s0, %s890
    %v892 = vld [vmem:[%s891] sm:%s4]
    %s893 = scalar_lea.vmem [#allocation0], 624
    %894 = vst [vmem:[%s893] sm:%s4] %v892
    %s895 = smul.addr 2, 77
    %s896 = scalar_lea.vmem %s0, %s895
    %v897 = vld [vmem:[%s896] sm:%s4]
    %s898 = scalar_lea.vmem [#allocation0], 616
    %899 = vst [vmem:[%s898] sm:%s4] %v897
    %s900 = smul.addr 2, 76
    %s901 = scalar_lea.vmem %s0, %s900
    %v902 = vld [vmem:[%s901] sm:%s4]
    %s903 = scalar_lea.vmem [#allocation0], 608
    %904 = vst [vmem:[%s903] sm:%s4] %v902
    %s905 = smul.addr 2, 75
    %s906 = scalar_lea.vmem %s0, %s905
    %v907 = vld [vmem:[%s906] sm:%s4]
    %s908 = scalar_lea.vmem [#allocation0], 600
    %909 = vst [vmem:[%s908] sm:%s4] %v907
    %s910 = smul.addr 2, 74
    %s911 = scalar_lea.vmem %s0, %s910
    %v912 = vld [vmem:[%s911] sm:%s4]
    %s913 = scalar_lea.vmem [#allocation0], 592
    %914 = vst [vmem:[%s913] sm:%s4] %v912
    %s915 = smul.addr 2, 73
    %s916 = scalar_lea.vmem %s0, %s915
    %v917 = vld [vmem:[%s916] sm:%s4]
    %s918 = scalar_lea.vmem [#allocation0], 584
    %919 = vst [vmem:[%s918] sm:%s4] %v917
    %s920 = smul.addr 2, 72
    %s921 = scalar_lea.vmem %s0, %s920
    %v922 = vld [vmem:[%s921] sm:%s4]
    %s923 = scalar_lea.vmem [#allocation0], 576
    %924 = vst [vmem:[%s923] sm:%s4] %v922
    %s925 = smul.addr 2, 71
    %s926 = scalar_lea.vmem %s0, %s925
    %v927 = vld [vmem:[%s926] sm:%s4]
    %s928 = scalar_lea.vmem [#allocation0], 568
    %929 = vst [vmem:[%s928] sm:%s4] %v927
    %s930 = smul.addr 2, 70
    %s931 = scalar_lea.vmem %s0, %s930
    %v932 = vld [vmem:[%s931] sm:%s4]
    %s933 = scalar_lea.vmem [#allocation0], 560
    %934 = vst [vmem:[%s933] sm:%s4] %v932
    %s935 = smul.addr 2, 69
    %s936 = scalar_lea.vmem %s0, %s935
    %v937 = vld [vmem:[%s936] sm:%s4]
    %s938 = scalar_lea.vmem [#allocation0], 552
    %939 = vst [vmem:[%s938] sm:%s4] %v937
    %s940 = smul.addr 2, 68
    %s941 = scalar_lea.vmem %s0, %s940
    %v942 = vld [vmem:[%s941] sm:%s4]
    %s943 = scalar_lea.vmem [#allocation0], 544
    %944 = vst [vmem:[%s943] sm:%s4] %v942
    %s945 = smul.addr 2, 67
    %s946 = scalar_lea.vmem %s0, %s945
    %v947 = vld [vmem:[%s946] sm:%s4]
    %s948 = scalar_lea.vmem [#allocation0], 536
    %949 = vst [vmem:[%s948] sm:%s4] %v947
    %s950 = smul.addr 2, 66
    %s951 = scalar_lea.vmem %s0, %s950
    %v952 = vld [vmem:[%s951] sm:%s4]
    %s953 = scalar_lea.vmem [#allocation0], 528
    %954 = vst [vmem:[%s953] sm:%s4] %v952
    %s955 = smul.addr 2, 65
    %s956 = scalar_lea.vmem %s0, %s955
    %v957 = vld [vmem:[%s956] sm:%s4]
    %s958 = scalar_lea.vmem [#allocation0], 520
    %959 = vst [vmem:[%s958] sm:%s4] %v957
    %s960 = smul.addr 2, 64
    %s961 = scalar_lea.vmem %s0, %s960
    %v962 = vld [vmem:[%s961] sm:%s4]
    %s963 = scalar_lea.vmem [#allocation0], 512
    %964 = vst [vmem:[%s963] sm:%s4] %v962
    %s965 = smul.addr 2, 63
    %s966 = scalar_lea.vmem %s0, %s965
    %v967 = vld [vmem:[%s966] sm:%s4]
    %s968 = scalar_lea.vmem [#allocation0], 504
    %969 = vst [vmem:[%s968] sm:%s4] %v967
    %s970 = smul.addr 2, 62
    %s971 = scalar_lea.vmem %s0, %s970
    %v972 = vld [vmem:[%s971] sm:%s4]
    %s973 = scalar_lea.vmem [#allocation0], 496
    %974 = vst [vmem:[%s973] sm:%s4] %v972
    %s975 = smul.addr 2, 61
    %s976 = scalar_lea.vmem %s0, %s975
    %v977 = vld [vmem:[%s976] sm:%s4]
    %s978 = scalar_lea.vmem [#allocation0], 488
    %979 = vst [vmem:[%s978] sm:%s4] %v977
    %s980 = smul.addr 2, 60
    %s981 = scalar_lea.vmem %s0, %s980
    %v982 = vld [vmem:[%s981] sm:%s4]
    %s983 = scalar_lea.vmem [#allocation0], 480
    %984 = vst [vmem:[%s983] sm:%s4] %v982
    %s985 = smul.addr 2, 59
    %s986 = scalar_lea.vmem %s0, %s985
    %v987 = vld [vmem:[%s986] sm:%s4]
    %s988 = scalar_lea.vmem [#allocation0], 472
    %989 = vst [vmem:[%s988] sm:%s4] %v987
    %s990 = smul.addr 2, 58
    %s991 = scalar_lea.vmem %s0, %s990
    %v992 = vld [vmem:[%s991] sm:%s4]
    %s993 = scalar_lea.vmem [#allocation0], 464
    %994 = vst [vmem:[%s993] sm:%s4] %v992
    %s995 = smul.addr 2, 57
    %s996 = scalar_lea.vmem %s0, %s995
    %v997 = vld [vmem:[%s996] sm:%s4]
    %s998 = scalar_lea.vmem [#allocation0], 456
    %999 = vst [vmem:[%s998] sm:%s4] %v997
    %s1000 = smul.addr 2, 56
    %s1001 = scalar_lea.vmem %s0, %s1000
    %v1002 = vld [vmem:[%s1001] sm:%s4]
    %s1003 = scalar_lea.vmem [#allocation0], 448
    %1004 = vst [vmem:[%s1003] sm:%s4] %v1002
    %s1005 = smul.addr 2, 55
    %s1006 = scalar_lea.vmem %s0, %s1005
    %v1007 = vld [vmem:[%s1006] sm:%s4]
    %s1008 = scalar_lea.vmem [#allocation0], 440
    %1009 = vst [vmem:[%s1008] sm:%s4] %v1007
    %s1010 = smul.addr 2, 54
    %s1011 = scalar_lea.vmem %s0, %s1010
    %v1012 = vld [vmem:[%s1011] sm:%s4]
    %s1013 = scalar_lea.vmem [#allocation0], 432
    %1014 = vst [vmem:[%s1013] sm:%s4] %v1012
    %s1015 = smul.addr 2, 53
    %s1016 = scalar_lea.vmem %s0, %s1015
    %v1017 = vld [vmem:[%s1016] sm:%s4]
    %s1018 = scalar_lea.vmem [#allocation0], 424
    %1019 = vst [vmem:[%s1018] sm:%s4] %v1017
    %s1020 = smul.addr 2, 52
    %s1021 = scalar_lea.vmem %s0, %s1020
    %v1022 = vld [vmem:[%s1021] sm:%s4]
    %s1023 = scalar_lea.vmem [#allocation0], 416
    %1024 = vst [vmem:[%s1023] sm:%s4] %v1022
    %s1025 = smul.addr 2, 51
    %s1026 = scalar_lea.vmem %s0, %s1025
    %v1027 = vld [vmem:[%s1026] sm:%s4]
    %s1028 = scalar_lea.vmem [#allocation0], 408
    %1029 = vst [vmem:[%s1028] sm:%s4] %v1027
    %s1030 = smul.addr 2, 50
    %s1031 = scalar_lea.vmem %s0, %s1030
    %v1032 = vld [vmem:[%s1031] sm:%s4]
    %s1033 = scalar_lea.vmem [#allocation0], 400
    %1034 = vst [vmem:[%s1033] sm:%s4] %v1032
    %s1035 = smul.addr 2, 49
    %s1036 = scalar_lea.vmem %s0, %s1035
    %v1037 = vld [vmem:[%s1036] sm:%s4]
    %s1038 = scalar_lea.vmem [#allocation0], 392
    %1039 = vst [vmem:[%s1038] sm:%s4] %v1037
    %s1040 = smul.addr 2, 48
    %s1041 = scalar_lea.vmem %s0, %s1040
    %v1042 = vld [vmem:[%s1041] sm:%s4]
    %s1043 = scalar_lea.vmem [#allocation0], 384
    %1044 = vst [vmem:[%s1043] sm:%s4] %v1042
    %s1045 = smul.addr 2, 47
    %s1046 = scalar_lea.vmem %s0, %s1045
    %v1047 = vld [vmem:[%s1046] sm:%s4]
    %s1048 = scalar_lea.vmem [#allocation0], 376
    %1049 = vst [vmem:[%s1048] sm:%s4] %v1047
    %s1050 = smul.addr 2, 46
    %s1051 = scalar_lea.vmem %s0, %s1050
    %v1052 = vld [vmem:[%s1051] sm:%s4]
    %s1053 = scalar_lea.vmem [#allocation0], 368
    %1054 = vst [vmem:[%s1053] sm:%s4] %v1052
    %s1055 = smul.addr 2, 45
    %s1056 = scalar_lea.vmem %s0, %s1055
    %v1057 = vld [vmem:[%s1056] sm:%s4]
    %s1058 = scalar_lea.vmem [#allocation0], 360
    %1059 = vst [vmem:[%s1058] sm:%s4] %v1057
    %s1060 = smul.addr 2, 44
    %s1061 = scalar_lea.vmem %s0, %s1060
    %v1062 = vld [vmem:[%s1061] sm:%s4]
    %s1063 = scalar_lea.vmem [#allocation0], 352
    %1064 = vst [vmem:[%s1063] sm:%s4] %v1062
    %s1065 = smul.addr 2, 43
    %s1066 = scalar_lea.vmem %s0, %s1065
    %v1067 = vld [vmem:[%s1066] sm:%s4]
    %s1068 = scalar_lea.vmem [#allocation0], 344
    %1069 = vst [vmem:[%s1068] sm:%s4] %v1067
    %s1070 = smul.addr 2, 42
    %s1071 = scalar_lea.vmem %s0, %s1070
    %v1072 = vld [vmem:[%s1071] sm:%s4]
    %s1073 = scalar_lea.vmem [#allocation0], 336
    %1074 = vst [vmem:[%s1073] sm:%s4] %v1072
    %s1075 = smul.addr 2, 41
    %s1076 = scalar_lea.vmem %s0, %s1075
    %v1077 = vld [vmem:[%s1076] sm:%s4]
    %s1078 = scalar_lea.vmem [#allocation0], 328
    %1079 = vst [vmem:[%s1078] sm:%s4] %v1077
    %s1080 = smul.addr 2, 40
    %s1081 = scalar_lea.vmem %s0, %s1080
    %v1082 = vld [vmem:[%s1081] sm:%s4]
    %s1083 = scalar_lea.vmem [#allocation0], 320
    %1084 = vst [vmem:[%s1083] sm:%s4] %v1082
    %s1085 = smul.addr 2, 39
    %s1086 = scalar_lea.vmem %s0, %s1085
    %v1087 = vld [vmem:[%s1086] sm:%s4]
    %s1088 = scalar_lea.vmem [#allocation0], 312
    %1089 = vst [vmem:[%s1088] sm:%s4] %v1087
    %s1090 = smul.addr 2, 38
    %s1091 = scalar_lea.vmem %s0, %s1090
    %v1092 = vld [vmem:[%s1091] sm:%s4]
    %s1093 = scalar_lea.vmem [#allocation0], 304
    %1094 = vst [vmem:[%s1093] sm:%s4] %v1092
    %s1095 = smul.addr 2, 37
    %s1096 = scalar_lea.vmem %s0, %s1095
    %v1097 = vld [vmem:[%s1096] sm:%s4]
    %s1098 = scalar_lea.vmem [#allocation0], 296
    %1099 = vst [vmem:[%s1098] sm:%s4] %v1097
    %s1100 = smul.addr 2, 36
    %s1101 = scalar_lea.vmem %s0, %s1100
    %v1102 = vld [vmem:[%s1101] sm:%s4]
    %s1103 = scalar_lea.vmem [#allocation0], 288
    %1104 = vst [vmem:[%s1103] sm:%s4] %v1102
    %s1105 = smul.addr 2, 35
    %s1106 = scalar_lea.vmem %s0, %s1105
    %v1107 = vld [vmem:[%s1106] sm:%s4]
    %s1108 = scalar_lea.vmem [#allocation0], 280
    %1109 = vst [vmem:[%s1108] sm:%s4] %v1107
    %s1110 = smul.addr 2, 34
    %s1111 = scalar_lea.vmem %s0, %s1110
    %v1112 = vld [vmem:[%s1111] sm:%s4]
    %s1113 = scalar_lea.vmem [#allocation0], 272
    %1114 = vst [vmem:[%s1113] sm:%s4] %v1112
    %s1115 = smul.addr 2, 33
    %s1116 = scalar_lea.vmem %s0, %s1115
    %v1117 = vld [vmem:[%s1116] sm:%s4]
    %s1118 = scalar_lea.vmem [#allocation0], 264
    %1119 = vst [vmem:[%s1118] sm:%s4] %v1117
    %s1120 = smul.addr 2, 32
    %s1121 = scalar_lea.vmem %s0, %s1120
    %v1122 = vld [vmem:[%s1121] sm:%s4]
    %s1123 = scalar_lea.vmem [#allocation0], 256
    %1124 = vst [vmem:[%s1123] sm:%s4] %v1122
    %s1125 = smul.addr 2, 31
    %s1126 = scalar_lea.vmem %s0, %s1125
    %v1127 = vld [vmem:[%s1126] sm:%s4]
    %s1128 = scalar_lea.vmem [#allocation0], 248
    %1129 = vst [vmem:[%s1128] sm:%s4] %v1127
    %s1130 = smul.addr 2, 30
    %s1131 = scalar_lea.vmem %s0, %s1130
    %v1132 = vld [vmem:[%s1131] sm:%s4]
    %s1133 = scalar_lea.vmem [#allocation0], 240
    %1134 = vst [vmem:[%s1133] sm:%s4] %v1132
    %s1135 = smul.addr 2, 29
    %s1136 = scalar_lea.vmem %s0, %s1135
    %v1137 = vld [vmem:[%s1136] sm:%s4]
    %s1138 = scalar_lea.vmem [#allocation0], 232
    %1139 = vst [vmem:[%s1138] sm:%s4] %v1137
    %s1140 = smul.addr 2, 28
    %s1141 = scalar_lea.vmem %s0, %s1140
    %v1142 = vld [vmem:[%s1141] sm:%s4]
    %s1143 = scalar_lea.vmem [#allocation0], 224
    %1144 = vst [vmem:[%s1143] sm:%s4] %v1142
    %s1145 = smul.addr 2, 27
    %s1146 = scalar_lea.vmem %s0, %s1145
    %v1147 = vld [vmem:[%s1146] sm:%s4]
    %s1148 = scalar_lea.vmem [#allocation0], 216
    %1149 = vst [vmem:[%s1148] sm:%s4] %v1147
    %s1150 = smul.addr 2, 26
    %s1151 = scalar_lea.vmem %s0, %s1150
    %v1152 = vld [vmem:[%s1151] sm:%s4]
    %s1153 = scalar_lea.vmem [#allocation0], 208
    %1154 = vst [vmem:[%s1153] sm:%s4] %v1152
    %s1155 = smul.addr 2, 25
    %s1156 = scalar_lea.vmem %s0, %s1155
    %v1157 = vld [vmem:[%s1156] sm:%s4]
    %s1158 = scalar_lea.vmem [#allocation0], 200
    %1159 = vst [vmem:[%s1158] sm:%s4] %v1157
    %s1160 = smul.addr 2, 24
    %s1161 = scalar_lea.vmem %s0, %s1160
    %v1162 = vld [vmem:[%s1161] sm:%s4]
    %s1163 = scalar_lea.vmem [#allocation0], 192
    %1164 = vst [vmem:[%s1163] sm:%s4] %v1162
    %s1165 = smul.addr 2, 23
    %s1166 = scalar_lea.vmem %s0, %s1165
    %v1167 = vld [vmem:[%s1166] sm:%s4]
    %s1168 = scalar_lea.vmem [#allocation0], 184
    %1169 = vst [vmem:[%s1168] sm:%s4] %v1167
    %s1170 = smul.addr 2, 22
    %s1171 = scalar_lea.vmem %s0, %s1170
    %v1172 = vld [vmem:[%s1171] sm:%s4]
    %s1173 = scalar_lea.vmem [#allocation0], 176
    %1174 = vst [vmem:[%s1173] sm:%s4] %v1172
    %s1175 = smul.addr 2, 21
    %s1176 = scalar_lea.vmem %s0, %s1175
    %v1177 = vld [vmem:[%s1176] sm:%s4]
    %s1178 = scalar_lea.vmem [#allocation0], 168
    %1179 = vst [vmem:[%s1178] sm:%s4] %v1177
    %s1180 = smul.addr 2, 20
    %s1181 = scalar_lea.vmem %s0, %s1180
    %v1182 = vld [vmem:[%s1181] sm:%s4]
    %s1183 = scalar_lea.vmem [#allocation0], 160
    %1184 = vst [vmem:[%s1183] sm:%s4] %v1182
    %s1185 = smul.addr 2, 19
    %s1186 = scalar_lea.vmem %s0, %s1185
    %v1187 = vld [vmem:[%s1186] sm:%s4]
    %s1188 = scalar_lea.vmem [#allocation0], 152
    %1189 = vst [vmem:[%s1188] sm:%s4] %v1187
    %s1190 = smul.addr 2, 18
    %s1191 = scalar_lea.vmem %s0, %s1190
    %v1192 = vld [vmem:[%s1191] sm:%s4]
    %s1193 = scalar_lea.vmem [#allocation0], 144
    %1194 = vst [vmem:[%s1193] sm:%s4] %v1192
    %s1195 = smul.addr 2, 17
    %s1196 = scalar_lea.vmem %s0, %s1195
    %v1197 = vld [vmem:[%s1196] sm:%s4]
    %s1198 = scalar_lea.vmem [#allocation0], 136
    %1199 = vst [vmem:[%s1198] sm:%s4] %v1197
    %s1200 = smul.addr 2, 16
    %s1201 = scalar_lea.vmem %s0, %s1200
    %v1202 = vld [vmem:[%s1201] sm:%s4]
    %s1203 = scalar_lea.vmem [#allocation0], 128
    %1204 = vst [vmem:[%s1203] sm:%s4] %v1202
    %s1205 = smul.addr 2, 15
    %s1206 = scalar_lea.vmem %s0, %s1205
    %v1207 = vld [vmem:[%s1206] sm:%s4]
    %s1208 = scalar_lea.vmem [#allocation0], 120
    %1209 = vst [vmem:[%s1208] sm:%s4] %v1207
    %s1210 = smul.addr 2, 14
    %s1211 = scalar_lea.vmem %s0, %s1210
    %v1212 = vld [vmem:[%s1211] sm:%s4]
    %s1213 = scalar_lea.vmem [#allocation0], 112
    %1214 = vst [vmem:[%s1213] sm:%s4] %v1212
    %s1215 = smul.addr 2, 13
    %s1216 = scalar_lea.vmem %s0, %s1215
    %v1217 = vld [vmem:[%s1216] sm:%s4]
    %s1218 = scalar_lea.vmem [#allocation0], 104
    %1219 = vst [vmem:[%s1218] sm:%s4] %v1217
    %s1220 = smul.addr 2, 12
    %s1221 = scalar_lea.vmem %s0, %s1220
    %v1222 = vld [vmem:[%s1221] sm:%s4]
    %s1223 = scalar_lea.vmem [#allocation0], 96
    %1224 = vst [vmem:[%s1223] sm:%s4] %v1222
    %s1225 = smul.addr 2, 11
    %s1226 = scalar_lea.vmem %s0, %s1225
    %v1227 = vld [vmem:[%s1226] sm:%s4]
    %s1228 = scalar_lea.vmem [#allocation0], 88
    %1229 = vst [vmem:[%s1228] sm:%s4] %v1227
    %s1230 = smul.addr 2, 10
    %s1231 = scalar_lea.vmem %s0, %s1230
    %v1232 = vld [vmem:[%s1231] sm:%s4]
    %s1233 = scalar_lea.vmem [#allocation0], 80
    %1234 = vst [vmem:[%s1233] sm:%s4] %v1232
    %s1235 = smul.addr 2, 9
    %s1236 = scalar_lea.vmem %s0, %s1235
    %v1237 = vld [vmem:[%s1236] sm:%s4]
    %s1238 = scalar_lea.vmem [#allocation0], 72
    %1239 = vst [vmem:[%s1238] sm:%s4] %v1237
    %s1240 = smul.addr 2, 8
    %s1241 = scalar_lea.vmem %s0, %s1240
    %v1242 = vld [vmem:[%s1241] sm:%s4]
    %s1243 = scalar_lea.vmem [#allocation0], 64
    %1244 = vst [vmem:[%s1243] sm:%s4] %v1242
    %s1245 = smul.addr 2, 7
    %s1246 = scalar_lea.vmem %s0, %s1245
    %v1247 = vld [vmem:[%s1246] sm:%s4]
    %s1248 = scalar_lea.vmem [#allocation0], 56
    %1249 = vst [vmem:[%s1248] sm:%s4] %v1247
    %s1250 = smul.addr 2, 6
    %s1251 = scalar_lea.vmem %s0, %s1250
    %v1252 = vld [vmem:[%s1251] sm:%s4]
    %s1253 = scalar_lea.vmem [#allocation0], 48
    %1254 = vst [vmem:[%s1253] sm:%s4] %v1252
    %s1255 = smul.addr 2, 5
    %s1256 = scalar_lea.vmem %s0, %s1255
    %v1257 = vld [vmem:[%s1256] sm:%s4]
    %s1258 = scalar_lea.vmem [#allocation0], 40
    %1259 = vst [vmem:[%s1258] sm:%s4] %v1257
    %s1260 = smul.addr 2, 4
    %s1261 = scalar_lea.vmem %s0, %s1260
    %v1262 = vld [vmem:[%s1261] sm:%s4]
    %s1263 = scalar_lea.vmem [#allocation0], 32
    %1264 = vst [vmem:[%s1263] sm:%s4] %v1262
    %s1265 = smul.addr 2, 3
    %s1266 = scalar_lea.vmem %s0, %s1265
    %v1267 = vld [vmem:[%s1266] sm:%s4]
    %s1268 = scalar_lea.vmem [#allocation0], 24
    %1269 = vst [vmem:[%s1268] sm:%s4] %v1267
    %s1270 = smul.addr 2, 2
    %s1271 = scalar_lea.vmem %s0, %s1270
    %v1272 = vld [vmem:[%s1271] sm:%s4]
    %s1273 = scalar_lea.vmem [#allocation0], 16
    %1274 = vst [vmem:[%s1273] sm:%s4] %v1272
    %s1275 = scalar_lea.vmem %s0, 2
    %v1276 = vld [vmem:[%s1275] sm:%s4]
    %s1277 = scalar_lea.vmem [#allocation0], 8
    %1278 = vst [vmem:[%s1277] sm:%s4] %v1276
    %v1279 = vld [vmem:[%s0] sm:%s4]
    %1280 = vst [vmem:[#allocation0] sm:%s4] %v1279
    %v1281 = vld [vmem:[#allocation0] ss:$8 sm:$0xf]
    %v1282 = vld [vmem:[#allocation0] ss:$8 sm:$0xf0]
    %vm1283 = vcmask 1047556
    %v1284 = vsel %vm1283, %v1282, %v1281
    %vm1285 = vcmask 64512
    %1286 = vst.msk [vmem:[%s1] sm:$0xff] %vm1285, %v1284
    %s1287 = scalar_lea.vmem [#allocation0], 64
    %v1288 = vld [vmem:[%s1287] ss:$8 sm:$0xf]
    %s1289 = scalar_lea.vmem [#allocation0], 64
    %v1290 = vld [vmem:[%s1289] ss:$8 sm:$0xf0]
    %vm1291 = vcmask 1047556
    %v1292 = vsel %vm1291, %v1290, %v1288
    %vm1293 = vcmask 64512
    %s1294 = scalar_lea.vmem %s1, 8
    %1295 = vst.msk [vmem:[%s1294] sm:$0xff] %vm1293, %v1292
    %s1296 = scalar_lea.vmem [#allocation0], 128
    %v1297 = vld [vmem:[%s1296] ss:$8 sm:$0xf]
    %s1298 = scalar_lea.vmem [#allocation0], 128
    %v1299 = vld [vmem:[%s1298] ss:$8 sm:$0xf0]
    %vm1300 = vcmask 1047556
    %v1301 = vsel %vm1300, %v1299, %v1297
    %vm1302 = vcmask 64512
    %s1303 = scalar_lea.vmem %s1, 16
    %1304 = vst.msk [vmem:[%s1303] sm:$0xff] %vm1302, %v1301
    %s1305 = scalar_lea.vmem [#allocation0], 192
    %v1306 = vld [vmem:[%s1305] ss:$8 sm:$0xf]
    %s1307 = scalar_lea.vmem [#allocation0], 192
    %v1308 = vld [vmem:[%s1307] ss:$8 sm:$0xf0]
    %vm1309 = vcmask 1047556
    %v1310 = vsel %vm1309, %v1308, %v1306
    %vm1311 = vcmask 64512
    %s1312 = scalar_lea.vmem %s1, 24
    %1313 = vst.msk [vmem:[%s1312] sm:$0xff] %vm1311, %v1310
    %s1314 = scalar_lea.vmem [#allocation0], 256
    %v1315 = vld [vmem:[%s1314] ss:$8 sm:$0xf]
    %s1316 = scalar_lea.vmem [#allocation0], 256
    %v1317 = vld [vmem:[%s1316] ss:$8 sm:$0xf0]
    %vm1318 = vcmask 1047556
    %v1319 = vsel %vm1318, %v1317, %v1315
    %vm1320 = vcmask 64512
    %s1321 = scalar_lea.vmem %s1, 32
    %1322 = vst.msk [vmem:[%s1321] sm:$0xff] %vm1320, %v1319
    %s1323 = scalar_lea.vmem [#allocation0], 320
    %v1324 = vld [vmem:[%s1323] ss:$8 sm:$0xf]
    %s1325 = scalar_lea.vmem [#allocation0], 320
    %v1326 = vld [vmem:[%s1325] ss:$8 sm:$0xf0]
    %vm1327 = vcmask 1047556
    %v1328 = vsel %vm1327, %v1326, %v1324
    %vm1329 = vcmask 64512
    %s1330 = scalar_lea.vmem %s1, 40
    %1331 = vst.msk [vmem:[%s1330] sm:$0xff] %vm1329, %v1328
    %s1332 = scalar_lea.vmem [#allocation0], 384
    %v1333 = vld [vmem:[%s1332] ss:$8 sm:$0xf]
    %s1334 = scalar_lea.vmem [#allocation0], 384
    %v1335 = vld [vmem:[%s1334] ss:$8 sm:$0xf0]
    %vm1336 = vcmask 1047556
    %v1337 = vsel %vm1336, %v1335, %v1333
    %vm1338 = vcmask 64512
    %s1339 = scalar_lea.vmem %s1, 48
    %1340 = vst.msk [vmem:[%s1339] sm:$0xff] %vm1338, %v1337
    %s1341 = scalar_lea.vmem [#allocation0], 448
    %v1342 = vld [vmem:[%s1341] ss:$8 sm:$0xf]
    %s1343 = scalar_lea.vmem [#allocation0], 448
    %v1344 = vld [vmem:[%s1343] ss:$8 sm:$0xf0]
    %vm1345 = vcmask 1047556
    %v1346 = vsel %vm1345, %v1344, %v1342
    %vm1347 = vcmask 64512
    %s1348 = scalar_lea.vmem %s1, 56
    %1349 = vst.msk [vmem:[%s1348] sm:$0xff] %vm1347, %v1346
    %s1350 = scalar_lea.vmem [#allocation0], 512
    %v1351 = vld [vmem:[%s1350] ss:$8 sm:$0xf]
    %s1352 = scalar_lea.vmem [#allocation0], 512
    %v1353 = vld [vmem:[%s1352] ss:$8 sm:$0xf0]
    %vm1354 = vcmask 1047556
    %v1355 = vsel %vm1354, %v1353, %v1351
    %vm1356 = vcmask 64512
    %s1357 = scalar_lea.vmem %s1, 64
    %1358 = vst.msk [vmem:[%s1357] sm:$0xff] %vm1356, %v1355
    %s1359 = scalar_lea.vmem [#allocation0], 576
    %v1360 = vld [vmem:[%s1359] ss:$8 sm:$0xf]
    %s1361 = scalar_lea.vmem [#allocation0], 576
    %v1362 = vld [vmem:[%s1361] ss:$8 sm:$0xf0]
    %vm1363 = vcmask 1047556
    %v1364 = vsel %vm1363, %v1362, %v1360
    %vm1365 = vcmask 64512
    %s1366 = scalar_lea.vmem %s1, 72
    %1367 = vst.msk [vmem:[%s1366] sm:$0xff] %vm1365, %v1364
    %s1368 = scalar_lea.vmem [#allocation0], 640
    %v1369 = vld [vmem:[%s1368] ss:$8 sm:$0xf]
    %s1370 = scalar_lea.vmem [#allocation0], 640
    %v1371 = vld [vmem:[%s1370] ss:$8 sm:$0xf0]
    %vm1372 = vcmask 1047556
    %v1373 = vsel %vm1372, %v1371, %v1369
    %vm1374 = vcmask 64512
    %s1375 = scalar_lea.vmem %s1, 80
    %1376 = vst.msk [vmem:[%s1375] sm:$0xff] %vm1374, %v1373
    %s1377 = scalar_lea.vmem [#allocation0], 704
    %v1378 = vld [vmem:[%s1377] ss:$8 sm:$0xf]
    %s1379 = scalar_lea.vmem [#allocation0], 704
    %v1380 = vld [vmem:[%s1379] ss:$8 sm:$0xf0]
    %vm1381 = vcmask 1047556
    %v1382 = vsel %vm1381, %v1380, %v1378
    %vm1383 = vcmask 64512
    %s1384 = scalar_lea.vmem %s1, 88
    %1385 = vst.msk [vmem:[%s1384] sm:$0xff] %vm1383, %v1382
    %s1386 = scalar_lea.vmem [#allocation0], 768
    %v1387 = vld [vmem:[%s1386] ss:$8 sm:$0xf]
    %s1388 = scalar_lea.vmem [#allocation0], 768
    %v1389 = vld [vmem:[%s1388] ss:$8 sm:$0xf0]
    %vm1390 = vcmask 1047556
    %v1391 = vsel %vm1390, %v1389, %v1387
    %vm1392 = vcmask 64512
    %s1393 = scalar_lea.vmem %s1, 96
    %1394 = vst.msk [vmem:[%s1393] sm:$0xff] %vm1392, %v1391
    %s1395 = scalar_lea.vmem [#allocation0], 832
    %v1396 = vld [vmem:[%s1395] ss:$8 sm:$0xf]
    %s1397 = scalar_lea.vmem [#allocation0], 832
    %v1398 = vld [vmem:[%s1397] ss:$8 sm:$0xf0]
    %vm1399 = vcmask 1047556
    %v1400 = vsel %vm1399, %v1398, %v1396
    %vm1401 = vcmask 64512
    %s1402 = scalar_lea.vmem %s1, 104
    %1403 = vst.msk [vmem:[%s1402] sm:$0xff] %vm1401, %v1400
    %s1404 = scalar_lea.vmem [#allocation0], 896
    %v1405 = vld [vmem:[%s1404] ss:$8 sm:$0xf]
    %s1406 = scalar_lea.vmem [#allocation0], 896
    %v1407 = vld [vmem:[%s1406] ss:$8 sm:$0xf0]
    %vm1408 = vcmask 1047556
    %v1409 = vsel %vm1408, %v1407, %v1405
    %vm1410 = vcmask 64512
    %s1411 = scalar_lea.vmem %s1, 112
    %1412 = vst.msk [vmem:[%s1411] sm:$0xff] %vm1410, %v1409
    %s1413 = scalar_lea.vmem [#allocation0], 960
    %v1414 = vld [vmem:[%s1413] ss:$8 sm:$0xf]
    %s1415 = scalar_lea.vmem [#allocation0], 960
    %v1416 = vld [vmem:[%s1415] ss:$8 sm:$0xf0]
    %vm1417 = vcmask 1047556
    %v1418 = vsel %vm1417, %v1416, %v1414
    %vm1419 = vcmask 64512
    %s1420 = scalar_lea.vmem %s1, 120
    %1421 = vst.msk [vmem:[%s1420] sm:$0xff] %vm1419, %v1418
    %s1422 = scalar_lea.vmem [#allocation0], 1024
    %v1423 = vld [vmem:[%s1422] ss:$8 sm:$0xf]
    %s1424 = scalar_lea.vmem [#allocation0], 1024
    %v1425 = vld [vmem:[%s1424] ss:$8 sm:$0xf0]
    %vm1426 = vcmask 1047556
    %v1427 = vsel %vm1426, %v1425, %v1423
    %vm1428 = vcmask 64512
    %s1429 = scalar_lea.vmem %s1, 128
    %1430 = vst.msk [vmem:[%s1429] sm:$0xff] %vm1428, %v1427
    %s1431 = scalar_lea.vmem [#allocation0], 1088
    %v1432 = vld [vmem:[%s1431] ss:$8 sm:$0xf]
    %s1433 = scalar_lea.vmem [#allocation0], 1088
    %v1434 = vld [vmem:[%s1433] ss:$8 sm:$0xf0]
    %vm1435 = vcmask 1047556
    %v1436 = vsel %vm1435, %v1434, %v1432
    %vm1437 = vcmask 64512
    %s1438 = scalar_lea.vmem %s1, 136
    %1439 = vst.msk [vmem:[%s1438] sm:$0xff] %vm1437, %v1436
    %s1440 = scalar_lea.vmem [#allocation0], 1152
    %v1441 = vld [vmem:[%s1440] ss:$8 sm:$0xf]
    %s1442 = scalar_lea.vmem [#allocation0], 1152
    %v1443 = vld [vmem:[%s1442] ss:$8 sm:$0xf0]
    %vm1444 = vcmask 1047556
    %v1445 = vsel %vm1444, %v1443, %v1441
    %vm1446 = vcmask 64512
    %s1447 = scalar_lea.vmem %s1, 144
    %1448 = vst.msk [vmem:[%s1447] sm:$0xff] %vm1446, %v1445
    %s1449 = scalar_lea.vmem [#allocation0], 1216
    %v1450 = vld [vmem:[%s1449] ss:$8 sm:$0xf]
    %s1451 = scalar_lea.vmem [#allocation0], 1216
    %v1452 = vld [vmem:[%s1451] ss:$8 sm:$0xf0]
    %vm1453 = vcmask 1047556
    %v1454 = vsel %vm1453, %v1452, %v1450
    %vm1455 = vcmask 64512
    %s1456 = scalar_lea.vmem %s1, 152
    %1457 = vst.msk [vmem:[%s1456] sm:$0xff] %vm1455, %v1454
    %s1458 = scalar_lea.vmem [#allocation0], 1280
    %v1459 = vld [vmem:[%s1458] ss:$8 sm:$0xf]
    %s1460 = scalar_lea.vmem [#allocation0], 1280
    %v1461 = vld [vmem:[%s1460] ss:$8 sm:$0xf0]
    %vm1462 = vcmask 1047556
    %v1463 = vsel %vm1462, %v1461, %v1459
    %vm1464 = vcmask 64512
    %s1465 = scalar_lea.vmem %s1, 160
    %1466 = vst.msk [vmem:[%s1465] sm:$0xff] %vm1464, %v1463
    %s1467 = scalar_lea.vmem [#allocation0], 1344
    %v1468 = vld [vmem:[%s1467] ss:$8 sm:$0xf]
    %s1469 = scalar_lea.vmem [#allocation0], 1344
    %v1470 = vld [vmem:[%s1469] ss:$8 sm:$0xf0]
    %vm1471 = vcmask 1047556
    %v1472 = vsel %vm1471, %v1470, %v1468
    %vm1473 = vcmask 64512
    %s1474 = scalar_lea.vmem %s1, 168
    %1475 = vst.msk [vmem:[%s1474] sm:$0xff] %vm1473, %v1472
    %s1476 = scalar_lea.vmem [#allocation0], 1408
    %v1477 = vld [vmem:[%s1476] ss:$8 sm:$0xf]
    %s1478 = scalar_lea.vmem [#allocation0], 1408
    %v1479 = vld [vmem:[%s1478] ss:$8 sm:$0xf0]
    %vm1480 = vcmask 1047556
    %v1481 = vsel %vm1480, %v1479, %v1477
    %vm1482 = vcmask 64512
    %s1483 = scalar_lea.vmem %s1, 176
    %1484 = vst.msk [vmem:[%s1483] sm:$0xff] %vm1482, %v1481
    %s1485 = scalar_lea.vmem [#allocation0], 1472
    %v1486 = vld [vmem:[%s1485] ss:$8 sm:$0xf]
    %s1487 = scalar_lea.vmem [#allocation0], 1472
    %v1488 = vld [vmem:[%s1487] ss:$8 sm:$0xf0]
    %vm1489 = vcmask 1047556
    %v1490 = vsel %vm1489, %v1488, %v1486
    %vm1491 = vcmask 64512
    %s1492 = scalar_lea.vmem %s1, 184
    %1493 = vst.msk [vmem:[%s1492] sm:$0xff] %vm1491, %v1490
    %s1494 = scalar_lea.vmem [#allocation0], 1536
    %v1495 = vld [vmem:[%s1494] ss:$8 sm:$0xf]
    %s1496 = scalar_lea.vmem [#allocation0], 1536
    %v1497 = vld [vmem:[%s1496] ss:$8 sm:$0xf0]
    %vm1498 = vcmask 1047556
    %v1499 = vsel %vm1498, %v1497, %v1495
    %vm1500 = vcmask 64512
    %s1501 = scalar_lea.vmem %s1, 192
    %1502 = vst.msk [vmem:[%s1501] sm:$0xff] %vm1500, %v1499
    %s1503 = scalar_lea.vmem [#allocation0], 1600
    %v1504 = vld [vmem:[%s1503] ss:$8 sm:$0xf]
    %s1505 = scalar_lea.vmem [#allocation0], 1600
    %v1506 = vld [vmem:[%s1505] ss:$8 sm:$0xf0]
    %vm1507 = vcmask 1047556
    %v1508 = vsel %vm1507, %v1506, %v1504
    %vm1509 = vcmask 64512
    %s1510 = scalar_lea.vmem %s1, 200
    %1511 = vst.msk [vmem:[%s1510] sm:$0xff] %vm1509, %v1508
    %s1512 = scalar_lea.vmem [#allocation0], 1664
    %v1513 = vld [vmem:[%s1512] ss:$8 sm:$0xf]
    %s1514 = scalar_lea.vmem [#allocation0], 1664
    %v1515 = vld [vmem:[%s1514] ss:$8 sm:$0xf0]
    %vm1516 = vcmask 1047556
    %v1517 = vsel %vm1516, %v1515, %v1513
    %vm1518 = vcmask 64512
    %s1519 = scalar_lea.vmem %s1, 208
    %1520 = vst.msk [vmem:[%s1519] sm:$0xff] %vm1518, %v1517
    %s1521 = scalar_lea.vmem [#allocation0], 1728
    %v1522 = vld [vmem:[%s1521] ss:$8 sm:$0xf]
    %s1523 = scalar_lea.vmem [#allocation0], 1728
    %v1524 = vld [vmem:[%s1523] ss:$8 sm:$0xf0]
    %vm1525 = vcmask 1047556
    %v1526 = vsel %vm1525, %v1524, %v1522
    %vm1527 = vcmask 64512
    %s1528 = scalar_lea.vmem %s1, 216
    %1529 = vst.msk [vmem:[%s1528] sm:$0xff] %vm1527, %v1526
    %s1530 = scalar_lea.vmem [#allocation0], 1792
    %v1531 = vld [vmem:[%s1530] ss:$8 sm:$0xf]
    %s1532 = scalar_lea.vmem [#allocation0], 1792
    %v1533 = vld [vmem:[%s1532] ss:$8 sm:$0xf0]
    %vm1534 = vcmask 1047556
    %v1535 = vsel %vm1534, %v1533, %v1531
    %vm1536 = vcmask 64512
    %s1537 = scalar_lea.vmem %s1, 224
    %1538 = vst.msk [vmem:[%s1537] sm:$0xff] %vm1536, %v1535
    %s1539 = scalar_lea.vmem [#allocation0], 1856
    %v1540 = vld [vmem:[%s1539] ss:$8 sm:$0xf]
    %s1541 = scalar_lea.vmem [#allocation0], 1856
    %v1542 = vld [vmem:[%s1541] ss:$8 sm:$0xf0]
    %vm1543 = vcmask 1047556
    %v1544 = vsel %vm1543, %v1542, %v1540
    %vm1545 = vcmask 64512
    %s1546 = scalar_lea.vmem %s1, 232
    %1547 = vst.msk [vmem:[%s1546] sm:$0xff] %vm1545, %v1544
    %s1548 = scalar_lea.vmem [#allocation0], 1920
    %v1549 = vld [vmem:[%s1548] ss:$8 sm:$0xf]
    %s1550 = scalar_lea.vmem [#allocation0], 1920
    %v1551 = vld [vmem:[%s1550] ss:$8 sm:$0xf0]
    %vm1552 = vcmask 1047556
    %v1553 = vsel %vm1552, %v1551, %v1549
    %vm1554 = vcmask 64512
    %s1555 = scalar_lea.vmem %s1, 240
    %1556 = vst.msk [vmem:[%s1555] sm:$0xff] %vm1554, %v1553
    %s1557 = scalar_lea.vmem [#allocation0], 1984
    %v1558 = vld [vmem:[%s1557] ss:$8 sm:$0xf]
    %s1559 = scalar_lea.vmem [#allocation0], 1984
    %v1560 = vld [vmem:[%s1559] ss:$8 sm:$0xf0]
    %vm1561 = vcmask 1047556
    %v1562 = vsel %vm1561, %v1560, %v1558
    %vm1563 = vcmask 64512
    %s1564 = scalar_lea.vmem %s1, 248
    %1565 = vst.msk [vmem:[%s1564] sm:$0xff] %vm1563, %v1562
    %s1566 = scalar_lea.vmem [#allocation0], 1
    %v1567 = vld [vmem:[%s1566] ss:$8 sm:$0xf]
    %s1568 = scalar_lea.vmem [#allocation0], 1
    %v1569 = vld [vmem:[%s1568] ss:$8 sm:$0xf0]
    %vm1570 = vcmask 1047556
    %v1571 = vsel %vm1570, %v1569, %v1567
    %1572 = vrot.lane.b32.xlu0 %v1571, 8
    %v1573 = vpop.permute.xlu0 %1572
    %vm1574 = vcmask 130112
    %1575 = vst.msk [vmem:[%s1] sm:$0xff] %vm1574, %v1573
    %s1576 = scalar_lea.vmem [#allocation0], 257
    %v1577 = vld [vmem:[%s1576] ss:$8 sm:$0xf]
    %s1578 = scalar_lea.vmem [#allocation0], 257
    %v1579 = vld [vmem:[%s1578] ss:$8 sm:$0xf0]
    %vm1580 = vcmask 1047556
    %v1581 = vsel %vm1580, %v1579, %v1577
    %1582 = vrot.lane.b32.xlu0 %v1581, 8
    %v1583 = vpop.permute.xlu0 %1582
    %vm1584 = vcmask 130112
    %s1585 = scalar_lea.vmem %s1, 32
    %1586 = vst.msk [vmem:[%s1585] sm:$0xff] %vm1584, %v1583
    %s1587 = scalar_lea.vmem [#allocation0], 513
    %v1588 = vld [vmem:[%s1587] ss:$8 sm:$0xf]
    %s1589 = scalar_lea.vmem [#allocation0], 513
    %v1590 = vld [vmem:[%s1589] ss:$8 sm:$0xf0]
    %vm1591 = vcmask 1047556
    %v1592 = vsel %vm1591, %v1590, %v1588
    %1593 = vrot.lane.b32.xlu0 %v1592, 8
    %v1594 = vpop.permute.xlu0 %1593
    %vm1595 = vcmask 130112
    %s1596 = scalar_lea.vmem %s1, 64
    %1597 = vst.msk [vmem:[%s1596] sm:$0xff] %vm1595, %v1594
    %s1598 = scalar_lea.vmem [#allocation0], 769
    %v1599 = vld [vmem:[%s1598] ss:$8 sm:$0xf]
    %s1600 = scalar_lea.vmem [#allocation0], 769
    %v1601 = vld [vmem:[%s1600] ss:$8 sm:$0xf0]
    %vm1602 = vcmask 1047556
    %v1603 = vsel %vm1602, %v1601, %v1599
    %1604 = vrot.lane.b32.xlu0 %v1603, 8
    %v1605 = vpop.permute.xlu0 %1604
    %vm1606 = vcmask 130112
    %s1607 = scalar_lea.vmem %s1, 96
    %1608 = vst.msk [vmem:[%s1607] sm:$0xff] %vm1606, %v1605
    %s1609 = scalar_lea.vmem [#allocation0], 1025
    %v1610 = vld [vmem:[%s1609] ss:$8 sm:$0xf]
    %s1611 = scalar_lea.vmem [#allocation0], 1025
    %v1612 = vld [vmem:[%s1611] ss:$8 sm:$0xf0]
    %vm1613 = vcmask 1047556
    %v1614 = vsel %vm1613, %v1612, %v1610
    %1615 = vrot.lane.b32.xlu0 %v1614, 8
    %v1616 = vpop.permute.xlu0 %1615
    %vm1617 = vcmask 130112
    %s1618 = scalar_lea.vmem %s1, 128
    %1619 = vst.msk [vmem:[%s1618] sm:$0xff] %vm1617, %v1616
    %s1620 = scalar_lea.vmem [#allocation0], 1281
    %v1621 = vld [vmem:[%s1620] ss:$8 sm:$0xf]
    %s1622 = scalar_lea.vmem [#allocation0], 1281
    %v1623 = vld [vmem:[%s1622] ss:$8 sm:$0xf0]
    %vm1624 = vcmask 1047556
    %v1625 = vsel %vm1624, %v1623, %v1621
    %1626 = vrot.lane.b32.xlu0 %v1625, 8
    %v1627 = vpop.permute.xlu0 %1626
    %vm1628 = vcmask 130112
    %s1629 = scalar_lea.vmem %s1, 160
    %1630 = vst.msk [vmem:[%s1629] sm:$0xff] %vm1628, %v1627
    %s1631 = scalar_lea.vmem [#allocation0], 1537
    %v1632 = vld [vmem:[%s1631] ss:$8 sm:$0xf]
    %s1633 = scalar_lea.vmem [#allocation0], 1537
    %v1634 = vld [vmem:[%s1633] ss:$8 sm:$0xf0]
    %vm1635 = vcmask 1047556
    %v1636 = vsel %vm1635, %v1634, %v1632
    %1637 = vrot.lane.b32.xlu0 %v1636, 8
    %v1638 = vpop.permute.xlu0 %1637
    %vm1639 = vcmask 130112
    %s1640 = scalar_lea.vmem %s1, 192
    %1641 = vst.msk [vmem:[%s1640] sm:$0xff] %vm1639, %v1638
    %s1642 = scalar_lea.vmem [#allocation0], 1793
    %v1643 = vld [vmem:[%s1642] ss:$8 sm:$0xf]
    %s1644 = scalar_lea.vmem [#allocation0], 1793
    %v1645 = vld [vmem:[%s1644] ss:$8 sm:$0xf0]
    %vm1646 = vcmask 1047556
    %v1647 = vsel %vm1646, %v1645, %v1643
    %1648 = vrot.lane.b32.xlu0 %v1647, 8
    %v1649 = vpop.permute.xlu0 %1648
    %vm1650 = vcmask 130112
    %s1651 = scalar_lea.vmem %s1, 224
    %1652 = vst.msk [vmem:[%s1651] sm:$0xff] %vm1650, %v1649
    %s1653 = scalar_lea.vmem [#allocation0], 65
    %v1654 = vld [vmem:[%s1653] ss:$8 sm:$0xf]
    %s1655 = scalar_lea.vmem [#allocation0], 65
    %v1656 = vld [vmem:[%s1655] ss:$8 sm:$0xf0]
    %vm1657 = vcmask 1047556
    %v1658 = vsel %vm1657, %v1656, %v1654
    %1659 = vrot.lane.b32.xlu0 %v1658, 8
    %v1660 = vpop.permute.xlu0 %1659
    %vm1661 = vcmask 130112
    %s1662 = scalar_lea.vmem %s1, 8
    %1663 = vst.msk [vmem:[%s1662] sm:$0xff] %vm1661, %v1660
    %s1664 = scalar_lea.vmem [#allocation0], 321
    %v1665 = vld [vmem:[%s1664] ss:$8 sm:$0xf]
    %s1666 = scalar_lea.vmem [#allocation0], 321
    %v1667 = vld [vmem:[%s1666] ss:$8 sm:$0xf0]
    %vm1668 = vcmask 1047556
    %v1669 = vsel %vm1668, %v1667, %v1665
    %1670 = vrot.lane.b32.xlu0 %v1669, 8
    %v1671 = vpop.permute.xlu0 %1670
    %vm1672 = vcmask 130112
    %s1673 = scalar_lea.vmem %s1, 40
    %1674 = vst.msk [vmem:[%s1673] sm:$0xff] %vm1672, %v1671
    %s1675 = scalar_lea.vmem [#allocation0], 577
    %v1676 = vld [vmem:[%s1675] ss:$8 sm:$0xf]
    %s1677 = scalar_lea.vmem [#allocation0], 577
    %v1678 = vld [vmem:[%s1677] ss:$8 sm:$0xf0]
    %vm1679 = vcmask 1047556
    %v1680 = vsel %vm1679, %v1678, %v1676
    %1681 = vrot.lane.b32.xlu0 %v1680, 8
    %v1682 = vpop.permute.xlu0 %1681
    %vm1683 = vcmask 130112
    %s1684 = scalar_lea.vmem %s1, 72
    %1685 = vst.msk [vmem:[%s1684] sm:$0xff] %vm1683, %v1682
    %s1686 = scalar_lea.vmem [#allocation0], 833
    %v1687 = vld [vmem:[%s1686] ss:$8 sm:$0xf]
    %s1688 = scalar_lea.vmem [#allocation0], 833
    %v1689 = vld [vmem:[%s1688] ss:$8 sm:$0xf0]
    %vm1690 = vcmask 1047556
    %v1691 = vsel %vm1690, %v1689, %v1687
    %1692 = vrot.lane.b32.xlu0 %v1691, 8
    %v1693 = vpop.permute.xlu0 %1692
    %vm1694 = vcmask 130112
    %s1695 = scalar_lea.vmem %s1, 104
    %1696 = vst.msk [vmem:[%s1695] sm:$0xff] %vm1694, %v1693
    %s1697 = scalar_lea.vmem [#allocation0], 1089
    %v1698 = vld [vmem:[%s1697] ss:$8 sm:$0xf]
    %s1699 = scalar_lea.vmem [#allocation0], 1089
    %v1700 = vld [vmem:[%s1699] ss:$8 sm:$0xf0]
    %vm1701 = vcmask 1047556
    %v1702 = vsel %vm1701, %v1700, %v1698
    %1703 = vrot.lane.b32.xlu0 %v1702, 8
    %v1704 = vpop.permute.xlu0 %1703
    %vm1705 = vcmask 130112
    %s1706 = scalar_lea.vmem %s1, 136
    %1707 = vst.msk [vmem:[%s1706] sm:$0xff] %vm1705, %v1704
    %s1708 = scalar_lea.vmem [#allocation0], 1345
    %v1709 = vld [vmem:[%s1708] ss:$8 sm:$0xf]
    %s1710 = scalar_lea.vmem [#allocation0], 1345
    %v1711 = vld [vmem:[%s1710] ss:$8 sm:$0xf0]
    %vm1712 = vcmask 1047556
    %v1713 = vsel %vm1712, %v1711, %v1709
    %1714 = vrot.lane.b32.xlu0 %v1713, 8
    %v1715 = vpop.permute.xlu0 %1714
    %vm1716 = vcmask 130112
    %s1717 = scalar_lea.vmem %s1, 168
    %1718 = vst.msk [vmem:[%s1717] sm:$0xff] %vm1716, %v1715
    %s1719 = scalar_lea.vmem [#allocation0], 1601
    %v1720 = vld [vmem:[%s1719] ss:$8 sm:$0xf]
    %s1721 = scalar_lea.vmem [#allocation0], 1601
    %v1722 = vld [vmem:[%s1721] ss:$8 sm:$0xf0]
    %vm1723 = vcmask 1047556
    %v1724 = vsel %vm1723, %v1722, %v1720
    %1725 = vrot.lane.b32.xlu0 %v1724, 8
    %v1726 = vpop.permute.xlu0 %1725
    %vm1727 = vcmask 130112
    %s1728 = scalar_lea.vmem %s1, 200
    %1729 = vst.msk [vmem:[%s1728] sm:$0xff] %vm1727, %v1726
    %s1730 = scalar_lea.vmem [#allocation0], 1857
    %v1731 = vld [vmem:[%s1730] ss:$8 sm:$0xf]
    %s1732 = scalar_lea.vmem [#allocation0], 1857
    %v1733 = vld [vmem:[%s1732] ss:$8 sm:$0xf0]
    %vm1734 = vcmask 1047556
    %v1735 = vsel %vm1734, %v1733, %v1731
    %1736 = vrot.lane.b32.xlu0 %v1735, 8
    %v1737 = vpop.permute.xlu0 %1736
    %vm1738 = vcmask 130112
    %s1739 = scalar_lea.vmem %s1, 232
    %1740 = vst.msk [vmem:[%s1739] sm:$0xff] %vm1738, %v1737
    %s1741 = scalar_lea.vmem [#allocation0], 129
    %v1742 = vld [vmem:[%s1741] ss:$8 sm:$0xf]
    %s1743 = scalar_lea.vmem [#allocation0], 129
    %v1744 = vld [vmem:[%s1743] ss:$8 sm:$0xf0]
    %vm1745 = vcmask 1047556
    %v1746 = vsel %vm1745, %v1744, %v1742
    %1747 = vrot.lane.b32.xlu0 %v1746, 8
    %v1748 = vpop.permute.xlu0 %1747
    %vm1749 = vcmask 130112
    %s1750 = scalar_lea.vmem %s1, 16
    %1751 = vst.msk [vmem:[%s1750] sm:$0xff] %vm1749, %v1748
    %s1752 = scalar_lea.vmem [#allocation0], 385
    %v1753 = vld [vmem:[%s1752] ss:$8 sm:$0xf]
    %s1754 = scalar_lea.vmem [#allocation0], 385
    %v1755 = vld [vmem:[%s1754] ss:$8 sm:$0xf0]
    %vm1756 = vcmask 1047556
    %v1757 = vsel %vm1756, %v1755, %v1753
    %1758 = vrot.lane.b32.xlu0 %v1757, 8
    %v1759 = vpop.permute.xlu0 %1758
    %vm1760 = vcmask 130112
    %s1761 = scalar_lea.vmem %s1, 48
    %1762 = vst.msk [vmem:[%s1761] sm:$0xff] %vm1760, %v1759
    %s1763 = scalar_lea.vmem [#allocation0], 641
    %v1764 = vld [vmem:[%s1763] ss:$8 sm:$0xf]
    %s1765 = scalar_lea.vmem [#allocation0], 641
    %v1766 = vld [vmem:[%s1765] ss:$8 sm:$0xf0]
    %vm1767 = vcmask 1047556
    %v1768 = vsel %vm1767, %v1766, %v1764
    %1769 = vrot.lane.b32.xlu0 %v1768, 8
    %v1770 = vpop.permute.xlu0 %1769
    %vm1771 = vcmask 130112
    %s1772 = scalar_lea.vmem %s1, 80
    %1773 = vst.msk [vmem:[%s1772] sm:$0xff] %vm1771, %v1770
    %s1774 = scalar_lea.vmem [#allocation0], 897
    %v1775 = vld [vmem:[%s1774] ss:$8 sm:$0xf]
    %s1776 = scalar_lea.vmem [#allocation0], 897
    %v1777 = vld [vmem:[%s1776] ss:$8 sm:$0xf0]
    %vm1778 = vcmask 1047556
    %v1779 = vsel %vm1778, %v1777, %v1775
    %1780 = vrot.lane.b32.xlu0 %v1779, 8
    %v1781 = vpop.permute.xlu0 %1780
    %vm1782 = vcmask 130112
    %s1783 = scalar_lea.vmem %s1, 112
    %1784 = vst.msk [vmem:[%s1783] sm:$0xff] %vm1782, %v1781
    %s1785 = scalar_lea.vmem [#allocation0], 1153
    %v1786 = vld [vmem:[%s1785] ss:$8 sm:$0xf]
    %s1787 = scalar_lea.vmem [#allocation0], 1153
    %v1788 = vld [vmem:[%s1787] ss:$8 sm:$0xf0]
    %vm1789 = vcmask 1047556
    %v1790 = vsel %vm1789, %v1788, %v1786
    %1791 = vrot.lane.b32.xlu0 %v1790, 8
    %v1792 = vpop.permute.xlu0 %1791
    %vm1793 = vcmask 130112
    %s1794 = scalar_lea.vmem %s1, 144
    %1795 = vst.msk [vmem:[%s1794] sm:$0xff] %vm1793, %v1792
    %s1796 = scalar_lea.vmem [#allocation0], 1409
    %v1797 = vld [vmem:[%s1796] ss:$8 sm:$0xf]
    %s1798 = scalar_lea.vmem [#allocation0], 1409
    %v1799 = vld [vmem:[%s1798] ss:$8 sm:$0xf0]
    %vm1800 = vcmask 1047556
    %v1801 = vsel %vm1800, %v1799, %v1797
    %1802 = vrot.lane.b32.xlu0 %v1801, 8
    %v1803 = vpop.permute.xlu0 %1802
    %vm1804 = vcmask 130112
    %s1805 = scalar_lea.vmem %s1, 176
    %1806 = vst.msk [vmem:[%s1805] sm:$0xff] %vm1804, %v1803
    %s1807 = scalar_lea.vmem [#allocation0], 1665
    %v1808 = vld [vmem:[%s1807] ss:$8 sm:$0xf]
    %s1809 = scalar_lea.vmem [#allocation0], 1665
    %v1810 = vld [vmem:[%s1809] ss:$8 sm:$0xf0]
    %vm1811 = vcmask 1047556
    %v1812 = vsel %vm1811, %v1810, %v1808
    %1813 = vrot.lane.b32.xlu0 %v1812, 8
    %v1814 = vpop.permute.xlu0 %1813
    %vm1815 = vcmask 130112
    %s1816 = scalar_lea.vmem %s1, 208
    %1817 = vst.msk [vmem:[%s1816] sm:$0xff] %vm1815, %v1814
    %s1818 = scalar_lea.vmem [#allocation0], 1921
    %v1819 = vld [vmem:[%s1818] ss:$8 sm:$0xf]
    %s1820 = scalar_lea.vmem [#allocation0], 1921
    %v1821 = vld [vmem:[%s1820] ss:$8 sm:$0xf0]
    %vm1822 = vcmask 1047556
    %v1823 = vsel %vm1822, %v1821, %v1819
    %1824 = vrot.lane.b32.xlu0 %v1823, 8
    %v1825 = vpop.permute.xlu0 %1824
    %vm1826 = vcmask 130112
    %s1827 = scalar_lea.vmem %s1, 240
    %1828 = vst.msk [vmem:[%s1827] sm:$0xff] %vm1826, %v1825
    %s1829 = scalar_lea.vmem [#allocation0], 193
    %v1830 = vld [vmem:[%s1829] ss:$8 sm:$0xf]
    %s1831 = scalar_lea.vmem [#allocation0], 193
    %v1832 = vld [vmem:[%s1831] ss:$8 sm:$0xf0]
    %vm1833 = vcmask 1047556
    %v1834 = vsel %vm1833, %v1832, %v1830
    %1835 = vrot.lane.b32.xlu0 %v1834, 8
    %v1836 = vpop.permute.xlu0 %1835
    %vm1837 = vcmask 130112
    %s1838 = scalar_lea.vmem %s1, 24
    %1839 = vst.msk [vmem:[%s1838] sm:$0xff] %vm1837, %v1836
    %s1840 = scalar_lea.vmem [#allocation0], 449
    %v1841 = vld [vmem:[%s1840] ss:$8 sm:$0xf]
    %s1842 = scalar_lea.vmem [#allocation0], 449
    %v1843 = vld [vmem:[%s1842] ss:$8 sm:$0xf0]
    %vm1844 = vcmask 1047556
    %v1845 = vsel %vm1844, %v1843, %v1841
    %1846 = vrot.lane.b32.xlu0 %v1845, 8
    %v1847 = vpop.permute.xlu0 %1846
    %vm1848 = vcmask 130112
    %s1849 = scalar_lea.vmem %s1, 56
    %1850 = vst.msk [vmem:[%s1849] sm:$0xff] %vm1848, %v1847
    %s1851 = scalar_lea.vmem [#allocation0], 705
    %v1852 = vld [vmem:[%s1851] ss:$8 sm:$0xf]
    %s1853 = scalar_lea.vmem [#allocation0], 705
    %v1854 = vld [vmem:[%s1853] ss:$8 sm:$0xf0]
    %vm1855 = vcmask 1047556
    %v1856 = vsel %vm1855, %v1854, %v1852
    %1857 = vrot.lane.b32.xlu0 %v1856, 8
    %v1858 = vpop.permute.xlu0 %1857
    %vm1859 = vcmask 130112
    %s1860 = scalar_lea.vmem %s1, 88
    %1861 = vst.msk [vmem:[%s1860] sm:$0xff] %vm1859, %v1858
    %s1862 = scalar_lea.vmem [#allocation0], 961
    %v1863 = vld [vmem:[%s1862] ss:$8 sm:$0xf]
    %s1864 = scalar_lea.vmem [#allocation0], 961
    %v1865 = vld [vmem:[%s1864] ss:$8 sm:$0xf0]
    %vm1866 = vcmask 1047556
    %v1867 = vsel %vm1866, %v1865, %v1863
    %1868 = vrot.lane.b32.xlu0 %v1867, 8
    %v1869 = vpop.permute.xlu0 %1868
    %vm1870 = vcmask 130112
    %s1871 = scalar_lea.vmem %s1, 120
    %1872 = vst.msk [vmem:[%s1871] sm:$0xff] %vm1870, %v1869
    %s1873 = scalar_lea.vmem [#allocation0], 1217
    %v1874 = vld [vmem:[%s1873] ss:$8 sm:$0xf]
    %s1875 = scalar_lea.vmem [#allocation0], 1217
    %v1876 = vld [vmem:[%s1875] ss:$8 sm:$0xf0]
    %vm1877 = vcmask 1047556
    %v1878 = vsel %vm1877, %v1876, %v1874
    %1879 = vrot.lane.b32.xlu0 %v1878, 8
    %v1880 = vpop.permute.xlu0 %1879
    %vm1881 = vcmask 130112
    %s1882 = scalar_lea.vmem %s1, 152
    %1883 = vst.msk [vmem:[%s1882] sm:$0xff] %vm1881, %v1880
    %s1884 = scalar_lea.vmem [#allocation0], 1473
    %v1885 = vld [vmem:[%s1884] ss:$8 sm:$0xf]
    %s1886 = scalar_lea.vmem [#allocation0], 1473
    %v1887 = vld [vmem:[%s1886] ss:$8 sm:$0xf0]
    %vm1888 = vcmask 1047556
    %v1889 = vsel %vm1888, %v1887, %v1885
    %1890 = vrot.lane.b32.xlu0 %v1889, 8
    %v1891 = vpop.permute.xlu0 %1890
    %vm1892 = vcmask 130112
    %s1893 = scalar_lea.vmem %s1, 184
    %1894 = vst.msk [vmem:[%s1893] sm:$0xff] %vm1892, %v1891
    %s1895 = scalar_lea.vmem [#allocation0], 1729
    %v1896 = vld [vmem:[%s1895] ss:$8 sm:$0xf]
    %s1897 = scalar_lea.vmem [#allocation0], 1729
    %v1898 = vld [vmem:[%s1897] ss:$8 sm:$0xf0]
    %vm1899 = vcmask 1047556
    %v1900 = vsel %vm1899, %v1898, %v1896
    %1901 = vrot.lane.b32.xlu0 %v1900, 8
    %v1902 = vpop.permute.xlu0 %1901
    %vm1903 = vcmask 130112
    %s1904 = scalar_lea.vmem %s1, 216
    %1905 = vst.msk [vmem:[%s1904] sm:$0xff] %vm1903, %v1902
    %s1906 = scalar_lea.vmem [#allocation0], 1985
    %v1907 = vld [vmem:[%s1906] ss:$8 sm:$0xf]
    %s1908 = scalar_lea.vmem [#allocation0], 1985
    %v1909 = vld [vmem:[%s1908] ss:$8 sm:$0xf0]
    %vm1910 = vcmask 1047556
    %v1911 = vsel %vm1910, %v1909, %v1907
    %1912 = vrot.lane.b32.xlu0 %v1911, 8
    %v1913 = vpop.permute.xlu0 %1912
    %vm1914 = vcmask 130112
    %s1915 = scalar_lea.vmem %s1, 248
    %1916 = vst.msk [vmem:[%s1915] sm:$0xff] %vm1914, %v1913

// kernel: bare_conv_forward.1
$region0: #{bare_conv_forward.1}
  #allocation0 [shape = 'u32[]', space=smem, size = 0x4, offset = 0x4, fixed_abs, tag = 'smem constant byte address 0x4 - core index']
  #allocation1 [shape = 'u32[144,128]{1,0:T(1,128)}', space=vmem, size = 0x12000, scoped, tag = 'internal scratch']
  %s0 = inlined_call_operand.vmem [shape: f32[6], index: 0, kind: input, shape index: {}]
  %s1 = inlined_call_operand.vmem [shape: bf16[16,1200], index: 1, kind: input, shape index: {}]
  %s2 = inlined_call_operand.vmem [shape: bf16[1200,768], index: 2, kind: input, shape index: {}]
  %s3 = inlined_call_operand.vmem [shape: f32[16,256], index: 3, kind: input, shape index: {}]
  %s4 = inlined_call_operand.vmem [shape: f32[16,256], index: 4, kind: output, shape index: {}]
  %s5 = sld [smem:[#allocation0]]
  $region30: #{bare_conv_forward.1} parent=0
    _
  %s7 = ssub.s32 1, %s5
  %s8 = scalar_select 0, %s7, %s5
  $region1: #{bare_conv_forward.1} parent=0
    #allocation2 [shape = 'u8[512]{0}', space=smem, size = 0x200, scoped, tag = 'input window, operand 0, single buffered']
    #allocation3 [shape = 's32[1]{0}', space=sflag, size = 0x4, scoped, tag = 'scoped memory for bare_conv_forward.1']
    %9 = vsyncpa [#allocation3], 0
    // Predicated region
    $region2: #{bare_conv_forward.1} parent=1 // pred_check
      _
    $region3: #{bare_conv_forward.1} parent=1 // pred_check_branch
      %11 = sbr.rel (0) target = $region5
    $region4: #{bare_conv_forward.1} parent=1 // pred_region
      %s13 = ssub.s32 16, 16
      %14 = vsyncadd [#allocation3], %s13
      %s16 = sshll.u32 %s0, 4
      %s17 = int_to_ptr.vmem [resolvable:$true] %s16
      %19 = dma.vmem_to_smem %s17, 16, [#allocation2], [#allocation3]
    $region5: #{bare_conv_forward.1} parent=1 // pred_fallthru
      _
    // Predicated region
    $region6: #{bare_conv_forward.1} parent=1 // pred_check
      _
    $region7: #{bare_conv_forward.1} parent=1 // pred_check_branch
      %21 = sbr.rel (0) target = $region9
    $region8: #{bare_conv_forward.1} parent=1 // pred_region
      _
    $region9: #{bare_conv_forward.1} parent=1 // pred_fallthru
      _
    // Predicated region
    $region10: #{bare_conv_forward.1} parent=1 // pred_check
      _
    $region11: #{bare_conv_forward.1} parent=1 // pred_check_branch
      %23 = sbr.rel (0) target = $region13
    $region12: #{bare_conv_forward.1} parent=1 // pred_region
      _
    $region13: #{bare_conv_forward.1} parent=1 // pred_fallthru
      _
    // Predicated region
    $region14: #{bare_conv_forward.1} parent=1 // pred_check
      _
    $region15: #{bare_conv_forward.1} parent=1 // pred_check_branch
      %25 = sbr.rel (0) target = $region17
    $region16: #{bare_conv_forward.1} parent=1 // pred_region
      _
    $region17: #{bare_conv_forward.1} parent=1 // pred_fallthru
      _
    // Predicated region
    $region18: #{bare_conv_forward.1} parent=1 // pred_check
      _
    $region19: #{bare_conv_forward.1} parent=1 // pred_check_branch
      %27 = sbr.rel (0) target = $region21
    $region20: #{bare_conv_forward.1} parent=1 // pred_region
      %28 = dma.done [#allocation3], 16
    $region21: #{bare_conv_forward.1} parent=1 // pred_fallthru
      _
    %29 = sfence
    %v31 = vld [vmem:[%s1] sm:$0xff]
    %v32 = vld [vmem:[%s1 + $0x8] sm:$0xff]
    %v33 = vld [vmem:[%s1 + $0x10] sm:$0xff]
    %v34 = vld [vmem:[%s1 + $0x18] sm:$0xff]
    %v35 = vld [vmem:[%s1 + $0x20] sm:$0xff]
    %v36 = vld [vmem:[%s1 + $0x28] sm:$0xff]
    %v37 = vld [vmem:[%s1 + $0x30] sm:$0xff]
    %v38 = vld [vmem:[%s1 + $0x38] sm:$0xff]
    %v39 = vld [vmem:[%s1 + $0x40] sm:$0xff]
    %v40 = vld [vmem:[%s1 + $0x48] sm:$0xff]
    %v41 = vld [vmem:[%s2] sm:$0xff]
    %v42 = vld [vmem:[%s2 + $0x8] sm:$0xff]
    %v43 = vld [vmem:[%s2 + $0x10] sm:$0xff]
    %v44 = vld [vmem:[%s2 + $0x18] sm:$0xff]
    %v45 = vld [vmem:[%s2 + $0x20] sm:$0xff]
    %v46 = vld [vmem:[%s2 + $0x28] sm:$0xff]
    %v47 = vld [vmem:[%s2 + $0x30] sm:$0xff]
    %v48 = vld [vmem:[%s2 + $0x38] sm:$0xff]
    %v49 = vld [vmem:[%s2 + $0x40] sm:$0xff]
    %v50 = vld [vmem:[%s2 + $0x48] sm:$0xff]
    %v51 = vld [vmem:[%s2 + $0x50] sm:$0xff]
    %v52 = vld [vmem:[%s2 + $0x58] sm:$0xff]
    %v53 = vld [vmem:[%s2 + $0x60] sm:$0xff]
    %v54 = vld [vmem:[%s2 + $0x68] sm:$0xff]
    %v55 = vld [vmem:[%s2 + $0x70] sm:$0xff]
    %v56 = vld [vmem:[%s2 + $0x78] sm:$0xff]
    %v57 = vld [vmem:[%s2 + $0x80] sm:$0xff]
    %v58 = vld [vmem:[%s2 + $0x88] sm:$0xff]
    %v59 = vld [vmem:[%s2 + $0x90] sm:$0xff]
    %v60 = vld [vmem:[%s2 + $0x98] sm:$0xff]
    %v61 = vld [vmem:[%s2 + $0xa0] sm:$0xff]
    %v62 = vld [vmem:[%s2 + $0xa8] sm:$0xff]
    %v63 = vld [vmem:[%s2 + $0xb0] sm:$0xff]
    %v64 = vld [vmem:[%s2 + $0xb8] sm:$0xff]
    %v65 = vld [vmem:[%s2 + $0xc0] sm:$0xff]
    %v66 = vld [vmem:[%s2 + $0xc8] sm:$0xff]
    %v67 = vld [vmem:[%s2 + $0xd0] sm:$0xff]
    %v68 = vld [vmem:[%s2 + $0xd8] sm:$0xff]
    %v69 = vld [vmem:[%s2 + $0xe0] sm:$0xff]
    %v70 = vld [vmem:[%s2 + $0xe8] sm:$0xff]
    %v71 = vld [vmem:[%s2 + $0xf0] sm:$0xff]
    %v72 = vld [vmem:[%s2 + $0xf8] sm:$0xff]
    %v73 = vld [vmem:[%s2 + $0x100] sm:$0xff]
    %v74 = vld [vmem:[%s2 + $0x108] sm:$0xff]
    %v75 = vld [vmem:[%s2 + $0x110] sm:$0xff]
    %v76 = vld [vmem:[%s2 + $0x118] sm:$0xff]
    %v77 = vld [vmem:[%s2 + $0x120] sm:$0xff]
    %v78 = vld [vmem:[%s2 + $0x128] sm:$0xff]
    %v79 = vld [vmem:[%s2 + $0x130] sm:$0xff]
    %v80 = vld [vmem:[%s2 + $0x138] sm:$0xff]
    %v81 = vld [vmem:[%s2 + $0x140] sm:$0xff]
    %v82 = vld [vmem:[%s2 + $0x148] sm:$0xff]
    %v83 = vld [vmem:[%s2 + $0x150] sm:$0xff]
    %v84 = vld [vmem:[%s2 + $0x158] sm:$0xff]
    %v85 = vld [vmem:[%s2 + $0x160] sm:$0xff]
    %v86 = vld [vmem:[%s2 + $0x168] sm:$0xff]
    %v87 = vld [vmem:[%s2 + $0x170] sm:$0xff]
    %v88 = vld [vmem:[%s2 + $0x178] sm:$0xff]
    %v89 = vld [vmem:[%s2 + $0x180] sm:$0xff]
    %v90 = vld [vmem:[%s2 + $0x188] sm:$0xff]
    %v91 = vld [vmem:[%s2 + $0x190] sm:$0xff]
    %v92 = vld [vmem:[%s2 + $0x198] sm:$0xff]
    %v93 = vld [vmem:[%s2 + $0x1a0] sm:$0xff]
    %v94 = vld [vmem:[%s2 + $0x1a8] sm:$0xff]
    %v95 = vld [vmem:[%s2 + $0x1b0] sm:$0xff]
    %v96 = vld [vmem:[%s2 + $0x1b8] sm:$0xff]
    %v97 = vld [vmem:[%s2 + $0x1c0] sm:$0xff]
    %v98 = vld [vmem:[%s2 + $0x1c8] sm:$0xff]
    %v99 = vld [vmem:[%s2 + $0x1d0] sm:$0xff]
    %v100 = vld [vmem:[%s2 + $0x1d8] sm:$0xff]
    %v101 = vld [vmem:[%s2 + $0x1e0] sm:$0xff]
    %v102 = vld [vmem:[%s2 + $0x1e8] sm:$0xff]
    %v103 = vld [vmem:[%s2 + $0x1f0] sm:$0xff]
    %v104 = vld [vmem:[%s2 + $0x1f8] sm:$0xff]
    %v105 = vld [vmem:[%s2 + $0x200] sm:$0xff]
    %v106 = vld [vmem:[%s2 + $0x208] sm:$0xff]
    %v107 = vld [vmem:[%s2 + $0x210] sm:$0xff]
    %v108 = vld [vmem:[%s2 + $0x218] sm:$0xff]
    %v109 = vld [vmem:[%s2 + $0x220] sm:$0xff]
    %v110 = vld [vmem:[%s2 + $0x228] sm:$0xff]
    %v111 = vld [vmem:[%s2 + $0x230] sm:$0xff]
    %v112 = vld [vmem:[%s2 + $0x238] sm:$0xff]
    %v113 = vld [vmem:[%s2 + $0x240] sm:$0xff]
    %v114 = vld [vmem:[%s2 + $0x248] sm:$0xff]
    %v115 = vld [vmem:[%s2 + $0x250] sm:$0xff]
    %v116 = vld [vmem:[%s2 + $0x258] sm:$0xff]
    %v117 = vld [vmem:[%s2 + $0x260] sm:$0xff]
    %v118 = vld [vmem:[%s2 + $0x268] sm:$0xff]
    %v119 = vld [vmem:[%s2 + $0x270] sm:$0xff]
    %v120 = vld [vmem:[%s2 + $0x278] sm:$0xff]
    %v121 = vld [vmem:[%s2 + $0x280] sm:$0xff]
    %v122 = vld [vmem:[%s2 + $0x288] sm:$0xff]
    %v123 = vld [vmem:[%s2 + $0x290] sm:$0xff]
    %v124 = vld [vmem:[%s2 + $0x298] sm:$0xff]
    %v125 = vld [vmem:[%s2 + $0x2a0] sm:$0xff]
    %v126 = vld [vmem:[%s2 + $0x2a8] sm:$0xff]
    %v127 = vld [vmem:[%s2 + $0x2b0] sm:$0xff]
    %v128 = vld [vmem:[%s2 + $0x2b8] sm:$0xff]
    %v129 = vld [vmem:[%s2 + $0x2c0] sm:$0xff]
    %v130 = vld [vmem:[%s2 + $0x2c8] sm:$0xff]
    %v131 = vld [vmem:[%s2 + $0x2d0] sm:$0xff]
    %v132 = vld [vmem:[%s2 + $0x2d8] sm:$0xff]
    %v133 = vld [vmem:[%s2 + $0x2e0] sm:$0xff]
    %v134 = vld [vmem:[%s2 + $0x2e8] sm:$0xff]
    %v135 = vld [vmem:[%s2 + $0x2f0] sm:$0xff]
    %v136 = vld [vmem:[%s2 + $0x2f8] sm:$0xff]
    %v137 = vld [vmem:[%s2 + $0x300] sm:$0xff]
    %v138 = vld [vmem:[%s2 + $0x308] sm:$0xff]
    %v139 = vld [vmem:[%s2 + $0x310] sm:$0xff]
    %v140 = vld [vmem:[%s2 + $0x318] sm:$0xff]
    %v141 = vld [vmem:[%s2 + $0x320] sm:$0xff]
    %v142 = vld [vmem:[%s2 + $0x328] sm:$0xff]
    %v143 = vld [vmem:[%s2 + $0x330] sm:$0xff]
    %v144 = vld [vmem:[%s2 + $0x338] sm:$0xff]
    %v145 = vld [vmem:[%s2 + $0x340] sm:$0xff]
    %v146 = vld [vmem:[%s2 + $0x348] sm:$0xff]
    %v147 = vld [vmem:[%s2 + $0x350] sm:$0xff]
    %v148 = vld [vmem:[%s2 + $0x358] sm:$0xff]
    %v149 = vld [vmem:[%s2 + $0x360] sm:$0xff]
    %v150 = vld [vmem:[%s2 + $0x368] sm:$0xff]
    %v151 = vld [vmem:[%s2 + $0x370] sm:$0xff]
    %v152 = vld [vmem:[%s2 + $0x378] sm:$0xff]
    %v153 = vld [vmem:[%s2 + $0x380] sm:$0xff]
    %v154 = vld [vmem:[%s2 + $0x388] sm:$0xff]
    %v155 = vld [vmem:[%s2 + $0x390] sm:$0xff]
    %v156 = vld [vmem:[%s2 + $0x398] sm:$0xff]
    %v157 = vld [vmem:[%s2 + $0x3a0] sm:$0xff]
    %v158 = vld [vmem:[%s2 + $0x3a8] sm:$0xff]
    %v159 = vld [vmem:[%s2 + $0x3b0] sm:$0xff]
    %v160 = vld [vmem:[%s2 + $0x3b8] sm:$0xff]
    %v161 = vld [vmem:[%s2 + $0x3c0] sm:$0xff]
    %v162 = vld [vmem:[%s2 + $0x3c8] sm:$0xff]
    %v163 = vld [vmem:[%s2 + $0x3d0] sm:$0xff]
    %v164 = vld [vmem:[%s2 + $0x3d8] sm:$0xff]
    %v165 = vld [vmem:[%s2 + $0x3e0] sm:$0xff]
    %v166 = vld [vmem:[%s2 + $0x3e8] sm:$0xff]
    %v167 = vld [vmem:[%s2 + $0x3f0] sm:$0xff]
    %v168 = vld [vmem:[%s2 + $0x3f8] sm:$0xff]
    %v169 = vld [vmem:[%s2 + $0x400] sm:$0xff]
    %v170 = vld [vmem:[%s2 + $0x408] sm:$0xff]
    %v171 = vld [vmem:[%s2 + $0x410] sm:$0xff]
    %v172 = vld [vmem:[%s2 + $0x418] sm:$0xff]
    %v173 = vld [vmem:[%s2 + $0x420] sm:$0xff]
    %v174 = vld [vmem:[%s2 + $0x428] sm:$0xff]
    %v175 = vld [vmem:[%s2 + $0x430] sm:$0xff]
    %v176 = vld [vmem:[%s2 + $0x438] sm:$0xff]
    %v177 = vld [vmem:[%s2 + $0x440] sm:$0xff]
    %v178 = vld [vmem:[%s2 + $0x448] sm:$0xff]
    %v179 = vld [vmem:[%s2 + $0x450] sm:$0xff]
    %v180 = vld [vmem:[%s2 + $0x458] sm:$0xff]
    %v181 = vld [vmem:[%s2 + $0x460] sm:$0xff]
    %v182 = vld [vmem:[%s2 + $0x468] sm:$0xff]
    %v183 = vld [vmem:[%s2 + $0x470] sm:$0xff]
    %v184 = vld [vmem:[%s2 + $0x478] sm:$0xff]
    %v185 = vld [vmem:[%s2 + $0x480] sm:$0xff]
    %v186 = vld [vmem:[%s2 + $0x488] sm:$0xff]
    %v187 = vld [vmem:[%s2 + $0x490] sm:$0xff]
    %v188 = vld [vmem:[%s2 + $0x498] sm:$0xff]
    %v189 = vld [vmem:[%s2 + $0x4a0] sm:$0xff]
    %v190 = vld [vmem:[%s2 + $0x4a8] sm:$0xff]
    %v191 = vld [vmem:[%s2 + $0x4b0] sm:$0xff]
    %v192 = vld [vmem:[%s2 + $0x4b8] sm:$0xff]
    %v193 = vld [vmem:[%s2 + $0x4c0] sm:$0xff]
    %v194 = vld [vmem:[%s2 + $0x4c8] sm:$0xff]
    %v195 = vld [vmem:[%s2 + $0x4d0] sm:$0xff]
    %v196 = vld [vmem:[%s2 + $0x4d8] sm:$0xff]
    %v197 = vld [vmem:[%s2 + $0x4e0] sm:$0xff]
    %v198 = vld [vmem:[%s2 + $0x4e8] sm:$0xff]
    %v199 = vld [vmem:[%s2 + $0x4f0] sm:$0xff]
    %v200 = vld [vmem:[%s2 + $0x4f8] sm:$0xff]
    %v201 = vld [vmem:[%s2 + $0x500] sm:$0xff]
    %v202 = vld [vmem:[%s2 + $0x508] sm:$0xff]
    %v203 = vld [vmem:[%s2 + $0x510] sm:$0xff]
    %v204 = vld [vmem:[%s2 + $0x518] sm:$0xff]
    %v205 = vld [vmem:[%s2 + $0x520] sm:$0xff]
    %v206 = vld [vmem:[%s2 + $0x528] sm:$0xff]
    %v207 = vld [vmem:[%s2 + $0x530] sm:$0xff]
    %v208 = vld [vmem:[%s2 + $0x538] sm:$0xff]
    %v209 = vld [vmem:[%s2 + $0x540] sm:$0xff]
    %v210 = vld [vmem:[%s2 + $0x548] sm:$0xff]
    %v211 = vld [vmem:[%s2 + $0x550] sm:$0xff]
    %v212 = vld [vmem:[%s2 + $0x558] sm:$0xff]
    %v213 = vld [vmem:[%s2 + $0x560] sm:$0xff]
    %v214 = vld [vmem:[%s2 + $0x568] sm:$0xff]
    %v215 = vld [vmem:[%s2 + $0x570] sm:$0xff]
    %v216 = vld [vmem:[%s2 + $0x578] sm:$0xff]
    %v217 = vld [vmem:[%s2 + $0x580] sm:$0xff]
    %v218 = vld [vmem:[%s2 + $0x588] sm:$0xff]
    %v219 = vld [vmem:[%s2 + $0x590] sm:$0xff]
    %v220 = vld [vmem:[%s2 + $0x598] sm:$0xff]
    %v221 = vld [vmem:[%s2 + $0x5a0] sm:$0xff]
    %v222 = vld [vmem:[%s2 + $0x5a8] sm:$0xff]
    %v223 = vld [vmem:[%s2 + $0x5b0] sm:$0xff]
    %v224 = vld [vmem:[%s2 + $0x5b8] sm:$0xff]
    %v225 = vld [vmem:[%s2 + $0x5c0] sm:$0xff]
    %v226 = vld [vmem:[%s2 + $0x5c8] sm:$0xff]
    %v227 = vld [vmem:[%s2 + $0x5d0] sm:$0xff]
    %v228 = vld [vmem:[%s2 + $0x5d8] sm:$0xff]
    %v229 = vld [vmem:[%s2 + $0x5e0] sm:$0xff]
    %v230 = vld [vmem:[%s2 + $0x5e8] sm:$0xff]
    %v231 = vld [vmem:[%s2 + $0x5f0] sm:$0xff]
    %v232 = vld [vmem:[%s2 + $0x5f8] sm:$0xff]
    %v233 = vld [vmem:[%s2 + $0x600] sm:$0xff]
    %v234 = vld [vmem:[%s2 + $0x608] sm:$0xff]
    %v235 = vld [vmem:[%s2 + $0x610] sm:$0xff]
    %v236 = vld [vmem:[%s2 + $0x618] sm:$0xff]
    %v237 = vld [vmem:[%s2 + $0x620] sm:$0xff]
    %v238 = vld [vmem:[%s2 + $0x628] sm:$0xff]
    %v239 = vld [vmem:[%s2 + $0x630] sm:$0xff]
    %v240 = vld [vmem:[%s2 + $0x638] sm:$0xff]
    %v241 = vld [vmem:[%s2 + $0x640] sm:$0xff]
    %v242 = vld [vmem:[%s2 + $0x648] sm:$0xff]
    %v243 = vld [vmem:[%s2 + $0x650] sm:$0xff]
    %v244 = vld [vmem:[%s2 + $0x658] sm:$0xff]
    %v245 = vld [vmem:[%s2 + $0x660] sm:$0xff]
    %v246 = vld [vmem:[%s2 + $0x668] sm:$0xff]
    %v247 = vld [vmem:[%s2 + $0x670] sm:$0xff]
    %v248 = vld [vmem:[%s2 + $0x678] sm:$0xff]
    %v249 = vld [vmem:[%s2 + $0x680] sm:$0xff]
    %v250 = vld [vmem:[%s2 + $0x688] sm:$0xff]
    %v251 = vld [vmem:[%s2 + $0x690] sm:$0xff]
    %v252 = vld [vmem:[%s2 + $0x698] sm:$0xff]
    %v253 = vld [vmem:[%s2 + $0x6a0] sm:$0xff]
    %v254 = vld [vmem:[%s2 + $0x6a8] sm:$0xff]
    %v255 = vld [vmem:[%s2 + $0x6b0] sm:$0xff]
    %v256 = vld [vmem:[%s2 + $0x6b8] sm:$0xff]
    %v257 = vld [vmem:[%s2 + $0x6c0] sm:$0xff]
    %v258 = vld [vmem:[%s2 + $0x6c8] sm:$0xff]
    %v259 = vld [vmem:[%s2 + $0x6d0] sm:$0xff]
    %v260 = vld [vmem:[%s2 + $0x6d8] sm:$0xff]
    %v261 = vld [vmem:[%s2 + $0x6e0] sm:$0xff]
    %v262 = vld [vmem:[%s2 + $0x6e8] sm:$0xff]
    %v263 = vld [vmem:[%s2 + $0x6f0] sm:$0xff]
    %v264 = vld [vmem:[%s2 + $0x6f8] sm:$0xff]
    %v265 = vld [vmem:[%s2 + $0x700] sm:$0xff]
    %v266 = vld [vmem:[%s2 + $0x708] sm:$0xff]
    %v267 = vld [vmem:[%s2 + $0x710] sm:$0xff]
    %v268 = vld [vmem:[%s2 + $0x718] sm:$0xff]
    %v269 = vld [vmem:[%s2 + $0x720] sm:$0xff]
    %v270 = vld [vmem:[%s2 + $0x728] sm:$0xff]
    %v271 = vld [vmem:[%s2 + $0x730] sm:$0xff]
    %v272 = vld [vmem:[%s2 + $0x738] sm:$0xff]
    %v273 = vld [vmem:[%s2 + $0x740] sm:$0xff]
    %v274 = vld [vmem:[%s2 + $0x748] sm:$0xff]
    %v275 = vld [vmem:[%s2 + $0x750] sm:$0xff]
    %v276 = vld [vmem:[%s2 + $0x758] sm:$0xff]
    %v277 = vld [vmem:[%s2 + $0x760] sm:$0xff]
    %v278 = vld [vmem:[%s2 + $0x768] sm:$0xff]
    %v279 = vld [vmem:[%s2 + $0x770] sm:$0xff]
    %v280 = vld [vmem:[%s2 + $0x778] sm:$0xff]
    %v281 = vld [vmem:[%s2 + $0x780] sm:$0xff]
    %v282 = vld [vmem:[%s2 + $0x788] sm:$0xff]
    %v283 = vld [vmem:[%s2 + $0x790] sm:$0xff]
    %v284 = vld [vmem:[%s2 + $0x798] sm:$0xff]
    %v285 = vld [vmem:[%s2 + $0x7a0] sm:$0xff]
    %v286 = vld [vmem:[%s2 + $0x7a8] sm:$0xff]
    %v287 = vld [vmem:[%s2 + $0x7b0] sm:$0xff]
    %v288 = vld [vmem:[%s2 + $0x7b8] sm:$0xff]
    %v289 = vld [vmem:[%s2 + $0x7c0] sm:$0xff]
    %v290 = vld [vmem:[%s2 + $0x7c8] sm:$0xff]
    %v291 = vld [vmem:[%s2 + $0x7d0] sm:$0xff]
    %v292 = vld [vmem:[%s2 + $0x7d8] sm:$0xff]
    %v293 = vld [vmem:[%s2 + $0x7e0] sm:$0xff]
    %v294 = vld [vmem:[%s2 + $0x7e8] sm:$0xff]
    %v295 = vld [vmem:[%s2 + $0x7f0] sm:$0xff]
    %v296 = vld [vmem:[%s2 + $0x7f8] sm:$0xff]
    %v297 = vld [vmem:[%s2 + $0x800] sm:$0xff]
    %v298 = vld [vmem:[%s2 + $0x808] sm:$0xff]
    %v299 = vld [vmem:[%s2 + $0x810] sm:$0xff]
    %v300 = vld [vmem:[%s2 + $0x818] sm:$0xff]
    %v301 = vld [vmem:[%s2 + $0x820] sm:$0xff]
    %v302 = vld [vmem:[%s2 + $0x828] sm:$0xff]
    %v303 = vld [vmem:[%s2 + $0x830] sm:$0xff]
    %v304 = vld [vmem:[%s2 + $0x838] sm:$0xff]
    %v305 = vld [vmem:[%s2 + $0x840] sm:$0xff]
    %v306 = vld [vmem:[%s2 + $0x848] sm:$0xff]
    %v307 = vld [vmem:[%s2 + $0x850] sm:$0xff]
    %v308 = vld [vmem:[%s2 + $0x858] sm:$0xff]
    %v309 = vld [vmem:[%s2 + $0x860] sm:$0xff]
    %v310 = vld [vmem:[%s2 + $0x868] sm:$0xff]
    %v311 = vld [vmem:[%s2 + $0x870] sm:$0xff]
    %v312 = vld [vmem:[%s2 + $0x878] sm:$0xff]
    %v313 = vld [vmem:[%s2 + $0x880] sm:$0xff]
    %v314 = vld [vmem:[%s2 + $0x888] sm:$0xff]
    %v315 = vld [vmem:[%s2 + $0x890] sm:$0xff]
    %v316 = vld [vmem:[%s2 + $0x898] sm:$0xff]
    %v317 = vld [vmem:[%s2 + $0x8a0] sm:$0xff]
    %v318 = vld [vmem:[%s2 + $0x8a8] sm:$0xff]
    %v319 = vld [vmem:[%s2 + $0x8b0] sm:$0xff]
    %v320 = vld [vmem:[%s2 + $0x8b8] sm:$0xff]
    %v321 = vld [vmem:[%s2 + $0x8c0] sm:$0xff]
    %v322 = vld [vmem:[%s2 + $0x8c8] sm:$0xff]
    %v323 = vld [vmem:[%s2 + $0x8d0] sm:$0xff]
    %v324 = vld [vmem:[%s2 + $0x8d8] sm:$0xff]
    %v325 = vld [vmem:[%s2 + $0x8e0] sm:$0xff]
    %v326 = vld [vmem:[%s2 + $0x8e8] sm:$0xff]
    %v327 = vld [vmem:[%s2 + $0x8f0] sm:$0xff]
    %v328 = vld [vmem:[%s2 + $0x8f8] sm:$0xff]
    %v329 = vld [vmem:[%s2 + $0x900] sm:$0xff]
    %v330 = vld [vmem:[%s2 + $0x908] sm:$0xff]
    %v331 = vld [vmem:[%s2 + $0x910] sm:$0xff]
    %v332 = vld [vmem:[%s2 + $0x918] sm:$0xff]
    %v333 = vld [vmem:[%s2 + $0x920] sm:$0xff]
    %v334 = vld [vmem:[%s2 + $0x928] sm:$0xff]
    %v335 = vld [vmem:[%s2 + $0x930] sm:$0xff]
    %v336 = vld [vmem:[%s2 + $0x938] sm:$0xff]
    %v337 = vld [vmem:[%s2 + $0x940] sm:$0xff]
    %v338 = vld [vmem:[%s2 + $0x948] sm:$0xff]
    %v339 = vld [vmem:[%s2 + $0x950] sm:$0xff]
    %v340 = vld [vmem:[%s2 + $0x958] sm:$0xff]
    %v341 = vld [vmem:[%s2 + $0x960] sm:$0xff]
    %v342 = vld [vmem:[%s2 + $0x968] sm:$0xff]
    %v343 = vld [vmem:[%s2 + $0x970] sm:$0xff]
    %v344 = vld [vmem:[%s2 + $0x978] sm:$0xff]
    %v345 = vld [vmem:[%s2 + $0x980] sm:$0xff]
    %v346 = vld [vmem:[%s2 + $0x988] sm:$0xff]
    %v347 = vld [vmem:[%s2 + $0x990] sm:$0xff]
    %v348 = vld [vmem:[%s2 + $0x998] sm:$0xff]
    %v349 = vld [vmem:[%s2 + $0x9a0] sm:$0xff]
    %v350 = vld [vmem:[%s2 + $0x9a8] sm:$0xff]
    %v351 = vld [vmem:[%s2 + $0x9b0] sm:$0xff]
    %v352 = vld [vmem:[%s2 + $0x9b8] sm:$0xff]
    %v353 = vld [vmem:[%s2 + $0x9c0] sm:$0xff]
    %v354 = vld [vmem:[%s2 + $0x9c8] sm:$0xff]
    %v355 = vld [vmem:[%s2 + $0x9d0] sm:$0xff]
    %v356 = vld [vmem:[%s2 + $0x9d8] sm:$0xff]
    %v357 = vld [vmem:[%s2 + $0x9e0] sm:$0xff]
    %v358 = vld [vmem:[%s2 + $0x9e8] sm:$0xff]
    %v359 = vld [vmem:[%s2 + $0x9f0] sm:$0xff]
    %v360 = vld [vmem:[%s2 + $0x9f8] sm:$0xff]
    %v361 = vld [vmem:[%s2 + $0xa00] sm:$0xff]
    %v362 = vld [vmem:[%s2 + $0xa08] sm:$0xff]
    %v363 = vld [vmem:[%s2 + $0xa10] sm:$0xff]
    %v364 = vld [vmem:[%s2 + $0xa18] sm:$0xff]
    %v365 = vld [vmem:[%s2 + $0xa20] sm:$0xff]
    %v366 = vld [vmem:[%s2 + $0xa28] sm:$0xff]
    %v367 = vld [vmem:[%s2 + $0xa30] sm:$0xff]
    %v368 = vld [vmem:[%s2 + $0xa38] sm:$0xff]
    %v369 = vld [vmem:[%s2 + $0xa40] sm:$0xff]
    %v370 = vld [vmem:[%s2 + $0xa48] sm:$0xff]
    %v371 = vld [vmem:[%s2 + $0xa50] sm:$0xff]
    %v372 = vld [vmem:[%s2 + $0xa58] sm:$0xff]
    %v373 = vld [vmem:[%s2 + $0xa60] sm:$0xff]
    %v374 = vld [vmem:[%s2 + $0xa68] sm:$0xff]
    %v375 = vld [vmem:[%s2 + $0xa70] sm:$0xff]
    %v376 = vld [vmem:[%s2 + $0xa78] sm:$0xff]
    %v377 = vld [vmem:[%s2 + $0xa80] sm:$0xff]
    %v378 = vld [vmem:[%s2 + $0xa88] sm:$0xff]
    %v379 = vld [vmem:[%s2 + $0xa90] sm:$0xff]
    %v380 = vld [vmem:[%s2 + $0xa98] sm:$0xff]
    %v381 = vld [vmem:[%s2 + $0xaa0] sm:$0xff]
    %v382 = vld [vmem:[%s2 + $0xaa8] sm:$0xff]
    %v383 = vld [vmem:[%s2 + $0xab0] sm:$0xff]
    %v384 = vld [vmem:[%s2 + $0xab8] sm:$0xff]
    %v385 = vld [vmem:[%s2 + $0xac0] sm:$0xff]
    %v386 = vld [vmem:[%s2 + $0xac8] sm:$0xff]
    %v387 = vld [vmem:[%s2 + $0xad0] sm:$0xff]
    %v388 = vld [vmem:[%s2 + $0xad8] sm:$0xff]
    %v389 = vld [vmem:[%s2 + $0xae0] sm:$0xff]
    %v390 = vld [vmem:[%s2 + $0xae8] sm:$0xff]
    %v391 = vld [vmem:[%s2 + $0xaf0] sm:$0xff]
    %v392 = vld [vmem:[%s2 + $0xaf8] sm:$0xff]
    %v393 = vld [vmem:[%s2 + $0xb00] sm:$0xff]
    %v394 = vld [vmem:[%s2 + $0xb08] sm:$0xff]
    %v395 = vld [vmem:[%s2 + $0xb10] sm:$0xff]
    %v396 = vld [vmem:[%s2 + $0xb18] sm:$0xff]
    %v397 = vld [vmem:[%s2 + $0xb20] sm:$0xff]
    %v398 = vld [vmem:[%s2 + $0xb28] sm:$0xff]
    %v399 = vld [vmem:[%s2 + $0xb30] sm:$0xff]
    %v400 = vld [vmem:[%s2 + $0xb38] sm:$0xff]
    %v401 = vld [vmem:[%s2 + $0xb40] sm:$0xff]
    %v402 = vld [vmem:[%s2 + $0xb48] sm:$0xff]
    %v403 = vld [vmem:[%s2 + $0xb50] sm:$0xff]
    %v404 = vld [vmem:[%s2 + $0xb58] sm:$0xff]
    %v405 = vld [vmem:[%s2 + $0xb60] sm:$0xff]
    %v406 = vld [vmem:[%s2 + $0xb68] sm:$0xff]
    %v407 = vld [vmem:[%s2 + $0xb70] sm:$0xff]
    %v408 = vld [vmem:[%s2 + $0xb78] sm:$0xff]
    %v409 = vld [vmem:[%s2 + $0xb80] sm:$0xff]
    %v410 = vld [vmem:[%s2 + $0xb88] sm:$0xff]
    %v411 = vld [vmem:[%s2 + $0xb90] sm:$0xff]
    %v412 = vld [vmem:[%s2 + $0xb98] sm:$0xff]
    %v413 = vld [vmem:[%s2 + $0xba0] sm:$0xff]
    %v414 = vld [vmem:[%s2 + $0xba8] sm:$0xff]
    %v415 = vld [vmem:[%s2 + $0xbb0] sm:$0xff]
    %v416 = vld [vmem:[%s2 + $0xbb8] sm:$0xff]
    %v417 = vld [vmem:[%s2 + $0xbc0] sm:$0xff]
    %v418 = vld [vmem:[%s2 + $0xbc8] sm:$0xff]
    %v419 = vld [vmem:[%s2 + $0xbd0] sm:$0xff]
    %v420 = vld [vmem:[%s2 + $0xbd8] sm:$0xff]
    %v421 = vld [vmem:[%s2 + $0xbe0] sm:$0xff]
    %v422 = vld [vmem:[%s2 + $0xbe8] sm:$0xff]
    %v423 = vld [vmem:[%s2 + $0xbf0] sm:$0xff]
    %v424 = vld [vmem:[%s2 + $0xbf8] sm:$0xff]
    %v425 = vld [vmem:[%s2 + $0xc00] sm:$0xff]
    %v426 = vld [vmem:[%s2 + $0xc08] sm:$0xff]
    %v427 = vld [vmem:[%s2 + $0xc10] sm:$0xff]
    %v428 = vld [vmem:[%s2 + $0xc18] sm:$0xff]
    %v429 = vld [vmem:[%s2 + $0xc20] sm:$0xff]
    %v430 = vld [vmem:[%s2 + $0xc28] sm:$0xff]
    %v431 = vld [vmem:[%s2 + $0xc30] sm:$0xff]
    %v432 = vld [vmem:[%s2 + $0xc38] sm:$0xff]
    %v433 = vld [vmem:[%s2 + $0xc40] sm:$0xff]
    %v434 = vld [vmem:[%s2 + $0xc48] sm:$0xff]
    %v435 = vld [vmem:[%s2 + $0xc50] sm:$0xff]
    %v436 = vld [vmem:[%s2 + $0xc58] sm:$0xff]
    %v437 = vld [vmem:[%s2 + $0xc60] sm:$0xff]
    %v438 = vld [vmem:[%s2 + $0xc68] sm:$0xff]
    %v439 = vld [vmem:[%s2 + $0xc70] sm:$0xff]
    %v440 = vld [vmem:[%s2 + $0xc78] sm:$0xff]
    %v441 = vld [vmem:[%s2 + $0xc80] sm:$0xff]
    %v442 = vld [vmem:[%s2 + $0xc88] sm:$0xff]
    %v443 = vld [vmem:[%s2 + $0xc90] sm:$0xff]
    %v444 = vld [vmem:[%s2 + $0xc98] sm:$0xff]
    %v445 = vld [vmem:[%s2 + $0xca0] sm:$0xff]
    %v446 = vld [vmem:[%s2 + $0xca8] sm:$0xff]
    %v447 = vld [vmem:[%s2 + $0xcb0] sm:$0xff]
    %v448 = vld [vmem:[%s2 + $0xcb8] sm:$0xff]
    %v449 = vld [vmem:[%s2 + $0xcc0] sm:$0xff]
    %v450 = vld [vmem:[%s2 + $0xcc8] sm:$0xff]
    %v451 = vld [vmem:[%s2 + $0xcd0] sm:$0xff]
    %v452 = vld [vmem:[%s2 + $0xcd8] sm:$0xff]
    %v453 = vld [vmem:[%s2 + $0xce0] sm:$0xff]
    %v454 = vld [vmem:[%s2 + $0xce8] sm:$0xff]
    %v455 = vld [vmem:[%s2 + $0xcf0] sm:$0xff]
    %v456 = vld [vmem:[%s2 + $0xcf8] sm:$0xff]
    %v457 = vld [vmem:[%s2 + $0xd00] sm:$0xff]
    %v458 = vld [vmem:[%s2 + $0xd08] sm:$0xff]
    %v459 = vld [vmem:[%s2 + $0xd10] sm:$0xff]
    %v460 = vld [vmem:[%s2 + $0xd18] sm:$0xff]
    %v461 = vld [vmem:[%s2 + $0xd20] sm:$0xff]
    %v462 = vld [vmem:[%s2 + $0xd28] sm:$0xff]
    %v463 = vld [vmem:[%s2 + $0xd30] sm:$0xff]
    %v464 = vld [vmem:[%s2 + $0xd38] sm:$0xff]
    %v465 = vld [vmem:[%s2 + $0xd40] sm:$0xff]
    %v466 = vld [vmem:[%s2 + $0xd48] sm:$0xff]
    %v467 = vld [vmem:[%s2 + $0xd50] sm:$0xff]
    %v468 = vld [vmem:[%s2 + $0xd58] sm:$0xff]
    %v469 = vld [vmem:[%s2 + $0xd60] sm:$0xff]
    %v470 = vld [vmem:[%s2 + $0xd68] sm:$0xff]
    %v471 = vld [vmem:[%s2 + $0xd70] sm:$0xff]
    %v472 = vld [vmem:[%s2 + $0xd78] sm:$0xff]
    %v473 = vld [vmem:[%s2 + $0xd80] sm:$0xff]
    %v474 = vld [vmem:[%s2 + $0xd88] sm:$0xff]
    %v475 = vld [vmem:[%s2 + $0xd90] sm:$0xff]
    %v476 = vld [vmem:[%s2 + $0xd98] sm:$0xff]
    %v477 = vld [vmem:[%s2 + $0xda0] sm:$0xff]
    %v478 = vld [vmem:[%s2 + $0xda8] sm:$0xff]
    %v479 = vld [vmem:[%s2 + $0xdb0] sm:$0xff]
    %v480 = vld [vmem:[%s2 + $0xdb8] sm:$0xff]
    %v481 = vld [vmem:[%s2 + $0xdc0] sm:$0xff]
    %v482 = vld [vmem:[%s2 + $0xdc8] sm:$0xff]
    %v483 = vld [vmem:[%s2 + $0xdd0] sm:$0xff]
    %v484 = vld [vmem:[%s2 + $0xdd8] sm:$0xff]
    %v485 = vld [vmem:[%s2 + $0xde0] sm:$0xff]
    %v486 = vld [vmem:[%s2 + $0xde8] sm:$0xff]
    %v487 = vld [vmem:[%s2 + $0xdf0] sm:$0xff]
    %v488 = vld [vmem:[%s2 + $0xdf8] sm:$0xff]
    %v489 = vld [vmem:[%s2 + $0xe00] sm:$0xff]
    %v490 = vld [vmem:[%s2 + $0xe08] sm:$0xff]
    %v501 = vunpack.c.l.b16 %v31
    %v502 = vunpack.c.h.b16 %v31
    %v503 = vunpack.c.l.b16 %v32
    %v504 = vunpack.c.h.b16 %v32
    %v505 = vunpack.c.l.b16 %v33
    %v506 = vunpack.c.h.b16 %v33
    %v507 = vunpack.c.l.b16 %v34
    %v508 = vunpack.c.h.b16 %v34
    %v509 = vunpack.c.l.b16 %v35
    %v510 = vunpack.c.h.b16 %v35
    %v511 = vunpack.c.l.b16 %v36
    %v512 = vunpack.c.h.b16 %v36
    %v513 = vunpack.c.l.b16 %v37
    %v514 = vunpack.c.h.b16 %v37
    %v515 = vunpack.c.l.b16 %v38
    %v516 = vunpack.c.h.b16 %v38
    %v517 = vunpack.c.l.b16 %v39
    %v518 = vunpack.c.h.b16 %v39
    %v519 = vunpack.c.l.b16 %v40
    %v520 = vunpack.c.h.b16 %v40
    %v521 = vpack.c.b16 %v511, %v501
    %v522 = vpack.c.b16 %v512, %v502
    %v523 = vpack.c.b16 %v513, %v503
    %v524 = vpack.c.b16 %v514, %v504
    %v525 = vpack.c.b16 %v515, %v505
    %v526 = vpack.c.b16 %v516, %v506
    %v527 = vpack.c.b16 %v517, %v507
    %v528 = vpack.c.b16 %v518, %v508
    %v529 = vpack.c.b16 %v519, %v509
    %v530 = vpack.c.b16 %v520, %v510
    %v990 = vunpack.c.l.b16 %v41
    %v991 = vunpack.c.h.b16 %v41
    %v992 = vunpack.c.l.b16 %v42
    %v993 = vunpack.c.h.b16 %v42
    %v994 = vunpack.c.l.b16 %v43
    %v995 = vunpack.c.h.b16 %v43
    %v996 = vunpack.c.l.b16 %v44
    %v997 = vunpack.c.h.b16 %v44
    %v998 = vunpack.c.l.b16 %v45
    %v999 = vunpack.c.h.b16 %v45
    %v1000 = vunpack.c.l.b16 %v46
    %v1001 = vunpack.c.h.b16 %v46
    %v1002 = vunpack.c.l.b16 %v47
    %v1003 = vunpack.c.h.b16 %v47
    %v1004 = vunpack.c.l.b16 %v48
    %v1005 = vunpack.c.h.b16 %v48
    %v1006 = vunpack.c.l.b16 %v49
    %v1007 = vunpack.c.h.b16 %v49
    %v1008 = vunpack.c.l.b16 %v50
    %v1009 = vunpack.c.h.b16 %v50
    %v1010 = vunpack.c.l.b16 %v51
    %v1011 = vunpack.c.h.b16 %v51
    %v1012 = vunpack.c.l.b16 %v52
    %v1013 = vunpack.c.h.b16 %v52
    %v1014 = vunpack.c.l.b16 %v53
    %v1015 = vunpack.c.h.b16 %v53
    %v1016 = vunpack.c.l.b16 %v54
    %v1017 = vunpack.c.h.b16 %v54
    %v1018 = vunpack.c.l.b16 %v55
    %v1019 = vunpack.c.h.b16 %v55
    %v1020 = vunpack.c.l.b16 %v56
    %v1021 = vunpack.c.h.b16 %v56
    %v1022 = vunpack.c.l.b16 %v57
    %v1023 = vunpack.c.h.b16 %v57
    %v1024 = vunpack.c.l.b16 %v58
    %v1025 = vunpack.c.h.b16 %v58
    %v1026 = vunpack.c.l.b16 %v59
    %v1027 = vunpack.c.h.b16 %v59
    %v1028 = vunpack.c.l.b16 %v60
    %v1029 = vunpack.c.h.b16 %v60
    %v1030 = vunpack.c.l.b16 %v61
    %v1031 = vunpack.c.h.b16 %v61
    %v1032 = vunpack.c.l.b16 %v62
    %v1033 = vunpack.c.h.b16 %v62
    %v1034 = vunpack.c.l.b16 %v63
    %v1035 = vunpack.c.h.b16 %v63
    %v1036 = vunpack.c.l.b16 %v64
    %v1037 = vunpack.c.h.b16 %v64
    %v1038 = vunpack.c.l.b16 %v65
    %v1039 = vunpack.c.h.b16 %v65
    %v1040 = vunpack.c.l.b16 %v66
    %v1041 = vunpack.c.h.b16 %v66
    %v1042 = vunpack.c.l.b16 %v67
    %v1043 = vunpack.c.h.b16 %v67
    %v1044 = vunpack.c.l.b16 %v68
    %v1045 = vunpack.c.h.b16 %v68
    %v1046 = vunpack.c.l.b16 %v69
    %v1047 = vunpack.c.h.b16 %v69
    %v1048 = vunpack.c.l.b16 %v70
    %v1049 = vunpack.c.h.b16 %v70
    %v1050 = vunpack.c.l.b16 %v71
    %v1051 = vunpack.c.h.b16 %v71
    %v1052 = vunpack.c.l.b16 %v72
    %v1053 = vunpack.c.h.b16 %v72
    %v1054 = vunpack.c.l.b16 %v73
    %v1055 = vunpack.c.h.b16 %v73
    %v1056 = vunpack.c.l.b16 %v74
    %v1057 = vunpack.c.h.b16 %v74
    %v1058 = vunpack.c.l.b16 %v75
    %v1059 = vunpack.c.h.b16 %v75
    %v1060 = vunpack.c.l.b16 %v76
    %v1061 = vunpack.c.h.b16 %v76
    %v1062 = vunpack.c.l.b16 %v77
    %v1063 = vunpack.c.h.b16 %v77
    %v1064 = vunpack.c.l.b16 %v78
    %v1065 = vunpack.c.h.b16 %v78
    %v1066 = vunpack.c.l.b16 %v79
    %v1067 = vunpack.c.h.b16 %v79
    %v1068 = vunpack.c.l.b16 %v80
    %v1069 = vunpack.c.h.b16 %v80
    %v1070 = vunpack.c.l.b16 %v81
    %v1071 = vunpack.c.h.b16 %v81
    %v1072 = vunpack.c.l.b16 %v82
    %v1073 = vunpack.c.h.b16 %v82
    %v1074 = vunpack.c.l.b16 %v83
    %v1075 = vunpack.c.h.b16 %v83
    %v1076 = vunpack.c.l.b16 %v84
    %v1077 = vunpack.c.h.b16 %v84
    %v1078 = vunpack.c.l.b16 %v85
    %v1079 = vunpack.c.h.b16 %v85
    %v1080 = vunpack.c.l.b16 %v86
    %v1081 = vunpack.c.h.b16 %v86
    %v1082 = vunpack.c.l.b16 %v87
    %v1083 = vunpack.c.h.b16 %v87
    %v1084 = vunpack.c.l.b16 %v88
    %v1085 = vunpack.c.h.b16 %v88
    %v1086 = vunpack.c.l.b16 %v89
    %v1087 = vunpack.c.h.b16 %v89
    %v1088 = vunpack.c.l.b16 %v90
    %v1089 = vunpack.c.h.b16 %v90
    %v1090 = vunpack.c.l.b16 %v91
    %v1091 = vunpack.c.h.b16 %v91
    %v1092 = vunpack.c.l.b16 %v92
    %v1093 = vunpack.c.h.b16 %v92
    %v1094 = vunpack.c.l.b16 %v93
    %v1095 = vunpack.c.h.b16 %v93
    %v1096 = vunpack.c.l.b16 %v94
    %v1097 = vunpack.c.h.b16 %v94
    %v1098 = vunpack.c.l.b16 %v95
    %v1099 = vunpack.c.h.b16 %v95
    %v1100 = vunpack.c.l.b16 %v96
    %v1101 = vunpack.c.h.b16 %v96
    %v1102 = vunpack.c.l.b16 %v97
    %v1103 = vunpack.c.h.b16 %v97
    %v1104 = vunpack.c.l.b16 %v98
    %v1105 = vunpack.c.h.b16 %v98
    %v1106 = vunpack.c.l.b16 %v99
    %v1107 = vunpack.c.h.b16 %v99
    %v1108 = vunpack.c.l.b16 %v100
    %v1109 = vunpack.c.h.b16 %v100
    %v1110 = vunpack.c.l.b16 %v101
    %v1111 = vunpack.c.h.b16 %v101
    %v1112 = vunpack.c.l.b16 %v102
    %v1113 = vunpack.c.h.b16 %v102
    %v1114 = vunpack.c.l.b16 %v103
    %v1115 = vunpack.c.h.b16 %v103
    %v1116 = vunpack.c.l.b16 %v104
    %v1117 = vunpack.c.h.b16 %v104
    %v1118 = vunpack.c.l.b16 %v105
    %v1119 = vunpack.c.h.b16 %v105
    %v1120 = vunpack.c.l.b16 %v106
    %v1121 = vunpack.c.h.b16 %v106
    %v1122 = vunpack.c.l.b16 %v107
    %v1123 = vunpack.c.h.b16 %v107
    %v1124 = vunpack.c.l.b16 %v108
    %v1125 = vunpack.c.h.b16 %v108
    %v1126 = vunpack.c.l.b16 %v109
    %v1127 = vunpack.c.h.b16 %v109
    %v1128 = vunpack.c.l.b16 %v110
    %v1129 = vunpack.c.h.b16 %v110
    %v1130 = vunpack.c.l.b16 %v111
    %v1131 = vunpack.c.h.b16 %v111
    %v1132 = vunpack.c.l.b16 %v112
    %v1133 = vunpack.c.h.b16 %v112
    %v1134 = vunpack.c.l.b16 %v113
    %v1135 = vunpack.c.h.b16 %v113
    %v1136 = vunpack.c.l.b16 %v114
    %v1137 = vunpack.c.h.b16 %v114
    %v1138 = vunpack.c.l.b16 %v115
    %v1139 = vunpack.c.h.b16 %v115
    %v1140 = vunpack.c.l.b16 %v116
    %v1141 = vunpack.c.h.b16 %v116
    %v1142 = vunpack.c.l.b16 %v117
    %v1143 = vunpack.c.h.b16 %v117
    %v1144 = vunpack.c.l.b16 %v118
    %v1145 = vunpack.c.h.b16 %v118
    %v1146 = vunpack.c.l.b16 %v119
    %v1147 = vunpack.c.h.b16 %v119
    %v1148 = vunpack.c.l.b16 %v120
    %v1149 = vunpack.c.h.b16 %v120
    %v1150 = vunpack.c.l.b16 %v121
    %v1151 = vunpack.c.h.b16 %v121
    %v1152 = vunpack.c.l.b16 %v122
    %v1153 = vunpack.c.h.b16 %v122
    %v1154 = vunpack.c.l.b16 %v123
    %v1155 = vunpack.c.h.b16 %v123
    %v1156 = vunpack.c.l.b16 %v124
    %v1157 = vunpack.c.h.b16 %v124
    %v1158 = vunpack.c.l.b16 %v125
    %v1159 = vunpack.c.h.b16 %v125
    %v1160 = vunpack.c.l.b16 %v126
    %v1161 = vunpack.c.h.b16 %v126
    %v1162 = vunpack.c.l.b16 %v127
    %v1163 = vunpack.c.h.b16 %v127
    %v1164 = vunpack.c.l.b16 %v128
    %v1165 = vunpack.c.h.b16 %v128
    %v1166 = vunpack.c.l.b16 %v129
    %v1167 = vunpack.c.h.b16 %v129
    %v1168 = vunpack.c.l.b16 %v130
    %v1169 = vunpack.c.h.b16 %v130
    %v1170 = vunpack.c.l.b16 %v131
    %v1171 = vunpack.c.h.b16 %v131
    %v1172 = vunpack.c.l.b16 %v132
    %v1173 = vunpack.c.h.b16 %v132
    %v1174 = vunpack.c.l.b16 %v133
    %v1175 = vunpack.c.h.b16 %v133
    %v1176 = vunpack.c.l.b16 %v134
    %v1177 = vunpack.c.h.b16 %v134
    %v1178 = vunpack.c.l.b16 %v135
    %v1179 = vunpack.c.h.b16 %v135
    %v1180 = vunpack.c.l.b16 %v136
    %v1181 = vunpack.c.h.b16 %v136
    %v1182 = vunpack.c.l.b16 %v137
    %v1183 = vunpack.c.h.b16 %v137
    %v1184 = vunpack.c.l.b16 %v138
    %v1185 = vunpack.c.h.b16 %v138
    %v1186 = vunpack.c.l.b16 %v139
    %v1187 = vunpack.c.h.b16 %v139
    %v1188 = vunpack.c.l.b16 %v140
    %v1189 = vunpack.c.h.b16 %v140
    %v1190 = vunpack.c.l.b16 %v141
    %v1191 = vunpack.c.h.b16 %v141
    %v1192 = vunpack.c.l.b16 %v142
    %v1193 = vunpack.c.h.b16 %v142
    %v1194 = vunpack.c.l.b16 %v143
    %v1195 = vunpack.c.h.b16 %v143
    %v1196 = vunpack.c.l.b16 %v144
    %v1197 = vunpack.c.h.b16 %v144
    %v1198 = vunpack.c.l.b16 %v145
    %v1199 = vunpack.c.h.b16 %v145
    %v1200 = vunpack.c.l.b16 %v146
    %v1201 = vunpack.c.h.b16 %v146
    %v1202 = vunpack.c.l.b16 %v147
    %v1203 = vunpack.c.h.b16 %v147
    %v1204 = vunpack.c.l.b16 %v148
    %v1205 = vunpack.c.h.b16 %v148
    %v1206 = vunpack.c.l.b16 %v149
    %v1207 = vunpack.c.h.b16 %v149
    %v1208 = vunpack.c.l.b16 %v150
    %v1209 = vunpack.c.h.b16 %v150
    %v1210 = vunpack.c.l.b16 %v151
    %v1211 = vunpack.c.h.b16 %v151
    %v1212 = vunpack.c.l.b16 %v152
    %v1213 = vunpack.c.h.b16 %v152
    %v1214 = vunpack.c.l.b16 %v153
    %v1215 = vunpack.c.h.b16 %v153
    %v1216 = vunpack.c.l.b16 %v154
    %v1217 = vunpack.c.h.b16 %v154
    %v1218 = vunpack.c.l.b16 %v155
    %v1219 = vunpack.c.h.b16 %v155
    %v1220 = vunpack.c.l.b16 %v156
    %v1221 = vunpack.c.h.b16 %v156
    %v1222 = vunpack.c.l.b16 %v157
    %v1223 = vunpack.c.h.b16 %v157
    %v1224 = vunpack.c.l.b16 %v158
    %v1225 = vunpack.c.h.b16 %v158
    %v1226 = vunpack.c.l.b16 %v159
    %v1227 = vunpack.c.h.b16 %v159
    %v1228 = vunpack.c.l.b16 %v160
    %v1229 = vunpack.c.h.b16 %v160
    %v1230 = vunpack.c.l.b16 %v161
    %v1231 = vunpack.c.h.b16 %v161
    %v1232 = vunpack.c.l.b16 %v162
    %v1233 = vunpack.c.h.b16 %v162
    %v1234 = vunpack.c.l.b16 %v163
    %v1235 = vunpack.c.h.b16 %v163
    %v1236 = vunpack.c.l.b16 %v164
    %v1237 = vunpack.c.h.b16 %v164
    %v1238 = vunpack.c.l.b16 %v165
    %v1239 = vunpack.c.h.b16 %v165
    %v1240 = vunpack.c.l.b16 %v166
    %v1241 = vunpack.c.h.b16 %v166
    %v1242 = vunpack.c.l.b16 %v167
    %v1243 = vunpack.c.h.b16 %v167
    %v1244 = vunpack.c.l.b16 %v168
    %v1245 = vunpack.c.h.b16 %v168
    %v1246 = vunpack.c.l.b16 %v169
    %v1247 = vunpack.c.h.b16 %v169
    %v1248 = vunpack.c.l.b16 %v170
    %v1249 = vunpack.c.h.b16 %v170
    %v1250 = vunpack.c.l.b16 %v171
    %v1251 = vunpack.c.h.b16 %v171
    %v1252 = vunpack.c.l.b16 %v172
    %v1253 = vunpack.c.h.b16 %v172
    %v1254 = vunpack.c.l.b16 %v173
    %v1255 = vunpack.c.h.b16 %v173
    %v1256 = vunpack.c.l.b16 %v174
    %v1257 = vunpack.c.h.b16 %v174
    %v1258 = vunpack.c.l.b16 %v175
    %v1259 = vunpack.c.h.b16 %v175
    %v1260 = vunpack.c.l.b16 %v176
    %v1261 = vunpack.c.h.b16 %v176
    %v1262 = vunpack.c.l.b16 %v177
    %v1263 = vunpack.c.h.b16 %v177
    %v1264 = vunpack.c.l.b16 %v178
    %v1265 = vunpack.c.h.b16 %v178
    %v1266 = vunpack.c.l.b16 %v179
    %v1267 = vunpack.c.h.b16 %v179
    %v1268 = vunpack.c.l.b16 %v180
    %v1269 = vunpack.c.h.b16 %v180
    %v1270 = vunpack.c.l.b16 %v181
    %v1271 = vunpack.c.h.b16 %v181
    %v1272 = vunpack.c.l.b16 %v182
    %v1273 = vunpack.c.h.b16 %v182
    %v1274 = vunpack.c.l.b16 %v183
    %v1275 = vunpack.c.h.b16 %v183
    %v1276 = vunpack.c.l.b16 %v184
    %v1277 = vunpack.c.h.b16 %v184
    %v1278 = vunpack.c.l.b16 %v185
    %v1279 = vunpack.c.h.b16 %v185
    %v1280 = vunpack.c.l.b16 %v186
    %v1281 = vunpack.c.h.b16 %v186
    %v1282 = vunpack.c.l.b16 %v187
    %v1283 = vunpack.c.h.b16 %v187
    %v1284 = vunpack.c.l.b16 %v188
    %v1285 = vunpack.c.h.b16 %v188
    %v1286 = vunpack.c.l.b16 %v189
    %v1287 = vunpack.c.h.b16 %v189
    %v1288 = vunpack.c.l.b16 %v190
    %v1289 = vunpack.c.h.b16 %v190
    %v1290 = vunpack.c.l.b16 %v191
    %v1291 = vunpack.c.h.b16 %v191
    %v1292 = vunpack.c.l.b16 %v192
    %v1293 = vunpack.c.h.b16 %v192
    %v1294 = vunpack.c.l.b16 %v193
    %v1295 = vunpack.c.h.b16 %v193
    %v1296 = vunpack.c.l.b16 %v194
    %v1297 = vunpack.c.h.b16 %v194
    %v1298 = vunpack.c.l.b16 %v195
    %v1299 = vunpack.c.h.b16 %v195
    %v1300 = vunpack.c.l.b16 %v196
    %v1301 = vunpack.c.h.b16 %v196
    %v1302 = vunpack.c.l.b16 %v197
    %v1303 = vunpack.c.h.b16 %v197
    %v1304 = vunpack.c.l.b16 %v198
    %v1305 = vunpack.c.h.b16 %v198
    %v1306 = vunpack.c.l.b16 %v199
    %v1307 = vunpack.c.h.b16 %v199
    %v1308 = vunpack.c.l.b16 %v200
    %v1309 = vunpack.c.h.b16 %v200
    %v1310 = vunpack.c.l.b16 %v201
    %v1311 = vunpack.c.h.b16 %v201
    %v1312 = vunpack.c.l.b16 %v202
    %v1313 = vunpack.c.h.b16 %v202
    %v1314 = vunpack.c.l.b16 %v203
    %v1315 = vunpack.c.h.b16 %v203
    %v1316 = vunpack.c.l.b16 %v204
    %v1317 = vunpack.c.h.b16 %v204
    %v1318 = vunpack.c.l.b16 %v205
    %v1319 = vunpack.c.h.b16 %v205
    %v1320 = vunpack.c.l.b16 %v206
    %v1321 = vunpack.c.h.b16 %v206
    %v1322 = vunpack.c.l.b16 %v207
    %v1323 = vunpack.c.h.b16 %v207
    %v1324 = vunpack.c.l.b16 %v208
    %v1325 = vunpack.c.h.b16 %v208
    %v1326 = vunpack.c.l.b16 %v209
    %v1327 = vunpack.c.h.b16 %v209
    %v1328 = vunpack.c.l.b16 %v210
    %v1329 = vunpack.c.h.b16 %v210
    %v1330 = vunpack.c.l.b16 %v211
    %v1331 = vunpack.c.h.b16 %v211
    %v1332 = vunpack.c.l.b16 %v212
    %v1333 = vunpack.c.h.b16 %v212
    %v1334 = vunpack.c.l.b16 %v213
    %v1335 = vunpack.c.h.b16 %v213
    %v1336 = vunpack.c.l.b16 %v214
    %v1337 = vunpack.c.h.b16 %v214
    %v1338 = vunpack.c.l.b16 %v215
    %v1339 = vunpack.c.h.b16 %v215
    %v1340 = vunpack.c.l.b16 %v216
    %v1341 = vunpack.c.h.b16 %v216
    %v1342 = vunpack.c.l.b16 %v217
    %v1343 = vunpack.c.h.b16 %v217
    %v1344 = vunpack.c.l.b16 %v218
    %v1345 = vunpack.c.h.b16 %v218
    %v1346 = vunpack.c.l.b16 %v219
    %v1347 = vunpack.c.h.b16 %v219
    %v1348 = vunpack.c.l.b16 %v220
    %v1349 = vunpack.c.h.b16 %v220
    %v1350 = vunpack.c.l.b16 %v221
    %v1351 = vunpack.c.h.b16 %v221
    %v1352 = vunpack.c.l.b16 %v222
    %v1353 = vunpack.c.h.b16 %v222
    %v1354 = vunpack.c.l.b16 %v223
    %v1355 = vunpack.c.h.b16 %v223
    %v1356 = vunpack.c.l.b16 %v224
    %v1357 = vunpack.c.h.b16 %v224
    %v1358 = vunpack.c.l.b16 %v225
    %v1359 = vunpack.c.h.b16 %v225
    %v1360 = vunpack.c.l.b16 %v226
    %v1361 = vunpack.c.h.b16 %v226
    %v1362 = vunpack.c.l.b16 %v227
    %v1363 = vunpack.c.h.b16 %v227
    %v1364 = vunpack.c.l.b16 %v228
    %v1365 = vunpack.c.h.b16 %v228
    %v1366 = vunpack.c.l.b16 %v229
    %v1367 = vunpack.c.h.b16 %v229
    %v1368 = vunpack.c.l.b16 %v230
    %v1369 = vunpack.c.h.b16 %v230
    %v1370 = vunpack.c.l.b16 %v231
    %v1371 = vunpack.c.h.b16 %v231
    %v1372 = vunpack.c.l.b16 %v232
    %v1373 = vunpack.c.h.b16 %v232
    %v1374 = vunpack.c.l.b16 %v233
    %v1375 = vunpack.c.h.b16 %v233
    %v1376 = vunpack.c.l.b16 %v234
    %v1377 = vunpack.c.h.b16 %v234
    %v1378 = vunpack.c.l.b16 %v235
    %v1379 = vunpack.c.h.b16 %v235
    %v1380 = vunpack.c.l.b16 %v236
    %v1381 = vunpack.c.h.b16 %v236
    %v1382 = vunpack.c.l.b16 %v237
    %v1383 = vunpack.c.h.b16 %v237
    %v1384 = vunpack.c.l.b16 %v238
    %v1385 = vunpack.c.h.b16 %v238
    %v1386 = vunpack.c.l.b16 %v239
    %v1387 = vunpack.c.h.b16 %v239
    %v1388 = vunpack.c.l.b16 %v240
    %v1389 = vunpack.c.h.b16 %v240
    %v1390 = vunpack.c.l.b16 %v241
    %v1391 = vunpack.c.h.b16 %v241
    %v1392 = vunpack.c.l.b16 %v242
    %v1393 = vunpack.c.h.b16 %v242
    %v1394 = vunpack.c.l.b16 %v243
    %v1395 = vunpack.c.h.b16 %v243
    %v1396 = vunpack.c.l.b16 %v244
    %v1397 = vunpack.c.h.b16 %v244
    %v1398 = vunpack.c.l.b16 %v245
    %v1399 = vunpack.c.h.b16 %v245
    %v1400 = vunpack.c.l.b16 %v246
    %v1401 = vunpack.c.h.b16 %v246
    %v1402 = vunpack.c.l.b16 %v247
    %v1403 = vunpack.c.h.b16 %v247
    %v1404 = vunpack.c.l.b16 %v248
    %v1405 = vunpack.c.h.b16 %v248
    %v1406 = vunpack.c.l.b16 %v249
    %v1407 = vunpack.c.h.b16 %v249
    %v1408 = vunpack.c.l.b16 %v250
    %v1409 = vunpack.c.h.b16 %v250
    %v1410 = vunpack.c.l.b16 %v251
    %v1411 = vunpack.c.h.b16 %v251
    %v1412 = vunpack.c.l.b16 %v252
    %v1413 = vunpack.c.h.b16 %v252
    %v1414 = vunpack.c.l.b16 %v253
    %v1415 = vunpack.c.h.b16 %v253
    %v1416 = vunpack.c.l.b16 %v254
    %v1417 = vunpack.c.h.b16 %v254
    %v1418 = vunpack.c.l.b16 %v255
    %v1419 = vunpack.c.h.b16 %v255
    %v1420 = vunpack.c.l.b16 %v256
    %v1421 = vunpack.c.h.b16 %v256
    %v1422 = vunpack.c.l.b16 %v257
    %v1423 = vunpack.c.h.b16 %v257
    %v1424 = vunpack.c.l.b16 %v258
    %v1425 = vunpack.c.h.b16 %v258
    %v1426 = vunpack.c.l.b16 %v259
    %v1427 = vunpack.c.h.b16 %v259
    %v1428 = vunpack.c.l.b16 %v260
    %v1429 = vunpack.c.h.b16 %v260
    %v1430 = vunpack.c.l.b16 %v261
    %v1431 = vunpack.c.h.b16 %v261
    %v1432 = vunpack.c.l.b16 %v262
    %v1433 = vunpack.c.h.b16 %v262
    %v1434 = vunpack.c.l.b16 %v263
    %v1435 = vunpack.c.h.b16 %v263
    %v1436 = vunpack.c.l.b16 %v264
    %v1437 = vunpack.c.h.b16 %v264
    %v1438 = vunpack.c.l.b16 %v265
    %v1439 = vunpack.c.h.b16 %v265
    %v1440 = vunpack.c.l.b16 %v266
    %v1441 = vunpack.c.h.b16 %v266
    %v1442 = vunpack.c.l.b16 %v267
    %v1443 = vunpack.c.h.b16 %v267
    %v1444 = vunpack.c.l.b16 %v268
    %v1445 = vunpack.c.h.b16 %v268
    %v1446 = vunpack.c.l.b16 %v269
    %v1447 = vunpack.c.h.b16 %v269
    %v1448 = vunpack.c.l.b16 %v270
    %v1449 = vunpack.c.h.b16 %v270
    %v1450 = vunpack.c.l.b16 %v271
    %v1451 = vunpack.c.h.b16 %v271
    %v1452 = vunpack.c.l.b16 %v272
    %v1453 = vunpack.c.h.b16 %v272
    %v1454 = vunpack.c.l.b16 %v273
    %v1455 = vunpack.c.h.b16 %v273
    %v1456 = vunpack.c.l.b16 %v274
    %v1457 = vunpack.c.h.b16 %v274
    %v1458 = vunpack.c.l.b16 %v275
    %v1459 = vunpack.c.h.b16 %v275
    %v1460 = vunpack.c.l.b16 %v276
    %v1461 = vunpack.c.h.b16 %v276
    %v1462 = vunpack.c.l.b16 %v277
    %v1463 = vunpack.c.h.b16 %v277
    %v1464 = vunpack.c.l.b16 %v278
    %v1465 = vunpack.c.h.b16 %v278
    %v1466 = vunpack.c.l.b16 %v279
    %v1467 = vunpack.c.h.b16 %v279
    %v1468 = vunpack.c.l.b16 %v280
    %v1469 = vunpack.c.h.b16 %v280
    %v1470 = vunpack.c.l.b16 %v281
    %v1471 = vunpack.c.h.b16 %v281
    %v1472 = vunpack.c.l.b16 %v282
    %v1473 = vunpack.c.h.b16 %v282
    %v1474 = vunpack.c.l.b16 %v283
    %v1475 = vunpack.c.h.b16 %v283
    %v1476 = vunpack.c.l.b16 %v284
    %v1477 = vunpack.c.h.b16 %v284
    %v1478 = vunpack.c.l.b16 %v285
    %v1479 = vunpack.c.h.b16 %v285
    %v1480 = vunpack.c.l.b16 %v286
    %v1481 = vunpack.c.h.b16 %v286
    %v1482 = vunpack.c.l.b16 %v287
    %v1483 = vunpack.c.h.b16 %v287
    %v1484 = vunpack.c.l.b16 %v288
    %v1485 = vunpack.c.h.b16 %v288
    %v1486 = vunpack.c.l.b16 %v289
    %v1487 = vunpack.c.h.b16 %v289
    %v1488 = vunpack.c.l.b16 %v290
    %v1489 = vunpack.c.h.b16 %v290
    %v1490 = vunpack.c.l.b16 %v291
    %v1491 = vunpack.c.h.b16 %v291
    %v1492 = vunpack.c.l.b16 %v292
    %v1493 = vunpack.c.h.b16 %v292
    %v1494 = vunpack.c.l.b16 %v293
    %v1495 = vunpack.c.h.b16 %v293
    %v1496 = vunpack.c.l.b16 %v294
    %v1497 = vunpack.c.h.b16 %v294
    %v1498 = vunpack.c.l.b16 %v295
    %v1499 = vunpack.c.h.b16 %v295
    %v1500 = vunpack.c.l.b16 %v296
    %v1501 = vunpack.c.h.b16 %v296
    %v1502 = vunpack.c.l.b16 %v297
    %v1503 = vunpack.c.h.b16 %v297
    %v1504 = vunpack.c.l.b16 %v298
    %v1505 = vunpack.c.h.b16 %v298
    %v1506 = vunpack.c.l.b16 %v299
    %v1507 = vunpack.c.h.b16 %v299
    %v1508 = vunpack.c.l.b16 %v300
    %v1509 = vunpack.c.h.b16 %v300
    %v1510 = vunpack.c.l.b16 %v301
    %v1511 = vunpack.c.h.b16 %v301
    %v1512 = vunpack.c.l.b16 %v302
    %v1513 = vunpack.c.h.b16 %v302
    %v1514 = vunpack.c.l.b16 %v303
    %v1515 = vunpack.c.h.b16 %v303
    %v1516 = vunpack.c.l.b16 %v304
    %v1517 = vunpack.c.h.b16 %v304
    %v1518 = vunpack.c.l.b16 %v305
    %v1519 = vunpack.c.h.b16 %v305
    %v1520 = vunpack.c.l.b16 %v306
    %v1521 = vunpack.c.h.b16 %v306
    %v1522 = vunpack.c.l.b16 %v307
    %v1523 = vunpack.c.h.b16 %v307
    %v1524 = vunpack.c.l.b16 %v308
    %v1525 = vunpack.c.h.b16 %v308
    %v1526 = vunpack.c.l.b16 %v309
    %v1527 = vunpack.c.h.b16 %v309
    %v1528 = vunpack.c.l.b16 %v310
    %v1529 = vunpack.c.h.b16 %v310
    %v1530 = vunpack.c.l.b16 %v311
    %v1531 = vunpack.c.h.b16 %v311
    %v1532 = vunpack.c.l.b16 %v312
    %v1533 = vunpack.c.h.b16 %v312
    %v1534 = vunpack.c.l.b16 %v313
    %v1535 = vunpack.c.h.b16 %v313
    %v1536 = vunpack.c.l.b16 %v314
    %v1537 = vunpack.c.h.b16 %v314
    %v1538 = vunpack.c.l.b16 %v315
    %v1539 = vunpack.c.h.b16 %v315
    %v1540 = vunpack.c.l.b16 %v316
    %v1541 = vunpack.c.h.b16 %v316
    %v1542 = vunpack.c.l.b16 %v317
    %v1543 = vunpack.c.h.b16 %v317
    %v1544 = vunpack.c.l.b16 %v318
    %v1545 = vunpack.c.h.b16 %v318
    %v1546 = vunpack.c.l.b16 %v319
    %v1547 = vunpack.c.h.b16 %v319
    %v1548 = vunpack.c.l.b16 %v320
    %v1549 = vunpack.c.h.b16 %v320
    %v1550 = vunpack.c.l.b16 %v321
    %v1551 = vunpack.c.h.b16 %v321
    %v1552 = vunpack.c.l.b16 %v322
    %v1553 = vunpack.c.h.b16 %v322
    %v1554 = vunpack.c.l.b16 %v323
    %v1555 = vunpack.c.h.b16 %v323
    %v1556 = vunpack.c.l.b16 %v324
    %v1557 = vunpack.c.h.b16 %v324
    %v1558 = vunpack.c.l.b16 %v325
    %v1559 = vunpack.c.h.b16 %v325
    %v1560 = vunpack.c.l.b16 %v326
    %v1561 = vunpack.c.h.b16 %v326
    %v1562 = vunpack.c.l.b16 %v327
    %v1563 = vunpack.c.h.b16 %v327
    %v1564 = vunpack.c.l.b16 %v328
    %v1565 = vunpack.c.h.b16 %v328
    %v1566 = vunpack.c.l.b16 %v329
    %v1567 = vunpack.c.h.b16 %v329
    %v1568 = vunpack.c.l.b16 %v330
    %v1569 = vunpack.c.h.b16 %v330
    %v1570 = vunpack.c.l.b16 %v331
    %v1571 = vunpack.c.h.b16 %v331
    %v1572 = vunpack.c.l.b16 %v332
    %v1573 = vunpack.c.h.b16 %v332
    %v1574 = vunpack.c.l.b16 %v333
    %v1575 = vunpack.c.h.b16 %v333
    %v1576 = vunpack.c.l.b16 %v334
    %v1577 = vunpack.c.h.b16 %v334
    %v1578 = vunpack.c.l.b16 %v335
    %v1579 = vunpack.c.h.b16 %v335
    %v1580 = vunpack.c.l.b16 %v336
    %v1581 = vunpack.c.h.b16 %v336
    %v1582 = vunpack.c.l.b16 %v337
    %v1583 = vunpack.c.h.b16 %v337
    %v1584 = vunpack.c.l.b16 %v338
    %v1585 = vunpack.c.h.b16 %v338
    %v1586 = vunpack.c.l.b16 %v339
    %v1587 = vunpack.c.h.b16 %v339
    %v1588 = vunpack.c.l.b16 %v340
    %v1589 = vunpack.c.h.b16 %v340
    %v1590 = vunpack.c.l.b16 %v341
    %v1591 = vunpack.c.h.b16 %v341
    %v1592 = vunpack.c.l.b16 %v342
    %v1593 = vunpack.c.h.b16 %v342
    %v1594 = vunpack.c.l.b16 %v343
    %v1595 = vunpack.c.h.b16 %v343
    %v1596 = vunpack.c.l.b16 %v344
    %v1597 = vunpack.c.h.b16 %v344
    %v1598 = vunpack.c.l.b16 %v345
    %v1599 = vunpack.c.h.b16 %v345
    %v1600 = vunpack.c.l.b16 %v346
    %v1601 = vunpack.c.h.b16 %v346
    %v1602 = vunpack.c.l.b16 %v347
    %v1603 = vunpack.c.h.b16 %v347
    %v1604 = vunpack.c.l.b16 %v348
    %v1605 = vunpack.c.h.b16 %v348
    %v1606 = vunpack.c.l.b16 %v349
    %v1607 = vunpack.c.h.b16 %v349
    %v1608 = vunpack.c.l.b16 %v350
    %v1609 = vunpack.c.h.b16 %v350
    %v1610 = vunpack.c.l.b16 %v351
    %v1611 = vunpack.c.h.b16 %v351
    %v1612 = vunpack.c.l.b16 %v352
    %v1613 = vunpack.c.h.b16 %v352
    %v1614 = vunpack.c.l.b16 %v353
    %v1615 = vunpack.c.h.b16 %v353
    %v1616 = vunpack.c.l.b16 %v354
    %v1617 = vunpack.c.h.b16 %v354
    %v1618 = vunpack.c.l.b16 %v355
    %v1619 = vunpack.c.h.b16 %v355
    %v1620 = vunpack.c.l.b16 %v356
    %v1621 = vunpack.c.h.b16 %v356
    %v1622 = vunpack.c.l.b16 %v357
    %v1623 = vunpack.c.h.b16 %v357
    %v1624 = vunpack.c.l.b16 %v358
    %v1625 = vunpack.c.h.b16 %v358
    %v1626 = vunpack.c.l.b16 %v359
    %v1627 = vunpack.c.h.b16 %v359
    %v1628 = vunpack.c.l.b16 %v360
    %v1629 = vunpack.c.h.b16 %v360
    %v1630 = vunpack.c.l.b16 %v361
    %v1631 = vunpack.c.h.b16 %v361
    %v1632 = vunpack.c.l.b16 %v362
    %v1633 = vunpack.c.h.b16 %v362
    %v1634 = vunpack.c.l.b16 %v363
    %v1635 = vunpack.c.h.b16 %v363
    %v1636 = vunpack.c.l.b16 %v364
    %v1637 = vunpack.c.h.b16 %v364
    %v1638 = vunpack.c.l.b16 %v365
    %v1639 = vunpack.c.h.b16 %v365
    %v1640 = vunpack.c.l.b16 %v366
    %v1641 = vunpack.c.h.b16 %v366
    %v1642 = vunpack.c.l.b16 %v367
    %v1643 = vunpack.c.h.b16 %v367
    %v1644 = vunpack.c.l.b16 %v368
    %v1645 = vunpack.c.h.b16 %v368
    %v1646 = vunpack.c.l.b16 %v369
    %v1647 = vunpack.c.h.b16 %v369
    %v1648 = vunpack.c.l.b16 %v370
    %v1649 = vunpack.c.h.b16 %v370
    %v1650 = vunpack.c.l.b16 %v371
    %v1651 = vunpack.c.h.b16 %v371
    %v1652 = vunpack.c.l.b16 %v372
    %v1653 = vunpack.c.h.b16 %v372
    %v1654 = vunpack.c.l.b16 %v373
    %v1655 = vunpack.c.h.b16 %v373
    %v1656 = vunpack.c.l.b16 %v374
    %v1657 = vunpack.c.h.b16 %v374
    %v1658 = vunpack.c.l.b16 %v375
    %v1659 = vunpack.c.h.b16 %v375
    %v1660 = vunpack.c.l.b16 %v376
    %v1661 = vunpack.c.h.b16 %v376
    %v1662 = vunpack.c.l.b16 %v377
    %v1663 = vunpack.c.h.b16 %v377
    %v1664 = vunpack.c.l.b16 %v378
    %v1665 = vunpack.c.h.b16 %v378
    %v1666 = vunpack.c.l.b16 %v379
    %v1667 = vunpack.c.h.b16 %v379
    %v1668 = vunpack.c.l.b16 %v380
    %v1669 = vunpack.c.h.b16 %v380
    %v1670 = vunpack.c.l.b16 %v381
    %v1671 = vunpack.c.h.b16 %v381
    %v1672 = vunpack.c.l.b16 %v382
    %v1673 = vunpack.c.h.b16 %v382
    %v1674 = vunpack.c.l.b16 %v383
    %v1675 = vunpack.c.h.b16 %v383
    %v1676 = vunpack.c.l.b16 %v384
    %v1677 = vunpack.c.h.b16 %v384
    %v1678 = vunpack.c.l.b16 %v385
    %v1679 = vunpack.c.h.b16 %v385
    %v1680 = vunpack.c.l.b16 %v386
    %v1681 = vunpack.c.h.b16 %v386
    %v1682 = vunpack.c.l.b16 %v387
    %v1683 = vunpack.c.h.b16 %v387
    %v1684 = vunpack.c.l.b16 %v388
    %v1685 = vunpack.c.h.b16 %v388
    %v1686 = vunpack.c.l.b16 %v389
    %v1687 = vunpack.c.h.b16 %v389
    %v1688 = vunpack.c.l.b16 %v390
    %v1689 = vunpack.c.h.b16 %v390
    %v1690 = vunpack.c.l.b16 %v391
    %v1691 = vunpack.c.h.b16 %v391
    %v1692 = vunpack.c.l.b16 %v392
    %v1693 = vunpack.c.h.b16 %v392
    %v1694 = vunpack.c.l.b16 %v393
    %v1695 = vunpack.c.h.b16 %v393
    %v1696 = vunpack.c.l.b16 %v394
    %v1697 = vunpack.c.h.b16 %v394
    %v1698 = vunpack.c.l.b16 %v395
    %v1699 = vunpack.c.h.b16 %v395
    %v1700 = vunpack.c.l.b16 %v396
    %v1701 = vunpack.c.h.b16 %v396
    %v1702 = vunpack.c.l.b16 %v397
    %v1703 = vunpack.c.h.b16 %v397
    %v1704 = vunpack.c.l.b16 %v398
    %v1705 = vunpack.c.h.b16 %v398
    %v1706 = vunpack.c.l.b16 %v399
    %v1707 = vunpack.c.h.b16 %v399
    %v1708 = vunpack.c.l.b16 %v400
    %v1709 = vunpack.c.h.b16 %v400
    %v1710 = vunpack.c.l.b16 %v401
    %v1711 = vunpack.c.h.b16 %v401
    %v1712 = vunpack.c.l.b16 %v402
    %v1713 = vunpack.c.h.b16 %v402
    %v1714 = vunpack.c.l.b16 %v403
    %v1715 = vunpack.c.h.b16 %v403
    %v1716 = vunpack.c.l.b16 %v404
    %v1717 = vunpack.c.h.b16 %v404
    %v1718 = vunpack.c.l.b16 %v405
    %v1719 = vunpack.c.h.b16 %v405
    %v1720 = vunpack.c.l.b16 %v406
    %v1721 = vunpack.c.h.b16 %v406
    %v1722 = vunpack.c.l.b16 %v407
    %v1723 = vunpack.c.h.b16 %v407
    %v1724 = vunpack.c.l.b16 %v408
    %v1725 = vunpack.c.h.b16 %v408
    %v1726 = vunpack.c.l.b16 %v409
    %v1727 = vunpack.c.h.b16 %v409
    %v1728 = vunpack.c.l.b16 %v410
    %v1729 = vunpack.c.h.b16 %v410
    %v1730 = vunpack.c.l.b16 %v411
    %v1731 = vunpack.c.h.b16 %v411
    %v1732 = vunpack.c.l.b16 %v412
    %v1733 = vunpack.c.h.b16 %v412
    %v1734 = vunpack.c.l.b16 %v413
    %v1735 = vunpack.c.h.b16 %v413
    %v1736 = vunpack.c.l.b16 %v414
    %v1737 = vunpack.c.h.b16 %v414
    %v1738 = vunpack.c.l.b16 %v415
    %v1739 = vunpack.c.h.b16 %v415
    %v1740 = vunpack.c.l.b16 %v416
    %v1741 = vunpack.c.h.b16 %v416
    %v1742 = vunpack.c.l.b16 %v417
    %v1743 = vunpack.c.h.b16 %v417
    %v1744 = vunpack.c.l.b16 %v418
    %v1745 = vunpack.c.h.b16 %v418
    %v1746 = vunpack.c.l.b16 %v419
    %v1747 = vunpack.c.h.b16 %v419
    %v1748 = vunpack.c.l.b16 %v420
    %v1749 = vunpack.c.h.b16 %v420
    %v1750 = vunpack.c.l.b16 %v421
    %v1751 = vunpack.c.h.b16 %v421
    %v1752 = vunpack.c.l.b16 %v422
    %v1753 = vunpack.c.h.b16 %v422
    %v1754 = vunpack.c.l.b16 %v423
    %v1755 = vunpack.c.h.b16 %v423
    %v1756 = vunpack.c.l.b16 %v424
    %v1757 = vunpack.c.h.b16 %v424
    %v1758 = vunpack.c.l.b16 %v425
    %v1759 = vunpack.c.h.b16 %v425
    %v1760 = vunpack.c.l.b16 %v426
    %v1761 = vunpack.c.h.b16 %v426
    %v1762 = vunpack.c.l.b16 %v427
    %v1763 = vunpack.c.h.b16 %v427
    %v1764 = vunpack.c.l.b16 %v428
    %v1765 = vunpack.c.h.b16 %v428
    %v1766 = vunpack.c.l.b16 %v429
    %v1767 = vunpack.c.h.b16 %v429
    %v1768 = vunpack.c.l.b16 %v430
    %v1769 = vunpack.c.h.b16 %v430
    %v1770 = vunpack.c.l.b16 %v431
    %v1771 = vunpack.c.h.b16 %v431
    %v1772 = vunpack.c.l.b16 %v432
    %v1773 = vunpack.c.h.b16 %v432
    %v1774 = vunpack.c.l.b16 %v433
    %v1775 = vunpack.c.h.b16 %v433
    %v1776 = vunpack.c.l.b16 %v434
    %v1777 = vunpack.c.h.b16 %v434
    %v1778 = vunpack.c.l.b16 %v435
    %v1779 = vunpack.c.h.b16 %v435
    %v1780 = vunpack.c.l.b16 %v436
    %v1781 = vunpack.c.h.b16 %v436
    %v1782 = vunpack.c.l.b16 %v437
    %v1783 = vunpack.c.h.b16 %v437
    %v1784 = vunpack.c.l.b16 %v438
    %v1785 = vunpack.c.h.b16 %v438
    %v1786 = vunpack.c.l.b16 %v439
    %v1787 = vunpack.c.h.b16 %v439
    %v1788 = vunpack.c.l.b16 %v440
    %v1789 = vunpack.c.h.b16 %v440
    %v1790 = vunpack.c.l.b16 %v441
    %v1791 = vunpack.c.h.b16 %v441
    %v1792 = vunpack.c.l.b16 %v442
    %v1793 = vunpack.c.h.b16 %v442
    %v1794 = vunpack.c.l.b16 %v443
    %v1795 = vunpack.c.h.b16 %v443
    %v1796 = vunpack.c.l.b16 %v444
    %v1797 = vunpack.c.h.b16 %v444
    %v1798 = vunpack.c.l.b16 %v445
    %v1799 = vunpack.c.h.b16 %v445
    %v1800 = vunpack.c.l.b16 %v446
    %v1801 = vunpack.c.h.b16 %v446
    %v1802 = vunpack.c.l.b16 %v447
    %v1803 = vunpack.c.h.b16 %v447
    %v1804 = vunpack.c.l.b16 %v448
    %v1805 = vunpack.c.h.b16 %v448
    %v1806 = vunpack.c.l.b16 %v449
    %v1807 = vunpack.c.h.b16 %v449
    %v1808 = vunpack.c.l.b16 %v450
    %v1809 = vunpack.c.h.b16 %v450
    %v1810 = vunpack.c.l.b16 %v451
    %v1811 = vunpack.c.h.b16 %v451
    %v1812 = vunpack.c.l.b16 %v452
    %v1813 = vunpack.c.h.b16 %v452
    %v1814 = vunpack.c.l.b16 %v453
    %v1815 = vunpack.c.h.b16 %v453
    %v1816 = vunpack.c.l.b16 %v454
    %v1817 = vunpack.c.h.b16 %v454
    %v1818 = vunpack.c.l.b16 %v455
    %v1819 = vunpack.c.h.b16 %v455
    %v1820 = vunpack.c.l.b16 %v456
    %v1821 = vunpack.c.h.b16 %v456
    %v1822 = vunpack.c.l.b16 %v457
    %v1823 = vunpack.c.h.b16 %v457
    %v1824 = vunpack.c.l.b16 %v458
    %v1825 = vunpack.c.h.b16 %v458
    %v1826 = vunpack.c.l.b16 %v459
    %v1827 = vunpack.c.h.b16 %v459
    %v1828 = vunpack.c.l.b16 %v460
    %v1829 = vunpack.c.h.b16 %v460
    %v1830 = vunpack.c.l.b16 %v461
    %v1831 = vunpack.c.h.b16 %v461
    %v1832 = vunpack.c.l.b16 %v462
    %v1833 = vunpack.c.h.b16 %v462
    %v1834 = vunpack.c.l.b16 %v463
    %v1835 = vunpack.c.h.b16 %v463
    %v1836 = vunpack.c.l.b16 %v464
    %v1837 = vunpack.c.h.b16 %v464
    %v1838 = vunpack.c.l.b16 %v465
    %v1839 = vunpack.c.h.b16 %v465
    %v1840 = vunpack.c.l.b16 %v466
    %v1841 = vunpack.c.h.b16 %v466
    %v1842 = vunpack.c.l.b16 %v467
    %v1843 = vunpack.c.h.b16 %v467
    %v1844 = vunpack.c.l.b16 %v468
    %v1845 = vunpack.c.h.b16 %v468
    %v1846 = vunpack.c.l.b16 %v469
    %v1847 = vunpack.c.h.b16 %v469
    %v1848 = vunpack.c.l.b16 %v470
    %v1849 = vunpack.c.h.b16 %v470
    %v1850 = vunpack.c.l.b16 %v471
    %v1851 = vunpack.c.h.b16 %v471
    %v1852 = vunpack.c.l.b16 %v472
    %v1853 = vunpack.c.h.b16 %v472
    %v1854 = vunpack.c.l.b16 %v473
    %v1855 = vunpack.c.h.b16 %v473
    %v1856 = vunpack.c.l.b16 %v474
    %v1857 = vunpack.c.h.b16 %v474
    %v1858 = vunpack.c.l.b16 %v475
    %v1859 = vunpack.c.h.b16 %v475
    %v1860 = vunpack.c.l.b16 %v476
    %v1861 = vunpack.c.h.b16 %v476
    %v1862 = vunpack.c.l.b16 %v477
    %v1863 = vunpack.c.h.b16 %v477
    %v1864 = vunpack.c.l.b16 %v478
    %v1865 = vunpack.c.h.b16 %v478
    %v1866 = vunpack.c.l.b16 %v479
    %v1867 = vunpack.c.h.b16 %v479
    %v1868 = vunpack.c.l.b16 %v480
    %v1869 = vunpack.c.h.b16 %v480
    %v1870 = vunpack.c.l.b16 %v481
    %v1871 = vunpack.c.h.b16 %v481
    %v1872 = vunpack.c.l.b16 %v482
    %v1873 = vunpack.c.h.b16 %v482
    %v1874 = vunpack.c.l.b16 %v483
    %v1875 = vunpack.c.h.b16 %v483
    %v1876 = vunpack.c.l.b16 %v484
    %v1877 = vunpack.c.h.b16 %v484
    %v1878 = vunpack.c.l.b16 %v485
    %v1879 = vunpack.c.h.b16 %v485
    %v1880 = vunpack.c.l.b16 %v486
    %v1881 = vunpack.c.h.b16 %v486
    %v1882 = vunpack.c.l.b16 %v487
    %v1883 = vunpack.c.h.b16 %v487
    %v1884 = vunpack.c.l.b16 %v488
    %v1885 = vunpack.c.h.b16 %v488
    %v1886 = vunpack.c.l.b16 %v489
    %v1887 = vunpack.c.h.b16 %v489
    %v1888 = vunpack.c.l.b16 %v490
    %v1889 = vunpack.c.h.b16 %v490
    %v1890 = vpack.c.b16 %v996, %v990
    %v1891 = vpack.c.b16 %v997, %v991
    %v1892 = vpack.c.b16 %v998, %v992
    %v1893 = vpack.c.b16 %v999, %v993
    %v1894 = vpack.c.b16 %v1000, %v994
    %v1895 = vpack.c.b16 %v1001, %v995
    %v1896 = vpack.c.b16 %v1008, %v1002
    %v1897 = vpack.c.b16 %v1009, %v1003
    %v1898 = vpack.c.b16 %v1010, %v1004
    %v1899 = vpack.c.b16 %v1011, %v1005
    %v1900 = vpack.c.b16 %v1012, %v1006
    %v1901 = vpack.c.b16 %v1013, %v1007
    %v1902 = vpack.c.b16 %v1020, %v1014
    %v1903 = vpack.c.b16 %v1021, %v1015
    %v1904 = vpack.c.b16 %v1022, %v1016
    %v1905 = vpack.c.b16 %v1023, %v1017
    %v1906 = vpack.c.b16 %v1024, %v1018
    %v1907 = vpack.c.b16 %v1025, %v1019
    %v1908 = vpack.c.b16 %v1032, %v1026
    %v1909 = vpack.c.b16 %v1033, %v1027
    %v1910 = vpack.c.b16 %v1034, %v1028
    %v1911 = vpack.c.b16 %v1035, %v1029
    %v1912 = vpack.c.b16 %v1036, %v1030
    %v1913 = vpack.c.b16 %v1037, %v1031
    %v1914 = vpack.c.b16 %v1044, %v1038
    %v1915 = vpack.c.b16 %v1045, %v1039
    %v1916 = vpack.c.b16 %v1046, %v1040
    %v1917 = vpack.c.b16 %v1047, %v1041
    %v1918 = vpack.c.b16 %v1048, %v1042
    %v1919 = vpack.c.b16 %v1049, %v1043
    %v1920 = vpack.c.b16 %v1056, %v1050
    %v1921 = vpack.c.b16 %v1057, %v1051
    %v1922 = vpack.c.b16 %v1058, %v1052
    %v1923 = vpack.c.b16 %v1059, %v1053
    %v1924 = vpack.c.b16 %v1060, %v1054
    %v1925 = vpack.c.b16 %v1061, %v1055
    %v1926 = vpack.c.b16 %v1068, %v1062
    %v1927 = vpack.c.b16 %v1069, %v1063
    %v1928 = vpack.c.b16 %v1070, %v1064
    %v1929 = vpack.c.b16 %v1071, %v1065
    %v1930 = vpack.c.b16 %v1072, %v1066
    %v1931 = vpack.c.b16 %v1073, %v1067
    %v1932 = vpack.c.b16 %v1080, %v1074
    %v1933 = vpack.c.b16 %v1081, %v1075
    %v1934 = vpack.c.b16 %v1082, %v1076
    %v1935 = vpack.c.b16 %v1083, %v1077
    %v1936 = vpack.c.b16 %v1084, %v1078
    %v1937 = vpack.c.b16 %v1085, %v1079
    %v1938 = vpack.c.b16 %v1092, %v1086
    %v1939 = vpack.c.b16 %v1093, %v1087
    %v1940 = vpack.c.b16 %v1094, %v1088
    %v1941 = vpack.c.b16 %v1095, %v1089
    %v1942 = vpack.c.b16 %v1096, %v1090
    %v1943 = vpack.c.b16 %v1097, %v1091
    %v1944 = vpack.c.b16 %v1104, %v1098
    %v1945 = vpack.c.b16 %v1105, %v1099
    %v1946 = vpack.c.b16 %v1106, %v1100
    %v1947 = vpack.c.b16 %v1107, %v1101
    %v1948 = vpack.c.b16 %v1108, %v1102
    %v1949 = vpack.c.b16 %v1109, %v1103
    %v1950 = vpack.c.b16 %v1116, %v1110
    %v1951 = vpack.c.b16 %v1117, %v1111
    %v1952 = vpack.c.b16 %v1118, %v1112
    %v1953 = vpack.c.b16 %v1119, %v1113
    %v1954 = vpack.c.b16 %v1120, %v1114
    %v1955 = vpack.c.b16 %v1121, %v1115
    %v1956 = vpack.c.b16 %v1128, %v1122
    %v1957 = vpack.c.b16 %v1129, %v1123
    %v1958 = vpack.c.b16 %v1130, %v1124
    %v1959 = vpack.c.b16 %v1131, %v1125
    %v1960 = vpack.c.b16 %v1132, %v1126
    %v1961 = vpack.c.b16 %v1133, %v1127
    %v1962 = vpack.c.b16 %v1140, %v1134
    %v1963 = vpack.c.b16 %v1141, %v1135
    %v1964 = vpack.c.b16 %v1142, %v1136
    %v1965 = vpack.c.b16 %v1143, %v1137
    %v1966 = vpack.c.b16 %v1144, %v1138
    %v1967 = vpack.c.b16 %v1145, %v1139
    %v1968 = vpack.c.b16 %v1152, %v1146
    %v1969 = vpack.c.b16 %v1153, %v1147
    %v1970 = vpack.c.b16 %v1154, %v1148
    %v1971 = vpack.c.b16 %v1155, %v1149
    %v1972 = vpack.c.b16 %v1156, %v1150
    %v1973 = vpack.c.b16 %v1157, %v1151
    %v1974 = vpack.c.b16 %v1164, %v1158
    %v1975 = vpack.c.b16 %v1165, %v1159
    %v1976 = vpack.c.b16 %v1166, %v1160
    %v1977 = vpack.c.b16 %v1167, %v1161
    %v1978 = vpack.c.b16 %v1168, %v1162
    %v1979 = vpack.c.b16 %v1169, %v1163
    %v1980 = vpack.c.b16 %v1176, %v1170
    %v1981 = vpack.c.b16 %v1177, %v1171
    %v1982 = vpack.c.b16 %v1178, %v1172
    %v1983 = vpack.c.b16 %v1179, %v1173
    %v1984 = vpack.c.b16 %v1180, %v1174
    %v1985 = vpack.c.b16 %v1181, %v1175
    %v1986 = vpack.c.b16 %v1188, %v1182
    %v1987 = vpack.c.b16 %v1189, %v1183
    %v1988 = vpack.c.b16 %v1190, %v1184
    %v1989 = vpack.c.b16 %v1191, %v1185
    %v1990 = vpack.c.b16 %v1192, %v1186
    %v1991 = vpack.c.b16 %v1193, %v1187
    %v1992 = vpack.c.b16 %v1200, %v1194
    %v1993 = vpack.c.b16 %v1201, %v1195
    %v1994 = vpack.c.b16 %v1202, %v1196
    %v1995 = vpack.c.b16 %v1203, %v1197
    %v1996 = vpack.c.b16 %v1204, %v1198
    %v1997 = vpack.c.b16 %v1205, %v1199
    %v1998 = vpack.c.b16 %v1212, %v1206
    %v1999 = vpack.c.b16 %v1213, %v1207
    %v2000 = vpack.c.b16 %v1214, %v1208
    %v2001 = vpack.c.b16 %v1215, %v1209
    %v2002 = vpack.c.b16 %v1216, %v1210
    %v2003 = vpack.c.b16 %v1217, %v1211
    %v2004 = vpack.c.b16 %v1224, %v1218
    %v2005 = vpack.c.b16 %v1225, %v1219
    %v2006 = vpack.c.b16 %v1226, %v1220
    %v2007 = vpack.c.b16 %v1227, %v1221
    %v2008 = vpack.c.b16 %v1228, %v1222
    %v2009 = vpack.c.b16 %v1229, %v1223
    %v2010 = vpack.c.b16 %v1236, %v1230
    %v2011 = vpack.c.b16 %v1237, %v1231
    %v2012 = vpack.c.b16 %v1238, %v1232
    %v2013 = vpack.c.b16 %v1239, %v1233
    %v2014 = vpack.c.b16 %v1240, %v1234
    %v2015 = vpack.c.b16 %v1241, %v1235
    %v2016 = vpack.c.b16 %v1248, %v1242
    %v2017 = vpack.c.b16 %v1249, %v1243
    %v2018 = vpack.c.b16 %v1250, %v1244
    %v2019 = vpack.c.b16 %v1251, %v1245
    %v2020 = vpack.c.b16 %v1252, %v1246
    %v2021 = vpack.c.b16 %v1253, %v1247
    %v2022 = vpack.c.b16 %v1260, %v1254
    %v2023 = vpack.c.b16 %v1261, %v1255
    %v2024 = vpack.c.b16 %v1262, %v1256
    %v2025 = vpack.c.b16 %v1263, %v1257
    %v2026 = vpack.c.b16 %v1264, %v1258
    %v2027 = vpack.c.b16 %v1265, %v1259
    %v2028 = vpack.c.b16 %v1272, %v1266
    %v2029 = vpack.c.b16 %v1273, %v1267
    %v2030 = vpack.c.b16 %v1274, %v1268
    %v2031 = vpack.c.b16 %v1275, %v1269
    %v2032 = vpack.c.b16 %v1276, %v1270
    %v2033 = vpack.c.b16 %v1277, %v1271
    %v2034 = vpack.c.b16 %v1284, %v1278
    %v2035 = vpack.c.b16 %v1285, %v1279
    %v2036 = vpack.c.b16 %v1286, %v1280
    %v2037 = vpack.c.b16 %v1287, %v1281
    %v2038 = vpack.c.b16 %v1288, %v1282
    %v2039 = vpack.c.b16 %v1289, %v1283
    %v2040 = vpack.c.b16 %v1296, %v1290
    %v2041 = vpack.c.b16 %v1297, %v1291
    %v2042 = vpack.c.b16 %v1298, %v1292
    %v2043 = vpack.c.b16 %v1299, %v1293
    %v2044 = vpack.c.b16 %v1300, %v1294
    %v2045 = vpack.c.b16 %v1301, %v1295
    %v2046 = vpack.c.b16 %v1308, %v1302
    %v2047 = vpack.c.b16 %v1309, %v1303
    %v2048 = vpack.c.b16 %v1310, %v1304
    %v2049 = vpack.c.b16 %v1311, %v1305
    %v2050 = vpack.c.b16 %v1312, %v1306
    %v2051 = vpack.c.b16 %v1313, %v1307
    %v2052 = vpack.c.b16 %v1320, %v1314
    %v2053 = vpack.c.b16 %v1321, %v1315
    %v2054 = vpack.c.b16 %v1322, %v1316
    %v2055 = vpack.c.b16 %v1323, %v1317
    %v2056 = vpack.c.b16 %v1324, %v1318
    %v2057 = vpack.c.b16 %v1325, %v1319
    %v2058 = vpack.c.b16 %v1332, %v1326
    %v2059 = vpack.c.b16 %v1333, %v1327
    %v2060 = vpack.c.b16 %v1334, %v1328
    %v2061 = vpack.c.b16 %v1335, %v1329
    %v2062 = vpack.c.b16 %v1336, %v1330
    %v2063 = vpack.c.b16 %v1337, %v1331
    %v2064 = vpack.c.b16 %v1344, %v1338
    %v2065 = vpack.c.b16 %v1345, %v1339
    %v2066 = vpack.c.b16 %v1346, %v1340
    %v2067 = vpack.c.b16 %v1347, %v1341
    %v2068 = vpack.c.b16 %v1348, %v1342
    %v2069 = vpack.c.b16 %v1349, %v1343
    %v2070 = vpack.c.b16 %v1356, %v1350
    %v2071 = vpack.c.b16 %v1357, %v1351
    %v2072 = vpack.c.b16 %v1358, %v1352
    %v2073 = vpack.c.b16 %v1359, %v1353
    %v2074 = vpack.c.b16 %v1360, %v1354
    %v2075 = vpack.c.b16 %v1361, %v1355
    %v2076 = vpack.c.b16 %v1368, %v1362
    %v2077 = vpack.c.b16 %v1369, %v1363
    %v2078 = vpack.c.b16 %v1370, %v1364
    %v2079 = vpack.c.b16 %v1371, %v1365
    %v2080 = vpack.c.b16 %v1372, %v1366
    %v2081 = vpack.c.b16 %v1373, %v1367
    %v2082 = vpack.c.b16 %v1380, %v1374
    %v2083 = vpack.c.b16 %v1381, %v1375
    %v2084 = vpack.c.b16 %v1382, %v1376
    %v2085 = vpack.c.b16 %v1383, %v1377
    %v2086 = vpack.c.b16 %v1384, %v1378
    %v2087 = vpack.c.b16 %v1385, %v1379
    %v2088 = vpack.c.b16 %v1392, %v1386
    %v2089 = vpack.c.b16 %v1393, %v1387
    %v2090 = vpack.c.b16 %v1394, %v1388
    %v2091 = vpack.c.b16 %v1395, %v1389
    %v2092 = vpack.c.b16 %v1396, %v1390
    %v2093 = vpack.c.b16 %v1397, %v1391
    %v2094 = vpack.c.b16 %v1404, %v1398
    %v2095 = vpack.c.b16 %v1405, %v1399
    %v2096 = vpack.c.b16 %v1406, %v1400
    %v2097 = vpack.c.b16 %v1407, %v1401
    %v2098 = vpack.c.b16 %v1408, %v1402
    %v2099 = vpack.c.b16 %v1409, %v1403
    %v2100 = vpack.c.b16 %v1416, %v1410
    %v2101 = vpack.c.b16 %v1417, %v1411
    %v2102 = vpack.c.b16 %v1418, %v1412
    %v2103 = vpack.c.b16 %v1419, %v1413
    %v2104 = vpack.c.b16 %v1420, %v1414
    %v2105 = vpack.c.b16 %v1421, %v1415
    %v2106 = vpack.c.b16 %v1428, %v1422
    %v2107 = vpack.c.b16 %v1429, %v1423
    %v2108 = vpack.c.b16 %v1430, %v1424
    %v2109 = vpack.c.b16 %v1431, %v1425
    %v2110 = vpack.c.b16 %v1432, %v1426
    %v2111 = vpack.c.b16 %v1433, %v1427
    %v2112 = vpack.c.b16 %v1440, %v1434
    %v2113 = vpack.c.b16 %v1441, %v1435
    %v2114 = vpack.c.b16 %v1442, %v1436
    %v2115 = vpack.c.b16 %v1443, %v1437
    %v2116 = vpack.c.b16 %v1444, %v1438
    %v2117 = vpack.c.b16 %v1445, %v1439
    %v2118 = vpack.c.b16 %v1452, %v1446
    %v2119 = vpack.c.b16 %v1453, %v1447
    %v2120 = vpack.c.b16 %v1454, %v1448
    %v2121 = vpack.c.b16 %v1455, %v1449
    %v2122 = vpack.c.b16 %v1456, %v1450
    %v2123 = vpack.c.b16 %v1457, %v1451
    %v2124 = vpack.c.b16 %v1464, %v1458
    %v2125 = vpack.c.b16 %v1465, %v1459
    %v2126 = vpack.c.b16 %v1466, %v1460
    %v2127 = vpack.c.b16 %v1467, %v1461
    %v2128 = vpack.c.b16 %v1468, %v1462
    %v2129 = vpack.c.b16 %v1469, %v1463
    %v2130 = vpack.c.b16 %v1476, %v1470
    %v2131 = vpack.c.b16 %v1477, %v1471
    %v2132 = vpack.c.b16 %v1478, %v1472
    %v2133 = vpack.c.b16 %v1479, %v1473
    %v2134 = vpack.c.b16 %v1480, %v1474
    %v2135 = vpack.c.b16 %v1481, %v1475
    %v2136 = vpack.c.b16 %v1488, %v1482
    %v2137 = vpack.c.b16 %v1489, %v1483
    %v2138 = vpack.c.b16 %v1490, %v1484
    %v2139 = vpack.c.b16 %v1491, %v1485
    %v2140 = vpack.c.b16 %v1492, %v1486
    %v2141 = vpack.c.b16 %v1493, %v1487
    %v2142 = vpack.c.b16 %v1500, %v1494
    %v2143 = vpack.c.b16 %v1501, %v1495
    %v2144 = vpack.c.b16 %v1502, %v1496
    %v2145 = vpack.c.b16 %v1503, %v1497
    %v2146 = vpack.c.b16 %v1504, %v1498
    %v2147 = vpack.c.b16 %v1505, %v1499
    %v2148 = vpack.c.b16 %v1512, %v1506
    %v2149 = vpack.c.b16 %v1513, %v1507
    %v2150 = vpack.c.b16 %v1514, %v1508
    %v2151 = vpack.c.b16 %v1515, %v1509
    %v2152 = vpack.c.b16 %v1516, %v1510
    %v2153 = vpack.c.b16 %v1517, %v1511
    %v2154 = vpack.c.b16 %v1524, %v1518
    %v2155 = vpack.c.b16 %v1525, %v1519
    %v2156 = vpack.c.b16 %v1526, %v1520
    %v2157 = vpack.c.b16 %v1527, %v1521
    %v2158 = vpack.c.b16 %v1528, %v1522
    %v2159 = vpack.c.b16 %v1529, %v1523
    %v2160 = vpack.c.b16 %v1536, %v1530
    %v2161 = vpack.c.b16 %v1537, %v1531
    %v2162 = vpack.c.b16 %v1538, %v1532
    %v2163 = vpack.c.b16 %v1539, %v1533
    %v2164 = vpack.c.b16 %v1540, %v1534
    %v2165 = vpack.c.b16 %v1541, %v1535
    %v2166 = vpack.c.b16 %v1548, %v1542
    %v2167 = vpack.c.b16 %v1549, %v1543
    %v2168 = vpack.c.b16 %v1550, %v1544
    %v2169 = vpack.c.b16 %v1551, %v1545
    %v2170 = vpack.c.b16 %v1552, %v1546
    %v2171 = vpack.c.b16 %v1553, %v1547
    %v2172 = vpack.c.b16 %v1560, %v1554
    %v2173 = vpack.c.b16 %v1561, %v1555
    %v2174 = vpack.c.b16 %v1562, %v1556
    %v2175 = vpack.c.b16 %v1563, %v1557
    %v2176 = vpack.c.b16 %v1564, %v1558
    %v2177 = vpack.c.b16 %v1565, %v1559
    %v2178 = vpack.c.b16 %v1572, %v1566
    %v2179 = vpack.c.b16 %v1573, %v1567
    %v2180 = vpack.c.b16 %v1574, %v1568
    %v2181 = vpack.c.b16 %v1575, %v1569
    %v2182 = vpack.c.b16 %v1576, %v1570
    %v2183 = vpack.c.b16 %v1577, %v1571
    %v2184 = vpack.c.b16 %v1584, %v1578
    %v2185 = vpack.c.b16 %v1585, %v1579
    %v2186 = vpack.c.b16 %v1586, %v1580
    %v2187 = vpack.c.b16 %v1587, %v1581
    %v2188 = vpack.c.b16 %v1588, %v1582
    %v2189 = vpack.c.b16 %v1589, %v1583
    %v2190 = vpack.c.b16 %v1596, %v1590
    %v2191 = vpack.c.b16 %v1597, %v1591
    %v2192 = vpack.c.b16 %v1598, %v1592
    %v2193 = vpack.c.b16 %v1599, %v1593
    %v2194 = vpack.c.b16 %v1600, %v1594
    %v2195 = vpack.c.b16 %v1601, %v1595
    %v2196 = vpack.c.b16 %v1608, %v1602
    %v2197 = vpack.c.b16 %v1609, %v1603
    %v2198 = vpack.c.b16 %v1610, %v1604
    %v2199 = vpack.c.b16 %v1611, %v1605
    %v2200 = vpack.c.b16 %v1612, %v1606
    %v2201 = vpack.c.b16 %v1613, %v1607
    %v2202 = vpack.c.b16 %v1620, %v1614
    %v2203 = vpack.c.b16 %v1621, %v1615
    %v2204 = vpack.c.b16 %v1622, %v1616
    %v2205 = vpack.c.b16 %v1623, %v1617
    %v2206 = vpack.c.b16 %v1624, %v1618
    %v2207 = vpack.c.b16 %v1625, %v1619
    %v2208 = vpack.c.b16 %v1632, %v1626
    %v2209 = vpack.c.b16 %v1633, %v1627
    %v2210 = vpack.c.b16 %v1634, %v1628
    %v2211 = vpack.c.b16 %v1635, %v1629
    %v2212 = vpack.c.b16 %v1636, %v1630
    %v2213 = vpack.c.b16 %v1637, %v1631
    %v2214 = vpack.c.b16 %v1644, %v1638
    %v2215 = vpack.c.b16 %v1645, %v1639
    %v2216 = vpack.c.b16 %v1646, %v1640
    %v2217 = vpack.c.b16 %v1647, %v1641
    %v2218 = vpack.c.b16 %v1648, %v1642
    %v2219 = vpack.c.b16 %v1649, %v1643
    %v2220 = vpack.c.b16 %v1656, %v1650
    %v2221 = vpack.c.b16 %v1657, %v1651
    %v2222 = vpack.c.b16 %v1658, %v1652
    %v2223 = vpack.c.b16 %v1659, %v1653
    %v2224 = vpack.c.b16 %v1660, %v1654
    %v2225 = vpack.c.b16 %v1661, %v1655
    %v2226 = vpack.c.b16 %v1668, %v1662
    %v2227 = vpack.c.b16 %v1669, %v1663
    %v2228 = vpack.c.b16 %v1670, %v1664
    %v2229 = vpack.c.b16 %v1671, %v1665
    %v2230 = vpack.c.b16 %v1672, %v1666
    %v2231 = vpack.c.b16 %v1673, %v1667
    %v2232 = vpack.c.b16 %v1680, %v1674
    %v2233 = vpack.c.b16 %v1681, %v1675
    %v2234 = vpack.c.b16 %v1682, %v1676
    %v2235 = vpack.c.b16 %v1683, %v1677
    %v2236 = vpack.c.b16 %v1684, %v1678
    %v2237 = vpack.c.b16 %v1685, %v1679
    %v2238 = vpack.c.b16 %v1692, %v1686
    %v2239 = vpack.c.b16 %v1693, %v1687
    %v2240 = vpack.c.b16 %v1694, %v1688
    %v2241 = vpack.c.b16 %v1695, %v1689
    %v2242 = vpack.c.b16 %v1696, %v1690
    %v2243 = vpack.c.b16 %v1697, %v1691
    %v2244 = vpack.c.b16 %v1704, %v1698
    %v2245 = vpack.c.b16 %v1705, %v1699
    %v2246 = vpack.c.b16 %v1706, %v1700
    %v2247 = vpack.c.b16 %v1707, %v1701
    %v2248 = vpack.c.b16 %v1708, %v1702
    %v2249 = vpack.c.b16 %v1709, %v1703
    %v2250 = vpack.c.b16 %v1716, %v1710
    %v2251 = vpack.c.b16 %v1717, %v1711
    %v2252 = vpack.c.b16 %v1718, %v1712
    %v2253 = vpack.c.b16 %v1719, %v1713
    %v2254 = vpack.c.b16 %v1720, %v1714
    %v2255 = vpack.c.b16 %v1721, %v1715
    %v2256 = vpack.c.b16 %v1728, %v1722
    %v2257 = vpack.c.b16 %v1729, %v1723
    %v2258 = vpack.c.b16 %v1730, %v1724
    %v2259 = vpack.c.b16 %v1731, %v1725
    %v2260 = vpack.c.b16 %v1732, %v1726
    %v2261 = vpack.c.b16 %v1733, %v1727
    %v2262 = vpack.c.b16 %v1740, %v1734
    %v2263 = vpack.c.b16 %v1741, %v1735
    %v2264 = vpack.c.b16 %v1742, %v1736
    %v2265 = vpack.c.b16 %v1743, %v1737
    %v2266 = vpack.c.b16 %v1744, %v1738
    %v2267 = vpack.c.b16 %v1745, %v1739
    %v2268 = vpack.c.b16 %v1752, %v1746
    %v2269 = vpack.c.b16 %v1753, %v1747
    %v2270 = vpack.c.b16 %v1754, %v1748
    %v2271 = vpack.c.b16 %v1755, %v1749
    %v2272 = vpack.c.b16 %v1756, %v1750
    %v2273 = vpack.c.b16 %v1757, %v1751
    %v2274 = vpack.c.b16 %v1764, %v1758
    %v2275 = vpack.c.b16 %v1765, %v1759
    %v2276 = vpack.c.b16 %v1766, %v1760
    %v2277 = vpack.c.b16 %v1767, %v1761
    %v2278 = vpack.c.b16 %v1768, %v1762
    %v2279 = vpack.c.b16 %v1769, %v1763
    %v2280 = vpack.c.b16 %v1776, %v1770
    %v2281 = vpack.c.b16 %v1777, %v1771
    %v2282 = vpack.c.b16 %v1778, %v1772
    %v2283 = vpack.c.b16 %v1779, %v1773
    %v2284 = vpack.c.b16 %v1780, %v1774
    %v2285 = vpack.c.b16 %v1781, %v1775
    %v2286 = vpack.c.b16 %v1788, %v1782
    %v2287 = vpack.c.b16 %v1789, %v1783
    %v2288 = vpack.c.b16 %v1790, %v1784
    %v2289 = vpack.c.b16 %v1791, %v1785
    %v2290 = vpack.c.b16 %v1792, %v1786
    %v2291 = vpack.c.b16 %v1793, %v1787
    %v2292 = vpack.c.b16 %v1800, %v1794
    %v2293 = vpack.c.b16 %v1801, %v1795
    %v2294 = vpack.c.b16 %v1802, %v1796
    %v2295 = vpack.c.b16 %v1803, %v1797
    %v2296 = vpack.c.b16 %v1804, %v1798
    %v2297 = vpack.c.b16 %v1805, %v1799
    %v2298 = vpack.c.b16 %v1812, %v1806
    %v2299 = vpack.c.b16 %v1813, %v1807
    %v2300 = vpack.c.b16 %v1814, %v1808
    %v2301 = vpack.c.b16 %v1815, %v1809
    %v2302 = vpack.c.b16 %v1816, %v1810
    %v2303 = vpack.c.b16 %v1817, %v1811
    %v2304 = vpack.c.b16 %v1824, %v1818
    %v2305 = vpack.c.b16 %v1825, %v1819
    %v2306 = vpack.c.b16 %v1826, %v1820
    %v2307 = vpack.c.b16 %v1827, %v1821
    %v2308 = vpack.c.b16 %v1828, %v1822
    %v2309 = vpack.c.b16 %v1829, %v1823
    %v2310 = vpack.c.b16 %v1836, %v1830
    %v2311 = vpack.c.b16 %v1837, %v1831
    %v2312 = vpack.c.b16 %v1838, %v1832
    %v2313 = vpack.c.b16 %v1839, %v1833
    %v2314 = vpack.c.b16 %v1840, %v1834
    %v2315 = vpack.c.b16 %v1841, %v1835
    %v2316 = vpack.c.b16 %v1848, %v1842
    %v2317 = vpack.c.b16 %v1849, %v1843
    %v2318 = vpack.c.b16 %v1850, %v1844
    %v2319 = vpack.c.b16 %v1851, %v1845
    %v2320 = vpack.c.b16 %v1852, %v1846
    %v2321 = vpack.c.b16 %v1853, %v1847
    %v2322 = vpack.c.b16 %v1860, %v1854
    %v2323 = vpack.c.b16 %v1861, %v1855
    %v2324 = vpack.c.b16 %v1862, %v1856
    %v2325 = vpack.c.b16 %v1863, %v1857
    %v2326 = vpack.c.b16 %v1864, %v1858
    %v2327 = vpack.c.b16 %v1865, %v1859
    %v2328 = vpack.c.b16 %v1872, %v1866
    %v2329 = vpack.c.b16 %v1873, %v1867
    %v2330 = vpack.c.b16 %v1874, %v1868
    %v2331 = vpack.c.b16 %v1875, %v1869
    %v2332 = vpack.c.b16 %v1876, %v1870
    %v2333 = vpack.c.b16 %v1877, %v1871
    %v2334 = vpack.c.b16 %v1884, %v1878
    %v2335 = vpack.c.b16 %v1885, %v1879
    %v2336 = vpack.c.b16 %v1886, %v1880
    %v2337 = vpack.c.b16 %v1887, %v1881
    %v2338 = vpack.c.b16 %v1888, %v1882
    %v2339 = vpack.c.b16 %v1889, %v1883
    %vm2790 = vcmask 392192
    %v2792 = vsel %vm2790, %v530, 0
    %2794 = vmatprep.subr.bf16.mxu0 %v1933
    %2795 = vmatpush1.bf16.msra.mxu0 %v1932
    %2796 = vmatprep.subr.bf16.mxu0 %v1927
    %2797 = vmatpush1.bf16.msra.mxu0 %v1926
    %2798 = vmatprep.subr.bf16.mxu0 %v1921
    %2799 = vmatpush1.bf16.msra.mxu0 %v1920
    %2800 = vmatprep.subr.bf16.mxu0 %v1915
    %2801 = vmatpush1.bf16.msra.mxu0 %v1914
    %2802 = vmatprep.subr.bf16.mxu0 %v1909
    %2803 = vmatpush1.bf16.msra.mxu0 %v1908
    %2804 = vmatprep.subr.bf16.mxu0 %v1903
    %2805 = vmatpush1.bf16.msra.mxu0 %v1902
    %2806 = vmatprep.subr.bf16.mxu0 %v1897
    %2807 = vmatpush1.bf16.msra.mxu0 %v1896
    %2808 = vmatprep.subr.bf16.mxu0 %v1891
    %2809 = vmatpush1.bf16.msra.mxu0 %v1890
    %2810 = vmatprep.subr.bf16.mxu0 %v1981
    %2811 = vmatpush2.bf16.msra.mxu0 %v1980
    %2812 = vmatprep.subr.bf16.mxu0 %v1975
    %2813 = vmatpush2.bf16.msra.mxu0 %v1974
    %2814 = vmatprep.subr.bf16.mxu0 %v1969
    %2815 = vmatpush2.bf16.msra.mxu0 %v1968
    %2816 = vmatprep.subr.bf16.mxu0 %v1963
    %2817 = vmatpush2.bf16.msra.mxu0 %v1962
    %2818 = vmatprep.subr.bf16.mxu0 %v1957
    %2819 = vmatpush2.bf16.msra.mxu0 %v1956
    %2820 = vmatprep.subr.bf16.mxu0 %v1951
    %2821 = vmatpush2.bf16.msra.mxu0 %v1950
    %2822 = vmatprep.subr.bf16.mxu0 %v1945
    %2823 = vmatpush2.bf16.msra.mxu0 %v1944
    %2824 = vmatprep.subr.bf16.mxu0 %v1939
    %2825 = vmatpush2.bf16.msra.mxu0 %v1938
    %2826 = vmatprep.mubr.bf16.mxu0 %v522
    %2827 = vmatmul.mubr.bf16.gmra.mxu0 %v521
    %v2828 = vpop.f32.mrf.mxu0
    %v2829 = vadd.f32 0.0, %v2828
    %v2830 = vpop.f32.mrf.mxu0
    %v2831 = vadd.f32 0.0, %v2830
    %v2832 = vpop.f32.mrf.mxu0
    %v2833 = vadd.f32 0.0, %v2832
    %v2834 = vpop.f32.mrf.mxu0
    %v2835 = vadd.f32 0.0, %v2834
    %2836 = vdwg.mxu0
    %2837 = vmatprep.subr.bf16.mxu0 %v2029
    %2838 = vmatpush1.bf16.msra.mxu0 %v2028
    %2839 = vmatprep.subr.bf16.mxu0 %v2023
    %2840 = vmatpush1.bf16.msra.mxu0 %v2022
    %2841 = vmatprep.subr.bf16.mxu0 %v2017
    %2842 = vmatpush1.bf16.msra.mxu0 %v2016
    %2843 = vmatprep.subr.bf16.mxu0 %v2011
    %2844 = vmatpush1.bf16.msra.mxu0 %v2010
    %2845 = vmatprep.subr.bf16.mxu0 %v2005
    %2846 = vmatpush1.bf16.msra.mxu0 %v2004
    %2847 = vmatprep.subr.bf16.mxu0 %v1999
    %2848 = vmatpush1.bf16.msra.mxu0 %v1998
    %2849 = vmatprep.subr.bf16.mxu0 %v1993
    %2850 = vmatpush1.bf16.msra.mxu0 %v1992
    %2851 = vmatprep.subr.bf16.mxu0 %v1987
    %2852 = vmatpush1.bf16.msra.mxu0 %v1986
    %2853 = vmatprep.subr.bf16.mxu0 %v2077
    %2854 = vmatpush2.bf16.msra.mxu0 %v2076
    %2855 = vmatprep.subr.bf16.mxu0 %v2071
    %2856 = vmatpush2.bf16.msra.mxu0 %v2070
    %2857 = vmatprep.subr.bf16.mxu0 %v2065
    %2858 = vmatpush2.bf16.msra.mxu0 %v2064
    %2859 = vmatprep.subr.bf16.mxu0 %v2059
    %2860 = vmatpush2.bf16.msra.mxu0 %v2058
    %2861 = vmatprep.subr.bf16.mxu0 %v2053
    %2862 = vmatpush2.bf16.msra.mxu0 %v2052
    %2863 = vmatprep.subr.bf16.mxu0 %v2047
    %2864 = vmatpush2.bf16.msra.mxu0 %v2046
    %2865 = vmatprep.subr.bf16.mxu0 %v2041
    %2866 = vmatpush2.bf16.msra.mxu0 %v2040
    %2867 = vmatprep.subr.bf16.mxu0 %v2035
    %2868 = vmatpush2.bf16.msra.mxu0 %v2034
    %2869 = vmatprep.mubr.bf16.mxu0 %v524
    %2870 = vmatmul.mubr.bf16.gmra.mxu0 %v523
    %v2871 = vpop.f32.mrf.mxu0
    %v2872 = vadd.f32 %v2829, %v2871
    %v2873 = vpop.f32.mrf.mxu0
    %v2874 = vadd.f32 %v2831, %v2873
    %v2875 = vpop.f32.mrf.mxu0
    %v2876 = vadd.f32 %v2833, %v2875
    %v2877 = vpop.f32.mrf.mxu0
    %v2878 = vadd.f32 %v2835, %v2877
    %2879 = vdwg.mxu0
    %2880 = vmatprep.subr.bf16.mxu0 %v2125
    %2881 = vmatpush1.bf16.msra.mxu0 %v2124
    %2882 = vmatprep.subr.bf16.mxu0 %v2119
    %2883 = vmatpush1.bf16.msra.mxu0 %v2118
    %2884 = vmatprep.subr.bf16.mxu0 %v2113
    %2885 = vmatpush1.bf16.msra.mxu0 %v2112
    %2886 = vmatprep.subr.bf16.mxu0 %v2107
    %2887 = vmatpush1.bf16.msra.mxu0 %v2106
    %2888 = vmatprep.subr.bf16.mxu0 %v2101
    %2889 = vmatpush1.bf16.msra.mxu0 %v2100
    %2890 = vmatprep.subr.bf16.mxu0 %v2095
    %2891 = vmatpush1.bf16.msra.mxu0 %v2094
    %2892 = vmatprep.subr.bf16.mxu0 %v2089
    %2893 = vmatpush1.bf16.msra.mxu0 %v2088
    %2894 = vmatprep.subr.bf16.mxu0 %v2083
    %2895 = vmatpush1.bf16.msra.mxu0 %v2082
    %2896 = vmatprep.subr.bf16.mxu0 %v2173
    %2897 = vmatpush2.bf16.msra.mxu0 %v2172
    %2898 = vmatprep.subr.bf16.mxu0 %v2167
    %2899 = vmatpush2.bf16.msra.mxu0 %v2166
    %2900 = vmatprep.subr.bf16.mxu0 %v2161
    %2901 = vmatpush2.bf16.msra.mxu0 %v2160
    %2902 = vmatprep.subr.bf16.mxu0 %v2155
    %2903 = vmatpush2.bf16.msra.mxu0 %v2154
    %2904 = vmatprep.subr.bf16.mxu0 %v2149
    %2905 = vmatpush2.bf16.msra.mxu0 %v2148
    %2906 = vmatprep.subr.bf16.mxu0 %v2143
    %2907 = vmatpush2.bf16.msra.mxu0 %v2142
    %2908 = vmatprep.subr.bf16.mxu0 %v2137
    %2909 = vmatpush2.bf16.msra.mxu0 %v2136
    %2910 = vmatprep.subr.bf16.mxu0 %v2131
    %2911 = vmatpush2.bf16.msra.mxu0 %v2130
    %2912 = vmatprep.mubr.bf16.mxu0 %v526
    %2913 = vmatmul.mubr.bf16.gmra.mxu0 %v525
    %v2914 = vpop.f32.mrf.mxu0
    %v2915 = vadd.f32 %v2872, %v2914
    %v2916 = vpop.f32.mrf.mxu0
    %v2917 = vadd.f32 %v2874, %v2916
    %v2918 = vpop.f32.mrf.mxu0
    %v2919 = vadd.f32 %v2876, %v2918
    %v2920 = vpop.f32.mrf.mxu0
    %v2921 = vadd.f32 %v2878, %v2920
    %2922 = vdwg.mxu0
    %2923 = vmatprep.subr.bf16.mxu0 %v2221
    %2924 = vmatpush1.bf16.msra.mxu0 %v2220
    %2925 = vmatprep.subr.bf16.mxu0 %v2215
    %2926 = vmatpush1.bf16.msra.mxu0 %v2214
    %2927 = vmatprep.subr.bf16.mxu0 %v2209
    %2928 = vmatpush1.bf16.msra.mxu0 %v2208
    %2929 = vmatprep.subr.bf16.mxu0 %v2203
    %2930 = vmatpush1.bf16.msra.mxu0 %v2202
    %2931 = vmatprep.subr.bf16.mxu0 %v2197
    %2932 = vmatpush1.bf16.msra.mxu0 %v2196
    %2933 = vmatprep.subr.bf16.mxu0 %v2191
    %2934 = vmatpush1.bf16.msra.mxu0 %v2190
    %2935 = vmatprep.subr.bf16.mxu0 %v2185
    %2936 = vmatpush1.bf16.msra.mxu0 %v2184
    %2937 = vmatprep.subr.bf16.mxu0 %v2179
    %2938 = vmatpush1.bf16.msra.mxu0 %v2178
    %2939 = vmatprep.subr.bf16.mxu0 %v2269
    %2940 = vmatpush2.bf16.msra.mxu0 %v2268
    %2941 = vmatprep.subr.bf16.mxu0 %v2263
    %2942 = vmatpush2.bf16.msra.mxu0 %v2262
    %2943 = vmatprep.subr.bf16.mxu0 %v2257
    %2944 = vmatpush2.bf16.msra.mxu0 %v2256
    %2945 = vmatprep.subr.bf16.mxu0 %v2251
    %2946 = vmatpush2.bf16.msra.mxu0 %v2250
    %2947 = vmatprep.subr.bf16.mxu0 %v2245
    %2948 = vmatpush2.bf16.msra.mxu0 %v2244
    %2949 = vmatprep.subr.bf16.mxu0 %v2239
    %2950 = vmatpush2.bf16.msra.mxu0 %v2238
    %2951 = vmatprep.subr.bf16.mxu0 %v2233
    %2952 = vmatpush2.bf16.msra.mxu0 %v2232
    %2953 = vmatprep.subr.bf16.mxu0 %v2227
    %2954 = vmatpush2.bf16.msra.mxu0 %v2226
    %2955 = vmatprep.mubr.bf16.mxu0 %v528
    %2956 = vmatmul.mubr.bf16.gmra.mxu0 %v527
    %v2957 = vpop.f32.mrf.mxu0
    %v2958 = vadd.f32 %v2915, %v2957
    %v2959 = vpop.f32.mrf.mxu0
    %v2960 = vadd.f32 %v2917, %v2959
    %v2961 = vpop.f32.mrf.mxu0
    %v2962 = vadd.f32 %v2919, %v2961
    %v2963 = vpop.f32.mrf.mxu0
    %v2964 = vadd.f32 %v2921, %v2963
    %2965 = vdwg.mxu0
    %2966 = vmatprep.subr.bf16.mxu0 %v2317
    %2967 = vmatpush1.bf16.msra.mxu0 %v2316
    %2968 = vmatprep.subr.bf16.mxu0 %v2311
    %2969 = vmatpush1.bf16.msra.mxu0 %v2310
    %2970 = vmatprep.subr.bf16.mxu0 %v2305
    %2971 = vmatpush1.bf16.msra.mxu0 %v2304
    %2972 = vmatprep.subr.bf16.mxu0 %v2299
    %2973 = vmatpush1.bf16.msra.mxu0 %v2298
    %2974 = vmatprep.subr.bf16.mxu0 %v2293
    %2975 = vmatpush1.bf16.msra.mxu0 %v2292
    %2976 = vmatprep.subr.bf16.mxu0 %v2287
    %2977 = vmatpush1.bf16.msra.mxu0 %v2286
    %2978 = vmatprep.subr.bf16.mxu0 %v2281
    %2979 = vmatpush1.bf16.msra.mxu0 %v2280
    %2980 = vmatprep.subr.bf16.mxu0 %v2275
    %2981 = vmatpush1.bf16.msra.mxu0 %v2274
    %2982 = vmatprep.subr.bf16.mxu0 0
    %2983 = vmatpush2.bf16.msra.mxu0 0
    %2984 = vmatprep.subr.bf16.mxu0 0
    %2985 = vmatpush2.bf16.msra.mxu0 0
    %2986 = vmatprep.subr.bf16.mxu0 0
    %2987 = vmatpush2.bf16.msra.mxu0 0
    %2988 = vmatprep.subr.bf16.mxu0 0
    %2989 = vmatpush2.bf16.msra.mxu0 0
    %2990 = vmatprep.subr.bf16.mxu0 0
    %2991 = vmatpush2.bf16.msra.mxu0 0
    %2992 = vmatprep.subr.bf16.mxu0 %v2335
    %2993 = vmatpush2.bf16.msra.mxu0 %v2334
    %2994 = vmatprep.subr.bf16.mxu0 %v2329
    %2995 = vmatpush2.bf16.msra.mxu0 %v2328
    %2996 = vmatprep.subr.bf16.mxu0 %v2323
    %2997 = vmatpush2.bf16.msra.mxu0 %v2322
    %2998 = vmatprep.mubr.bf16.mxu0 %v2792
    %2999 = vmatmul.mubr.bf16.gmra.mxu0 %v529
    %v3000 = vpop.f32.mrf.mxu0
    %v3001 = vadd.f32 %v2958, %v3000
    %v3002 = vpop.f32.mrf.mxu0
    %v3003 = vadd.f32 %v2960, %v3002
    %v3004 = vpop.f32.mrf.mxu0
    %v3005 = vadd.f32 %v2962, %v3004
    %v3006 = vpop.f32.mrf.mxu0
    %v3007 = vadd.f32 %v2964, %v3006
    %3008 = vdwg.mxu0
    %3009 = vmatprep.subr.bf16.mxu0 %v1935
    %3010 = vmatpush1.bf16.msra.mxu0 %v1934
    %3011 = vmatprep.subr.bf16.mxu0 %v1929
    %3012 = vmatpush1.bf16.msra.mxu0 %v1928
    %3013 = vmatprep.subr.bf16.mxu0 %v1923
    %3014 = vmatpush1.bf16.msra.mxu0 %v1922
    %3015 = vmatprep.subr.bf16.mxu0 %v1917
    %3016 = vmatpush1.bf16.msra.mxu0 %v1916
    %3017 = vmatprep.subr.bf16.mxu0 %v1911
    %3018 = vmatpush1.bf16.msra.mxu0 %v1910
    %3019 = vmatprep.subr.bf16.mxu0 %v1905
    %3020 = vmatpush1.bf16.msra.mxu0 %v1904
    %3021 = vmatprep.subr.bf16.mxu0 %v1899
    %3022 = vmatpush1.bf16.msra.mxu0 %v1898
    %3023 = vmatprep.subr.bf16.mxu0 %v1893
    %3024 = vmatpush1.bf16.msra.mxu0 %v1892
    %3025 = vmatprep.subr.bf16.mxu0 %v1983
    %3026 = vmatpush2.bf16.msra.mxu0 %v1982
    %3027 = vmatprep.subr.bf16.mxu0 %v1977
    %3028 = vmatpush2.bf16.msra.mxu0 %v1976
    %3029 = vmatprep.subr.bf16.mxu0 %v1971
    %3030 = vmatpush2.bf16.msra.mxu0 %v1970
    %3031 = vmatprep.subr.bf16.mxu0 %v1965
    %3032 = vmatpush2.bf16.msra.mxu0 %v1964
    %3033 = vmatprep.subr.bf16.mxu0 %v1959
    %3034 = vmatpush2.bf16.msra.mxu0 %v1958
    %3035 = vmatprep.subr.bf16.mxu0 %v1953
    %3036 = vmatpush2.bf16.msra.mxu0 %v1952
    %3037 = vmatprep.subr.bf16.mxu0 %v1947
    %3038 = vmatpush2.bf16.msra.mxu0 %v1946
    %3039 = vmatprep.subr.bf16.mxu0 %v1941
    %3040 = vmatpush2.bf16.msra.mxu0 %v1940
    %3041 = vmatprep.mubr.bf16.mxu0 %v522
    %3042 = vmatmul.mubr.bf16.gmra.mxu0 %v521
    %v3043 = vpop.f32.mrf.mxu0
    %v3044 = vadd.f32 0.0, %v3043
    %v3045 = vpop.f32.mrf.mxu0
    %v3046 = vadd.f32 0.0, %v3045
    %v3047 = vpop.f32.mrf.mxu0
    %v3048 = vadd.f32 0.0, %v3047
    %v3049 = vpop.f32.mrf.mxu0
    %v3050 = vadd.f32 0.0, %v3049
    %3051 = vdwg.mxu0
    %3052 = vmatprep.subr.bf16.mxu0 %v2031
    %3053 = vmatpush1.bf16.msra.mxu0 %v2030
    %3054 = vmatprep.subr.bf16.mxu0 %v2025
    %3055 = vmatpush1.bf16.msra.mxu0 %v2024
    %3056 = vmatprep.subr.bf16.mxu0 %v2019
    %3057 = vmatpush1.bf16.msra.mxu0 %v2018
    %3058 = vmatprep.subr.bf16.mxu0 %v2013
    %3059 = vmatpush1.bf16.msra.mxu0 %v2012
    %3060 = vmatprep.subr.bf16.mxu0 %v2007
    %3061 = vmatpush1.bf16.msra.mxu0 %v2006
    %3062 = vmatprep.subr.bf16.mxu0 %v2001
    %3063 = vmatpush1.bf16.msra.mxu0 %v2000
    %3064 = vmatprep.subr.bf16.mxu0 %v1995
    %3065 = vmatpush1.bf16.msra.mxu0 %v1994
    %3066 = vmatprep.subr.bf16.mxu0 %v1989
    %3067 = vmatpush1.bf16.msra.mxu0 %v1988
    %3068 = vmatprep.subr.bf16.mxu0 %v2079
    %3069 = vmatpush2.bf16.msra.mxu0 %v2078
    %3070 = vmatprep.subr.bf16.mxu0 %v2073
    %3071 = vmatpush2.bf16.msra.mxu0 %v2072
    %3072 = vmatprep.subr.bf16.mxu0 %v2067
    %3073 = vmatpush2.bf16.msra.mxu0 %v2066
    %3074 = vmatprep.subr.bf16.mxu0 %v2061
    %3075 = vmatpush2.bf16.msra.mxu0 %v2060
    %3076 = vmatprep.subr.bf16.mxu0 %v2055
    %3077 = vmatpush2.bf16.msra.mxu0 %v2054
    %3078 = vmatprep.subr.bf16.mxu0 %v2049
    %3079 = vmatpush2.bf16.msra.mxu0 %v2048
    %3080 = vmatprep.subr.bf16.mxu0 %v2043
    %3081 = vmatpush2.bf16.msra.mxu0 %v2042
    %3082 = vmatprep.subr.bf16.mxu0 %v2037
    %3083 = vmatpush2.bf16.msra.mxu0 %v2036
    %3084 = vmatprep.mubr.bf16.mxu0 %v524
    %3085 = vmatmul.mubr.bf16.gmra.mxu0 %v523
    %v3086 = vpop.f32.mrf.mxu0
    %v3087 = vadd.f32 %v3044, %v3086
    %v3088 = vpop.f32.mrf.mxu0
    %v3089 = vadd.f32 %v3046, %v3088
    %v3090 = vpop.f32.mrf.mxu0
    %v3091 = vadd.f32 %v3048, %v3090
    %v3092 = vpop.f32.mrf.mxu0
    %v3093 = vadd.f32 %v3050, %v3092
    %3094 = vdwg.mxu0
    %3095 = vmatprep.subr.bf16.mxu0 %v2127
    %3096 = vmatpush1.bf16.msra.mxu0 %v2126
    %3097 = vmatprep.subr.bf16.mxu0 %v2121
    %3098 = vmatpush1.bf16.msra.mxu0 %v2120
    %3099 = vmatprep.subr.bf16.mxu0 %v2115
    %3100 = vmatpush1.bf16.msra.mxu0 %v2114
    %3101 = vmatprep.subr.bf16.mxu0 %v2109
    %3102 = vmatpush1.bf16.msra.mxu0 %v2108
    %3103 = vmatprep.subr.bf16.mxu0 %v2103
    %3104 = vmatpush1.bf16.msra.mxu0 %v2102
    %3105 = vmatprep.subr.bf16.mxu0 %v2097
    %3106 = vmatpush1.bf16.msra.mxu0 %v2096
    %3107 = vmatprep.subr.bf16.mxu0 %v2091
    %3108 = vmatpush1.bf16.msra.mxu0 %v2090
    %3109 = vmatprep.subr.bf16.mxu0 %v2085
    %3110 = vmatpush1.bf16.msra.mxu0 %v2084
    %3111 = vmatprep.subr.bf16.mxu0 %v2175
    %3112 = vmatpush2.bf16.msra.mxu0 %v2174
    %3113 = vmatprep.subr.bf16.mxu0 %v2169
    %3114 = vmatpush2.bf16.msra.mxu0 %v2168
    %3115 = vmatprep.subr.bf16.mxu0 %v2163
    %3116 = vmatpush2.bf16.msra.mxu0 %v2162
    %3117 = vmatprep.subr.bf16.mxu0 %v2157
    %3118 = vmatpush2.bf16.msra.mxu0 %v2156
    %3119 = vmatprep.subr.bf16.mxu0 %v2151
    %3120 = vmatpush2.bf16.msra.mxu0 %v2150
    %3121 = vmatprep.subr.bf16.mxu0 %v2145
    %3122 = vmatpush2.bf16.msra.mxu0 %v2144
    %3123 = vmatprep.subr.bf16.mxu0 %v2139
    %3124 = vmatpush2.bf16.msra.mxu0 %v2138
    %3125 = vmatprep.subr.bf16.mxu0 %v2133
    %3126 = vmatpush2.bf16.msra.mxu0 %v2132
    %3127 = vmatprep.mubr.bf16.mxu0 %v526
    %3128 = vmatmul.mubr.bf16.gmra.mxu0 %v525
    %v3129 = vpop.f32.mrf.mxu0
    %v3130 = vadd.f32 %v3087, %v3129
    %v3131 = vpop.f32.mrf.mxu0
    %v3132 = vadd.f32 %v3089, %v3131
    %v3133 = vpop.f32.mrf.mxu0
    %v3134 = vadd.f32 %v3091, %v3133
    %v3135 = vpop.f32.mrf.mxu0
    %v3136 = vadd.f32 %v3093, %v3135
    %3137 = vdwg.mxu0
    %3138 = vmatprep.subr.bf16.mxu0 %v2223
    %3139 = vmatpush1.bf16.msra.mxu0 %v2222
    %3140 = vmatprep.subr.bf16.mxu0 %v2217
    %3141 = vmatpush1.bf16.msra.mxu0 %v2216
    %3142 = vmatprep.subr.bf16.mxu0 %v2211
    %3143 = vmatpush1.bf16.msra.mxu0 %v2210
    %3144 = vmatprep.subr.bf16.mxu0 %v2205
    %3145 = vmatpush1.bf16.msra.mxu0 %v2204
    %3146 = vmatprep.subr.bf16.mxu0 %v2199
    %3147 = vmatpush1.bf16.msra.mxu0 %v2198
    %3148 = vmatprep.subr.bf16.mxu0 %v2193
    %3149 = vmatpush1.bf16.msra.mxu0 %v2192
    %3150 = vmatprep.subr.bf16.mxu0 %v2187
    %3151 = vmatpush1.bf16.msra.mxu0 %v2186
    %3152 = vmatprep.subr.bf16.mxu0 %v2181
    %3153 = vmatpush1.bf16.msra.mxu0 %v2180
    %3154 = vmatprep.subr.bf16.mxu0 %v2271
    %3155 = vmatpush2.bf16.msra.mxu0 %v2270
    %3156 = vmatprep.subr.bf16.mxu0 %v2265
    %3157 = vmatpush2.bf16.msra.mxu0 %v2264
    %3158 = vmatprep.subr.bf16.mxu0 %v2259
    %3159 = vmatpush2.bf16.msra.mxu0 %v2258
    %3160 = vmatprep.subr.bf16.mxu0 %v2253
    %3161 = vmatpush2.bf16.msra.mxu0 %v2252
    %3162 = vmatprep.subr.bf16.mxu0 %v2247
    %3163 = vmatpush2.bf16.msra.mxu0 %v2246
    %3164 = vmatprep.subr.bf16.mxu0 %v2241
    %3165 = vmatpush2.bf16.msra.mxu0 %v2240
    %3166 = vmatprep.subr.bf16.mxu0 %v2235
    %3167 = vmatpush2.bf16.msra.mxu0 %v2234
    %3168 = vmatprep.subr.bf16.mxu0 %v2229
    %3169 = vmatpush2.bf16.msra.mxu0 %v2228
    %3170 = vmatprep.mubr.bf16.mxu0 %v528
    %3171 = vmatmul.mubr.bf16.gmra.mxu0 %v527
    %v3172 = vpop.f32.mrf.mxu0
    %v3173 = vadd.f32 %v3130, %v3172
    %v3174 = vpop.f32.mrf.mxu0
    %v3175 = vadd.f32 %v3132, %v3174
    %v3176 = vpop.f32.mrf.mxu0
    %v3177 = vadd.f32 %v3134, %v3176
    %v3178 = vpop.f32.mrf.mxu0
    %v3179 = vadd.f32 %v3136, %v3178
    %3180 = vdwg.mxu0
    %3181 = vmatprep.subr.bf16.mxu0 %v2319
    %3182 = vmatpush1.bf16.msra.mxu0 %v2318
    %3183 = vmatprep.subr.bf16.mxu0 %v2313
    %3184 = vmatpush1.bf16.msra.mxu0 %v2312
    %3185 = vmatprep.subr.bf16.mxu0 %v2307
    %3186 = vmatpush1.bf16.msra.mxu0 %v2306
    %3187 = vmatprep.subr.bf16.mxu0 %v2301
    %3188 = vmatpush1.bf16.msra.mxu0 %v2300
    %3189 = vmatprep.subr.bf16.mxu0 %v2295
    %3190 = vmatpush1.bf16.msra.mxu0 %v2294
    %3191 = vmatprep.subr.bf16.mxu0 %v2289
    %3192 = vmatpush1.bf16.msra.mxu0 %v2288
    %3193 = vmatprep.subr.bf16.mxu0 %v2283
    %3194 = vmatpush1.bf16.msra.mxu0 %v2282
    %3195 = vmatprep.subr.bf16.mxu0 %v2277
    %3196 = vmatpush1.bf16.msra.mxu0 %v2276
    %3197 = vmatprep.subr.bf16.mxu0 0
    %3198 = vmatpush2.bf16.msra.mxu0 0
    %3199 = vmatprep.subr.bf16.mxu0 0
    %3200 = vmatpush2.bf16.msra.mxu0 0
    %3201 = vmatprep.subr.bf16.mxu0 0
    %3202 = vmatpush2.bf16.msra.mxu0 0
    %3203 = vmatprep.subr.bf16.mxu0 0
    %3204 = vmatpush2.bf16.msra.mxu0 0
    %3205 = vmatprep.subr.bf16.mxu0 0
    %3206 = vmatpush2.bf16.msra.mxu0 0
    %3207 = vmatprep.subr.bf16.mxu0 %v2337
    %3208 = vmatpush2.bf16.msra.mxu0 %v2336
    %3209 = vmatprep.subr.bf16.mxu0 %v2331
    %3210 = vmatpush2.bf16.msra.mxu0 %v2330
    %3211 = vmatprep.subr.bf16.mxu0 %v2325
    %3212 = vmatpush2.bf16.msra.mxu0 %v2324
    %3213 = vmatprep.mubr.bf16.mxu0 %v2792
    %3214 = vmatmul.mubr.bf16.gmra.mxu0 %v529
    %v3215 = vpop.f32.mrf.mxu0
    %v3216 = vadd.f32 %v3173, %v3215
    %v3217 = vpop.f32.mrf.mxu0
    %v3218 = vadd.f32 %v3175, %v3217
    %v3219 = vpop.f32.mrf.mxu0
    %v3220 = vadd.f32 %v3177, %v3219
    %v3221 = vpop.f32.mrf.mxu0
    %v3222 = vadd.f32 %v3179, %v3221
    %3223 = vdwg.mxu0
    %3224 = vmatprep.subr.bf16.mxu0 %v1937
    %3225 = vmatpush1.bf16.msra.mxu0 %v1936
    %3226 = vmatprep.subr.bf16.mxu0 %v1931
    %3227 = vmatpush1.bf16.msra.mxu0 %v1930
    %3228 = vmatprep.subr.bf16.mxu0 %v1925
    %3229 = vmatpush1.bf16.msra.mxu0 %v1924
    %3230 = vmatprep.subr.bf16.mxu0 %v1919
    %3231 = vmatpush1.bf16.msra.mxu0 %v1918
    %3232 = vmatprep.subr.bf16.mxu0 %v1913
    %3233 = vmatpush1.bf16.msra.mxu0 %v1912
    %3234 = vmatprep.subr.bf16.mxu0 %v1907
    %3235 = vmatpush1.bf16.msra.mxu0 %v1906
    %3236 = vmatprep.subr.bf16.mxu0 %v1901
    %3237 = vmatpush1.bf16.msra.mxu0 %v1900
    %3238 = vmatprep.subr.bf16.mxu0 %v1895
    %3239 = vmatpush1.bf16.msra.mxu0 %v1894
    %3240 = vmatprep.subr.bf16.mxu0 %v1985
    %3241 = vmatpush2.bf16.msra.mxu0 %v1984
    %3242 = vmatprep.subr.bf16.mxu0 %v1979
    %3243 = vmatpush2.bf16.msra.mxu0 %v1978
    %3244 = vmatprep.subr.bf16.mxu0 %v1973
    %3245 = vmatpush2.bf16.msra.mxu0 %v1972
    %3246 = vmatprep.subr.bf16.mxu0 %v1967
    %3247 = vmatpush2.bf16.msra.mxu0 %v1966
    %3248 = vmatprep.subr.bf16.mxu0 %v1961
    %3249 = vmatpush2.bf16.msra.mxu0 %v1960
    %3250 = vmatprep.subr.bf16.mxu0 %v1955
    %3251 = vmatpush2.bf16.msra.mxu0 %v1954
    %3252 = vmatprep.subr.bf16.mxu0 %v1949
    %3253 = vmatpush2.bf16.msra.mxu0 %v1948
    %3254 = vmatprep.subr.bf16.mxu0 %v1943
    %3255 = vmatpush2.bf16.msra.mxu0 %v1942
    %3256 = vmatprep.mubr.bf16.mxu0 %v522
    %3257 = vmatmul.mubr.bf16.gmra.mxu0 %v521
    %v3258 = vpop.f32.mrf.mxu0
    %v3259 = vadd.f32 0.0, %v3258
    %v3260 = vpop.f32.mrf.mxu0
    %v3261 = vadd.f32 0.0, %v3260
    %v3262 = vpop.f32.mrf.mxu0
    %v3263 = vadd.f32 0.0, %v3262
    %v3264 = vpop.f32.mrf.mxu0
    %v3265 = vadd.f32 0.0, %v3264
    %3266 = vdwg.mxu0
    %3267 = vmatprep.subr.bf16.mxu0 %v2033
    %3268 = vmatpush1.bf16.msra.mxu0 %v2032
    %3269 = vmatprep.subr.bf16.mxu0 %v2027
    %3270 = vmatpush1.bf16.msra.mxu0 %v2026
    %3271 = vmatprep.subr.bf16.mxu0 %v2021
    %3272 = vmatpush1.bf16.msra.mxu0 %v2020
    %3273 = vmatprep.subr.bf16.mxu0 %v2015
    %3274 = vmatpush1.bf16.msra.mxu0 %v2014
    %3275 = vmatprep.subr.bf16.mxu0 %v2009
    %3276 = vmatpush1.bf16.msra.mxu0 %v2008
    %3277 = vmatprep.subr.bf16.mxu0 %v2003
    %3278 = vmatpush1.bf16.msra.mxu0 %v2002
    %3279 = vmatprep.subr.bf16.mxu0 %v1997
    %3280 = vmatpush1.bf16.msra.mxu0 %v1996
    %3281 = vmatprep.subr.bf16.mxu0 %v1991
    %3282 = vmatpush1.bf16.msra.mxu0 %v1990
    %3283 = vmatprep.subr.bf16.mxu0 %v2081
    %3284 = vmatpush2.bf16.msra.mxu0 %v2080
    %3285 = vmatprep.subr.bf16.mxu0 %v2075
    %3286 = vmatpush2.bf16.msra.mxu0 %v2074
    %3287 = vmatprep.subr.bf16.mxu0 %v2069
    %3288 = vmatpush2.bf16.msra.mxu0 %v2068
    %3289 = vmatprep.subr.bf16.mxu0 %v2063
    %3290 = vmatpush2.bf16.msra.mxu0 %v2062
    %3291 = vmatprep.subr.bf16.mxu0 %v2057
    %3292 = vmatpush2.bf16.msra.mxu0 %v2056
    %3293 = vmatprep.subr.bf16.mxu0 %v2051
    %3294 = vmatpush2.bf16.msra.mxu0 %v2050
    %3295 = vmatprep.subr.bf16.mxu0 %v2045
    %3296 = vmatpush2.bf16.msra.mxu0 %v2044
    %3297 = vmatprep.subr.bf16.mxu0 %v2039
    %3298 = vmatpush2.bf16.msra.mxu0 %v2038
    %3299 = vmatprep.mubr.bf16.mxu0 %v524
    %3300 = vmatmul.mubr.bf16.gmra.mxu0 %v523
    %v3301 = vpop.f32.mrf.mxu0
    %v3302 = vadd.f32 %v3259, %v3301
    %v3303 = vpop.f32.mrf.mxu0
    %v3304 = vadd.f32 %v3261, %v3303
    %v3305 = vpop.f32.mrf.mxu0
    %v3306 = vadd.f32 %v3263, %v3305
    %v3307 = vpop.f32.mrf.mxu0
    %v3308 = vadd.f32 %v3265, %v3307
    %3309 = vdwg.mxu0
    %3310 = vmatprep.subr.bf16.mxu0 %v2129
    %3311 = vmatpush1.bf16.msra.mxu0 %v2128
    %3312 = vmatprep.subr.bf16.mxu0 %v2123
    %3313 = vmatpush1.bf16.msra.mxu0 %v2122
    %3314 = vmatprep.subr.bf16.mxu0 %v2117
    %3315 = vmatpush1.bf16.msra.mxu0 %v2116
    %3316 = vmatprep.subr.bf16.mxu0 %v2111
    %3317 = vmatpush1.bf16.msra.mxu0 %v2110
    %3318 = vmatprep.subr.bf16.mxu0 %v2105
    %3319 = vmatpush1.bf16.msra.mxu0 %v2104
    %3320 = vmatprep.subr.bf16.mxu0 %v2099
    %3321 = vmatpush1.bf16.msra.mxu0 %v2098
    %3322 = vmatprep.subr.bf16.mxu0 %v2093
    %3323 = vmatpush1.bf16.msra.mxu0 %v2092
    %3324 = vmatprep.subr.bf16.mxu0 %v2087
    %3325 = vmatpush1.bf16.msra.mxu0 %v2086
    %3326 = vmatprep.subr.bf16.mxu0 %v2177
    %3327 = vmatpush2.bf16.msra.mxu0 %v2176
    %3328 = vmatprep.subr.bf16.mxu0 %v2171
    %3329 = vmatpush2.bf16.msra.mxu0 %v2170
    %3330 = vmatprep.subr.bf16.mxu0 %v2165
    %3331 = vmatpush2.bf16.msra.mxu0 %v2164
    %3332 = vmatprep.subr.bf16.mxu0 %v2159
    %3333 = vmatpush2.bf16.msra.mxu0 %v2158
    %3334 = vmatprep.subr.bf16.mxu0 %v2153
    %3335 = vmatpush2.bf16.msra.mxu0 %v2152
    %3336 = vmatprep.subr.bf16.mxu0 %v2147
    %3337 = vmatpush2.bf16.msra.mxu0 %v2146
    %3338 = vmatprep.subr.bf16.mxu0 %v2141
    %3339 = vmatpush2.bf16.msra.mxu0 %v2140
    %3340 = vmatprep.subr.bf16.mxu0 %v2135
    %3341 = vmatpush2.bf16.msra.mxu0 %v2134
    %3342 = vmatprep.mubr.bf16.mxu0 %v526
    %3343 = vmatmul.mubr.bf16.gmra.mxu0 %v525
    %v3344 = vpop.f32.mrf.mxu0
    %v3345 = vadd.f32 %v3302, %v3344
    %v3346 = vpop.f32.mrf.mxu0
    %v3347 = vadd.f32 %v3304, %v3346
    %v3348 = vpop.f32.mrf.mxu0
    %v3349 = vadd.f32 %v3306, %v3348
    %v3350 = vpop.f32.mrf.mxu0
    %v3351 = vadd.f32 %v3308, %v3350
    %3352 = vdwg.mxu0
    %3353 = vmatprep.subr.bf16.mxu0 %v2225
    %3354 = vmatpush1.bf16.msra.mxu0 %v2224
    %3355 = vmatprep.subr.bf16.mxu0 %v2219
    %3356 = vmatpush1.bf16.msra.mxu0 %v2218
    %3357 = vmatprep.subr.bf16.mxu0 %v2213
    %3358 = vmatpush1.bf16.msra.mxu0 %v2212
    %3359 = vmatprep.subr.bf16.mxu0 %v2207
    %3360 = vmatpush1.bf16.msra.mxu0 %v2206
    %3361 = vmatprep.subr.bf16.mxu0 %v2201
    %3362 = vmatpush1.bf16.msra.mxu0 %v2200
    %3363 = vmatprep.subr.bf16.mxu0 %v2195
    %3364 = vmatpush1.bf16.msra.mxu0 %v2194
    %3365 = vmatprep.subr.bf16.mxu0 %v2189
    %3366 = vmatpush1.bf16.msra.mxu0 %v2188
    %3367 = vmatprep.subr.bf16.mxu0 %v2183
    %3368 = vmatpush1.bf16.msra.mxu0 %v2182
    %3369 = vmatprep.subr.bf16.mxu0 %v2273
    %3370 = vmatpush2.bf16.msra.mxu0 %v2272
    %3371 = vmatprep.subr.bf16.mxu0 %v2267
    %3372 = vmatpush2.bf16.msra.mxu0 %v2266
    %3373 = vmatprep.subr.bf16.mxu0 %v2261
    %3374 = vmatpush2.bf16.msra.mxu0 %v2260
    %3375 = vmatprep.subr.bf16.mxu0 %v2255
    %3376 = vmatpush2.bf16.msra.mxu0 %v2254
    %3377 = vmatprep.subr.bf16.mxu0 %v2249
    %3378 = vmatpush2.bf16.msra.mxu0 %v2248
    %3379 = vmatprep.subr.bf16.mxu0 %v2243
    %3380 = vmatpush2.bf16.msra.mxu0 %v2242
    %3381 = vmatprep.subr.bf16.mxu0 %v2237
    %3382 = vmatpush2.bf16.msra.mxu0 %v2236
    %3383 = vmatprep.subr.bf16.mxu0 %v2231
    %3384 = vmatpush2.bf16.msra.mxu0 %v2230
    %3385 = vmatprep.mubr.bf16.mxu0 %v528
    %3386 = vmatmul.mubr.bf16.gmra.mxu0 %v527
    %v3387 = vpop.f32.mrf.mxu0
    %v3388 = vadd.f32 %v3345, %v3387
    %v3389 = vpop.f32.mrf.mxu0
    %v3390 = vadd.f32 %v3347, %v3389
    %v3391 = vpop.f32.mrf.mxu0
    %v3392 = vadd.f32 %v3349, %v3391
    %v3393 = vpop.f32.mrf.mxu0
    %v3394 = vadd.f32 %v3351, %v3393
    %3395 = vdwg.mxu0
    %3396 = vmatprep.subr.bf16.mxu0 %v2321
    %3397 = vmatpush1.bf16.msra.mxu0 %v2320
    %3398 = vmatprep.subr.bf16.mxu0 %v2315
    %3399 = vmatpush1.bf16.msra.mxu0 %v2314
    %3400 = vmatprep.subr.bf16.mxu0 %v2309
    %3401 = vmatpush1.bf16.msra.mxu0 %v2308
    %3402 = vmatprep.subr.bf16.mxu0 %v2303
    %3403 = vmatpush1.bf16.msra.mxu0 %v2302
    %3404 = vmatprep.subr.bf16.mxu0 %v2297
    %3405 = vmatpush1.bf16.msra.mxu0 %v2296
    %3406 = vmatprep.subr.bf16.mxu0 %v2291
    %3407 = vmatpush1.bf16.msra.mxu0 %v2290
    %3408 = vmatprep.subr.bf16.mxu0 %v2285
    %3409 = vmatpush1.bf16.msra.mxu0 %v2284
    %3410 = vmatprep.subr.bf16.mxu0 %v2279
    %3411 = vmatpush1.bf16.msra.mxu0 %v2278
    %3412 = vmatprep.subr.bf16.mxu0 0
    %3413 = vmatpush2.bf16.msra.mxu0 0
    %3414 = vmatprep.subr.bf16.mxu0 0
    %3415 = vmatpush2.bf16.msra.mxu0 0
    %3416 = vmatprep.subr.bf16.mxu0 0
    %3417 = vmatpush2.bf16.msra.mxu0 0
    %3418 = vmatprep.subr.bf16.mxu0 0
    %3419 = vmatpush2.bf16.msra.mxu0 0
    %3420 = vmatprep.subr.bf16.mxu0 0
    %3421 = vmatpush2.bf16.msra.mxu0 0
    %3422 = vmatprep.subr.bf16.mxu0 %v2339
    %3423 = vmatpush2.bf16.msra.mxu0 %v2338
    %3424 = vmatprep.subr.bf16.mxu0 %v2333
    %3425 = vmatpush2.bf16.msra.mxu0 %v2332
    %3426 = vmatprep.subr.bf16.mxu0 %v2327
    %3427 = vmatpush2.bf16.msra.mxu0 %v2326
    %3428 = vmatprep.mubr.bf16.mxu0 %v2792
    %3429 = vmatmul.mubr.bf16.gmra.mxu0 %v529
    %v3430 = vpop.f32.mrf.mxu0
    %v3431 = vadd.f32 %v3388, %v3430
    %v3432 = vpop.f32.mrf.mxu0
    %v3433 = vadd.f32 %v3390, %v3432
    %v3434 = vpop.f32.mrf.mxu0
    %v3435 = vadd.f32 %v3392, %v3434
    %v3436 = vpop.f32.mrf.mxu0
    %v3437 = vadd.f32 %v3394, %v3436
    %3438 = vdwg.mxu0
    %v3439 = vld [vmem:[%s3] sm:$0xff]
    %v3440 = vld [vmem:[%s3 + $0x8] sm:$0xff]
    %s3441 = sld [smem:[#allocation2]]
    %v3442 = vstv %s3441
    %v3443 = vmul.f32 %v3442, %v3001
    %v3444 = vmul.f32 %v3442, %v3003
    %v3445 = vadd.f32 %v3439, %v3443
    %v3446 = vadd.f32 %v3440, %v3444
    %s3447 = sld [smem:[#allocation2 + $0x1]]
    %v3448 = vstv %s3447
    %v3449 = vmul.f32 %v3448, %v3216
    %v3450 = vmul.f32 %v3448, %v3218
    %v3451 = vadd.f32 %v3445, %v3449
    %v3452 = vadd.f32 %v3446, %v3450
    %s3453 = sld [smem:[#allocation2 + $0x2]]
    %v3454 = vstv %s3453
    %v3455 = vmul.f32 %v3454, %v3431
    %v3456 = vmul.f32 %v3454, %v3433
    %v3457 = vadd.f32 %v3451, %v3455
    %v3458 = vadd.f32 %v3452, %v3456
    %3459 = vst [vmem:[%s4] sm:$0xff] %v3457
    %3460 = vst [vmem:[%s4 + $0x8] sm:$0xff] %v3458
    %v3461 = vld [vmem:[%s3 + $0x10] sm:$0xff]
    %v3462 = vld [vmem:[%s3 + $0x18] sm:$0xff]
    %s3463 = sld [smem:[#allocation2 + $0x3]]
    %v3464 = vstv %s3463
    %v3465 = vmul.f32 %v3464, %v3005
    %v3466 = vmul.f32 %v3464, %v3007
    %v3467 = vadd.f32 %v3461, %v3465
    %v3468 = vadd.f32 %v3462, %v3466
    %s3469 = sld [smem:[#allocation2 + $0x4]]
    %v3470 = vstv %s3469
    %v3471 = vmul.f32 %v3470, %v3220
    %v3472 = vmul.f32 %v3470, %v3222
    %v3473 = vadd.f32 %v3467, %v3471
    %v3474 = vadd.f32 %v3468, %v3472
    %s3475 = sld [smem:[#allocation2 + $0x5]]
    %v3476 = vstv %s3475
    %v3477 = vmul.f32 %v3476, %v3435
    %v3478 = vmul.f32 %v3476, %v3437
    %v3479 = vadd.f32 %v3473, %v3477
    %v3480 = vadd.f32 %v3474, %v3478
    %3481 = vst [vmem:[%s4 + $0x10] sm:$0xff] %v3479
    %3482 = vst [vmem:[%s4 + $0x18] sm:$0xff] %v3480
    // Predicated region
    $region22: #{bare_conv_forward.1} parent=1 // pred_check
      _
    $region23: #{bare_conv_forward.1} parent=1 // pred_check_branch
      %3484 = sbr.rel (0) target = $region25
    $region24: #{bare_conv_forward.1} parent=1 // pred_region
      _
    $region25: #{bare_conv_forward.1} parent=1 // pred_fallthru
      _
    // Predicated region
    $region26: #{bare_conv_forward.1} parent=1 // pred_check
      _
    $region27: #{bare_conv_forward.1} parent=1 // pred_check_branch
      %3486 = sbr.rel (0) target = $region29
    $region28: #{bare_conv_forward.1} parent=1 // pred_region
      _
    $region29: #{bare_conv_forward.1} parent=1 // pred_fallthru
      _
    %3487 = vsyncpa [#allocation3], 1

</llo_original>
